<compile_context>
chip_gen: v6e
topology: v6e:2x2x1
jax: 0.10.0
libtpu: 0.0.40
codegen_flags: <defaults>
</compile_context>

<pallas_src>
import functools

import jax
import jax.numpy as jnp
from jax import lax
from jax.experimental import pallas as pl
from jax.experimental.pallas import tpu as pltpu

H = 32                      # hidden size of the GRU and of each LSTM direction
# Packed gate layout on the lane axis (G_ALL = 384 lanes):
#   [0   : 96 ]  GRU gates (r|z|n)
#   [96  : 128]  zero padding (keeps the LSTM block 128-lane aligned)
#   [128 : 384]  BiLSTM gates, per-gate fwd/bwd interleaved:
#                [i_f i_b | f_f f_b | o_f o_b | g_f g_b], 32 lanes each
#                -> sigmoid block = lanes 128:320, tanh block = lanes 320:384
OFF_L = 128
G_ALL = 384

_PT_GATE = {"i": 0, "f": 1, "g": 2, "o": 3}     # PyTorch column order in (H, 4H)
_PACK_GATE = {"i": 0, "f": 1, "o": 2, "g": 3}   # packed order (sigmoid gates first)


# ----------------------------------------------------------------------------
# The fused kernel (one grid step = one batch tile)
# ----------------------------------------------------------------------------
def _fused_kernel(T, TB,
                  price_ref, event_ref,
                  fc1_w_ref, fc1_b_ref, fc2_w_ref, fc2_b_ref,
                  w_in_ref, b_gx_ref, bhh_n_ref, w_rec_ref,
                  fw1_ref, fb1_ref, fw2_ref, fb2_ref,
                  o_ref, gx_ref):
    f32 = jnp.float32
    p_in = price_ref.shape[2]
    e_in = event_ref.shape[2]

    # --- stage 1: fc1/fc2 + ReLU (padded-weight trick: no lane concat), then ONE
    # block-diagonal matmul producing input-gate pre-activations for all recurrences
    # and every timestep.  Rows t*TB:(t+1)*TB of gx are timestep t (time-major).
    price2d = price_ref[...].reshape(T * TB, p_in)
    event2d = event_ref[...].reshape(T * TB, e_in)
    x_p = jnp.maximum(jnp.dot(price2d, fc1_w_ref[...],
                              preferred_element_type=f32) + fc1_b_ref[...], 0.0)
    x_e = jnp.maximum(jnp.dot(event2d, fc2_w_ref[...],
                              preferred_element_type=f32) + fc2_b_ref[...], 0.0)
    x64 = x_p + x_e                                                   # (T*TB, 64) [x_p | x_e]

    # One-time time-reversal of the event feature for the backward LSTM: row block t of
    # x_cat then carries x_e(T-1-t) in lanes 64:96, so the unrolled recurrence needs a
    # single static slice of gx per step.
    x_e_rev = jnp.concatenate(
        [x64[(T - 1 - t) * TB:(T - t) * TB, H:2 * H] for t in range(T)], axis=0)
    x_cat = jnp.concatenate([x64, x_e_rev], axis=-1)                  # (T*TB, 96)
    gx_ref[...] = (jnp.dot(x_cat, w_in_ref[...], preferred_element_type=f32)
                   + b_gx_ref[...])                                   # (T*TB, 384)

    # --- stage 2: packed recurrence.  One MXU push per timestep drives the GRU, the
    # forward LSTM and the (time-reversed) backward LSTM simultaneously.  Static Python
    # loop over T -> fully unrolled straight-line code.
    w_rec = w_rec_ref[...]                                            # (96, 384)
    bhh_n = jnp.broadcast_to(bhh_n_ref[...], (TB, H))                 # hoisted broadcast
    h_g = jnp.zeros((TB, H), f32)                                     # GRU hidden
    h_fb = jnp.zeros((TB, 2 * H), f32)                                # [h_fwd | h_bwd]
    c_fb = jnp.zeros((TB, 2 * H), f32)                                # [c_fwd | c_bwd]
    for t in range(T):
        h_cat = jnp.concatenate([h_g, h_fb], axis=-1)                 # (TB, 96)
        gh = jnp.dot(h_cat, w_rec, preferred_element_type=f32)        # (TB, 384)
        gxt = gx_ref[pl.ds(t * TB, TB), :]                            # static, aligned slice

        # GRU (r|z|n); bih (+ bhh for r,z) already folded into gx.
        rz = jax.nn.sigmoid(gxt[:, 0:2 * H] + gh[:, 0:2 * H])         # one 64-lane sigmoid
        r = rz[:, 0:H]
        z = rz[:, H:2 * H]
        n = jnp.tanh(gxt[:, 2 * H:3 * H] + r * (gh[:, 2 * H:3 * H] + bhh_n))
        h_g = (1.0 - z) * n + z * h_g

        # BiLSTM, fwd/bwd packed per gate; bih + bhh folded into gx.
        gl = gxt[:, OFF_L:G_ALL] + gh[:, OFF_L:G_ALL]                 # (TB, 256)
        ifo = jax.nn.sigmoid(gl[:, 0:6 * H])                          # one 192-lane sigmoid
        gg = jnp.tanh(gl[:, 6 * H:8 * H])                             # one 64-lane tanh
        c_fb = ifo[:, 2 * H:4 * H] * c_fb + ifo[:, 0:2 * H] * gg      # f*c + i*g
        h_fb = ifo[:, 4 * H:6 * H] * jnp.tanh(c_fb)                   # o*tanh(c)

    # --- stage 3: fusion head Linear(64->32) -> ReLU -> Linear(32->num_out).
    # price_feature = final GRU hidden; event_feature = (h_fwd_last + h_bwd_last)/2.
    feat = jnp.concatenate([h_g, (h_fb[:, 0:H] + h_fb[:, H:2 * H]) * 0.5], axis=-1)
    hid = jnp.maximum(jnp.dot(feat, fw1_ref[...],
                              preferred_element_type=f32) + fb1_ref[...], 0.0)
    o_ref[...] = jnp.dot(hid, fw2_ref[...], preferred_element_type=f32) + fb2_ref[...]


# ----------------------------------------------------------------------------
# Weight packing
# ----------------------------------------------------------------------------
def _pack_fc_weights(params):
    """Pad fc1/fc2 to 64 output lanes so x_cat is a sum, not a concat."""
    p_in = params["fc1_w"].shape[0]
    e_in = params["fc2_w"].shape[0]
    fc1_w = jnp.zeros((p_in, 2 * H), jnp.float32).at[:, 0:H].set(params["fc1_w"])
    fc1_b = jnp.zeros((1, 2 * H), jnp.float32).at[:, 0:H].set(params["fc1_b"])
    fc2_w = jnp.zeros((e_in, 2 * H), jnp.float32).at[:, H:2 * H].set(params["fc2_w"])
    fc2_b = jnp.zeros((1, 2 * H), jnp.float32).at[:, H:2 * H].set(params["fc2_b"])
    return fc1_w, fc1_b, fc2_w, fc2_b


def _pack_recurrent_weights(params):
    """Block-diagonal input/recurrent matrices with fwd/bwd per-gate interleaving."""
    w_in = jnp.zeros((3 * H, G_ALL), jnp.float32)    # rows: [x_p | x_e | x_e reversed]
    w_rec = jnp.zeros((3 * H, G_ALL), jnp.float32)   # rows: [h_gru | h_fwd | h_bwd]
    b_gx = jnp.zeros((1, G_ALL), jnp.float32)

    # GRU (lanes 0:96, gate order r|z|n).  Fold bih (+ bhh for r,z) into gx; the n-gate
    # hidden bias must stay on the serial path (it is multiplied by r).
    w_in = w_in.at[0:H, 0:3 * H].set(params["gru_wih"])
    w_rec = w_rec.at[0:H, 0:3 * H].set(params["gru_whh"])
    b_gx = b_gx.at[:, 0:2 * H].set(params["gru_bih"][:, 0:2 * H]
                                   + params["gru_bhh"][:, 0:2 * H])
    b_gx = b_gx.at[:, 2 * H:3 * H].set(params["gru_bih"][:, 2 * H:3 * H])
    bhh_n = params["gru_bhh"][:, 2 * H:3 * H]                          # (1, H)

    # BiLSTM (lanes 128:384): per-gate blocks [i|f|o|g], each [fwd(32)|bwd(32)].
    for d, row0, lane_off in (("f", H, 0), ("b", 2 * H, H)):
        wih = params[f"lstm_wih_{d}"]
        whh = params[f"lstm_whh_{d}"]
        bsum = params[f"lstm_bih_{d}"] + params[f"lstm_bhh_{d}"]
        for gate, pos in _PACK_GATE.items():
            src = _PT_GATE[gate] * H
            dst = OFF_L + pos * 2 * H + lane_off
            w_in = w_in.at[row0:row0 + H, dst:dst + H].set(wih[:, src:src + H])
            w_rec = w_rec.at[row0:row0 + H, dst:dst + H].set(whh[:, src:src + H])
            b_gx = b_gx.at[:, dst:dst + H].set(bsum[:, src:src + H])
    return w_in, b_gx, bhh_n, w_rec


# ----------------------------------------------------------------------------
# Full forward (pattern='m2o', task='classification')
# ----------------------------------------------------------------------------
def _round_up(x, m):
    return ((x + m - 1) // m) * m


def full_model_forward(params, price, event, *, tile_b=256):
    B, Tp, p_in = price.shape
    Be, Te, e_in = event.shape
    assert B == Be and Tp == Te, "fused kernel assumes matching batch / sequence lengths"
    T = Tp
    # Batch tile: full sublanes, capped at tile_b (<=256 keeps VMEM ~20 MiB incl. the
    # double-buffered event tile, safe on v7x's 64 MiB and under v6e scoped defaults).
    TB = min(_round_up(B, 8), _round_up(tile_b, 8))
    Bp = _round_up(B, TB)

    # Time-major, batch-padded inputs (cheap XLA transpose/pad on small data).
    price_tm = jnp.transpose(price, (1, 0, 2))                         # (T, B, p_in)
    event_tm = jnp.transpose(event, (1, 0, 2))                         # (T, B, e_in)
    if Bp != B:
        pad = ((0, 0), (0, Bp - B), (0, 0))
        price_tm = jnp.pad(price_tm, pad)
        event_tm = jnp.pad(event_tm, pad)

    fc1_w, fc1_b, fc2_w, fc2_b = _pack_fc_weights(params)
    w_in, b_gx, bhh_n, w_rec = _pack_recurrent_weights(params)
    num_out = params["fus_w2"].shape[1]

    weights = (fc1_w, fc1_b, fc2_w, fc2_b, w_in, b_gx, bhh_n, w_rec,
               params["fus_w1"], params["fus_b1"], params["fus_w2"], params["fus_b2"])
    weight_specs = [pl.BlockSpec(w.shape, lambda b: (0, 0)) for w in weights]

    out = pl.pallas_call(
        functools.partial(_fused_kernel, T, TB),
        out_shape=jax.ShapeDtypeStruct((Bp, num_out), jnp.float32),
        grid=(Bp // TB,),
        in_specs=[pl.BlockSpec((T, TB, p_in), lambda b: (0, b, 0)),
                  pl.BlockSpec((T, TB, e_in), lambda b: (0, b, 0))] + weight_specs,
        out_specs=pl.BlockSpec((TB, num_out), lambda b: (b, 0)),
        scratch_shapes=[pltpu.VMEM((T * TB, G_ALL), jnp.float32)],
        compiler_params=pltpu.CompilerParams(
            dimension_semantics=("parallel",),
            vmem_limit_bytes=48 * 1024 * 1024),
    )(price_tm, event_tm, *weights)
    return out[:B]


# ----------------------------------------------------------------------------
# Parameter init (deterministic, PyTorch-style uniform(-1/sqrt(fan), 1/sqrt(fan)))
# ----------------------------------------------------------------------------
def _uniform(key, shape, fan_in):
    bound = 1.0 / jnp.sqrt(jnp.float32(fan_in))
    return jax.random.uniform(key, shape, jnp.float32, -bound, bound)


def init_params(key, p_input_size=9, e_input_size=768, num_output=2):
    keys = iter(jax.random.split(key, 32))
    params = {}
    # fc1: Linear(p_input_size, 32), stored (in, out)
    params["fc1_w"] = _uniform(next(keys), (p_input_size, H), p_input_size)
    params["fc1_b"] = _uniform(next(keys), (1, H), p_input_size)
    # GRU(32, 32): transposed (in, 3H); gate order (r, z, n)
    params["gru_wih"] = _uniform(next(keys), (H, 3 * H), H)
    params["gru_whh"] = _uniform(next(keys), (H, 3 * H), H)
    params["gru_bih"] = _uniform(next(keys), (1, 3 * H), H)
    params["gru_bhh"] = _uniform(next(keys), (1, 3 * H), H)
    # fc2: Linear(e_input_size, 32)
    params["fc2_w"] = _uniform(next(keys), (e_input_size, H), e_input_size)
    params["fc2_b"] = _uniform(next(keys), (1, H), e_input_size)
    # BiLSTM(32, 32): per direction, transposed (in, 4H); gate order (i, f, g, o)
    for d in ("f", "b"):
        params[f"lstm_wih_{d}"] = _uniform(next(keys), (H, 4 * H), H)
        params[f"lstm_whh_{d}"] = _uniform(next(keys), (H, 4 * H), H)
        params[f"lstm_bih_{d}"] = _uniform(next(keys), (1, 4 * H), H)
        params[f"lstm_bhh_{d}"] = _uniform(next(keys), (1, 4 * H), H)
    # fusion: Linear(64, 32) -> ReLU -> Linear(32, num_output)
    fusion_in = 2 * H
    params["fus_w1"] = _uniform(next(keys), (fusion_in, fusion_in // 2), fusion_in)
    params["fus_b1"] = _uniform(next(keys), (1, fusion_in // 2), fusion_in)
    params["fus_w2"] = _uniform(next(keys), (fusion_in // 2, num_output), fusion_in // 2)
    params["fus_b2"] = _uniform(next(keys), (1, num_output), fusion_in // 2)
    return params


# ----------------------------------------------------------------------------
# Pure-JAX reference (mirrors the PyTorch forward) for a numerical sanity check
# ----------------------------------------------------------------------------
def reference_forward(params, price, event):
    B = price.shape[0]
    mm = functools.partial(jnp.matmul, precision=lax.Precision.HIGHEST)

    p = jax.nn.relu(mm(price, params["fc1_w"]) + params["fc1_b"])      # (B,T,H)

    def gru_step(h, x_t):
        gx = mm(x_t, params["gru_wih"]) + params["gru_bih"]
        gh = mm(h, params["gru_whh"]) + params["gru_bhh"]
        r = jax.nn.sigmoid(gx[:, 0:H] + gh[:, 0:H])
        z = jax.nn.sigmoid(gx[:, H:2 * H] + gh[:, H:2 * H])
        n = jnp.tanh(gx[:, 2 * H:] + r * gh[:, 2 * H:])
        return (1.0 - z) * n + z * h, None

    price_feature, _ = lax.scan(gru_step, jnp.zeros((B, H), jnp.float32),
                                jnp.transpose(p, (1, 0, 2)))

    e = jax.nn.relu(mm(event, params["fc2_w"]) + params["fc2_b"])      # (B,T,H)

    def lstm_dir(wih, whh, bih, bhh, xs):
        def step(carry, x_t):
            h, c = carry
            g = mm(x_t, wih) + bih + mm(h, whh) + bhh
            i = jax.nn.sigmoid(g[:, 0:H]); f = jax.nn.sigmoid(g[:, H:2 * H])
            gg = jnp.tanh(g[:, 2 * H:3 * H]); o = jax.nn.sigmoid(g[:, 3 * H:])
            c = f * c + i * gg
            return (o * jnp.tanh(c), c), None
        (h, _), _ = lax.scan(step, (jnp.zeros((B, H), jnp.float32),
                                    jnp.zeros((B, H), jnp.float32)), xs)
        return h

    xs = jnp.transpose(e, (1, 0, 2))
    h_f = lstm_dir(params["lstm_wih_f"], params["lstm_whh_f"],
                   params["lstm_bih_f"], params["lstm_bhh_f"], xs)
    h_b = lstm_dir(params["lstm_wih_b"], params["lstm_whh_b"],
                   params["lstm_bih_b"], params["lstm_bhh_b"], xs[::-1])
    event_feature = (h_f + h_b) * 0.5

    feat = jnp.concatenate([price_feature, event_feature], axis=1)
    hid = jax.nn.relu(mm(feat, params["fus_w1"]) + params["fus_b1"])
    return mm(hid, params["fus_w2"]) + params["fus_b2"]


if __name__ == "__main__":
    key = jax.random.PRNGKey(0)
    k_param, k_price, k_event = jax.random.split(key, 3)

    B, Tp, Te = 2, 8, 8
    P_IN, E_IN = 9, 768

    params = init_params(k_param, p_input_size=P_IN, e_input_size=E_IN)
    price = jax.random.normal(k_price, (B, Tp, P_IN), jnp.float32)
    event = jax.random.normal(k_event, (B, Te, E_IN), jnp.float32)

    pred = jax.jit(full_model_forward)(params, price, event)
    pred = jax.block_until_ready(pred)

    assert pred.shape == (B, 2), pred.shape
    assert pred.dtype == jnp.float32

    ref = jax.block_until_ready(jax.jit(reference_forward)(params, price, event))
    max_err = float(jnp.max(jnp.abs(pred - ref)))
    assert max_err < 2e-3, f"max abs err vs reference: {max_err}"

    print("KERNEL_OK")
</pallas_src>

<mosaic_0001>
module attributes {stable_mosaic.version = 11 : i64} {
  func.func @_fused_kernel(%arg0: i32, %arg1: memref<8x8x9xf32, #tpu.memory_space<vmem>>, %arg2: memref<8x8x768xf32, #tpu.memory_space<vmem>>, %arg3: memref<9x64xf32, #tpu.memory_space<vmem>>, %arg4: memref<1x64xf32, #tpu.memory_space<vmem>>, %arg5: memref<768x64xf32, #tpu.memory_space<vmem>>, %arg6: memref<1x64xf32, #tpu.memory_space<vmem>>, %arg7: memref<96x384xf32, #tpu.memory_space<vmem>>, %arg8: memref<1x384xf32, #tpu.memory_space<vmem>>, %arg9: memref<1x32xf32, #tpu.memory_space<vmem>>, %arg10: memref<96x384xf32, #tpu.memory_space<vmem>>, %arg11: memref<64x32xf32, #tpu.memory_space<vmem>>, %arg12: memref<1x32xf32, #tpu.memory_space<vmem>>, %arg13: memref<32x2xf32, #tpu.memory_space<vmem>>, %arg14: memref<1x2xf32, #tpu.memory_space<vmem>>, %arg15: memref<8x2xf32, #tpu.memory_space<vmem>>, %arg16: memref<64x384xf32, #tpu.memory_space<vmem>>) attributes {dimension_semantics = [#tpu.dimension_semantics<parallel>], iteration_bounds = array<i64: 1>, scalar_prefetch = 0 : i64, scratch_operands = 1 : i64, tpu.core_type = #tpu.core_type<tc>, window_params = [{transform_indices = @transform_0, window_bounds = array<i64: 8, 8, 9>}, {transform_indices = @transform_1, window_bounds = array<i64: 8, 8, 768>}, {pipeline_mode = #tpu.pipeline_mode<synchronous>, transform_indices = @transform_2, window_bounds = array<i64: 9, 64>}, {pipeline_mode = #tpu.pipeline_mode<synchronous>, transform_indices = @transform_3, window_bounds = array<i64: 1, 64>}, {pipeline_mode = #tpu.pipeline_mode<synchronous>, transform_indices = @transform_4, window_bounds = array<i64: 768, 64>}, {pipeline_mode = #tpu.pipeline_mode<synchronous>, transform_indices = @transform_5, window_bounds = array<i64: 1, 64>}, {pipeline_mode = #tpu.pipeline_mode<synchronous>, transform_indices = @transform_6, window_bounds = array<i64: 96, 384>}, {pipeline_mode = #tpu.pipeline_mode<synchronous>, transform_indices = @transform_7, window_bounds = array<i64: 1, 384>}, {pipeline_mode = #tpu.pipeline_mode<synchronous>, transform_indices = @transform_8, window_bounds = array<i64: 1, 32>}, {pipeline_mode = #tpu.pipeline_mode<synchronous>, transform_indices = @transform_9, window_bounds = array<i64: 96, 384>}, {pipeline_mode = #tpu.pipeline_mode<synchronous>, transform_indices = @transform_10, window_bounds = array<i64: 64, 32>}, {pipeline_mode = #tpu.pipeline_mode<synchronous>, transform_indices = @transform_11, window_bounds = array<i64: 1, 32>}, {pipeline_mode = #tpu.pipeline_mode<synchronous>, transform_indices = @transform_12, window_bounds = array<i64: 32, 2>}, {pipeline_mode = #tpu.pipeline_mode<synchronous>, transform_indices = @transform_13, window_bounds = array<i64: 1, 2>}, {transform_indices = @transform_14, window_bounds = array<i64: 8, 2>}]} {
    %c0 = arith.constant 0 : index
    %c0_0 = arith.constant 0 : index
    %c0_1 = arith.constant 0 : index
    %0 = vector.load %arg1[%c0, %c0_0, %c0_1] : memref<8x8x9xf32, #tpu.memory_space<vmem>>, vector<8x8x9xf32>
    %1 = vector.shape_cast %0 : vector<8x8x9xf32> to vector<64x9xf32>
    %c0_2 = arith.constant 0 : index
    %c0_3 = arith.constant 0 : index
    %c0_4 = arith.constant 0 : index
    %2 = vector.load %arg2[%c0_2, %c0_3, %c0_4] : memref<8x8x768xf32, #tpu.memory_space<vmem>>, vector<8x8x768xf32>
    %3 = vector.shape_cast %2 : vector<8x8x768xf32> to vector<64x768xf32>
    %c0_5 = arith.constant 0 : index
    %c0_6 = arith.constant 0 : index
    %4 = vector.load %arg3[%c0_5, %c0_6] : memref<9x64xf32, #tpu.memory_space<vmem>>, vector<9x64xf32>
    %cst = arith.constant dense<0.000000e+00> : vector<64x64xf32>
    %5 = tpu.matmul %1, %4, %cst {dimension_numbers = #tpu.dot_dimension_numbers<[1], [0], [0], [1], [0, 0, 1, 1], [], []>} : vector<64x9xf32>, vector<9x64xf32>, vector<64x64xf32> -> vector<64x64xf32>
    %c0_7 = arith.constant 0 : index
    %c0_8 = arith.constant 0 : index
    %6 = vector.load %arg4[%c0_7, %c0_8] : memref<1x64xf32, #tpu.memory_space<vmem>>, vector<1x64xf32>
    %7 = vector.broadcast %6 : vector<1x64xf32> to vector<64x64xf32>
    %8 = arith.addf %5, %7 : vector<64x64xf32>
    %cst_9 = arith.constant 0.000000e+00 : f32
    %9 = vector.broadcast %cst_9 : f32 to vector<64x64xf32>
    %10 = arith.maximumf %8, %9 : vector<64x64xf32>
    %c0_10 = arith.constant 0 : index
    %c0_11 = arith.constant 0 : index
    %11 = vector.load %arg5[%c0_10, %c0_11] : memref<768x64xf32, #tpu.memory_space<vmem>>, vector<768x64xf32>
    %cst_12 = arith.constant dense<0.000000e+00> : vector<64x64xf32>
    %12 = tpu.matmul %3, %11, %cst_12 {dimension_numbers = #tpu.dot_dimension_numbers<[1], [0], [0], [1], [0, 0, 1, 1], [], []>} : vector<64x768xf32>, vector<768x64xf32>, vector<64x64xf32> -> vector<64x64xf32>
    %c0_13 = arith.constant 0 : index
    %c0_14 = arith.constant 0 : index
    %13 = vector.load %arg6[%c0_13, %c0_14] : memref<1x64xf32, #tpu.memory_space<vmem>>, vector<1x64xf32>
    %14 = vector.broadcast %13 : vector<1x64xf32> to vector<64x64xf32>
    %15 = arith.addf %12, %14 : vector<64x64xf32>
    %cst_15 = arith.constant 0.000000e+00 : f32
    %16 = vector.broadcast %cst_15 : f32 to vector<64x64xf32>
    %17 = arith.maximumf %15, %16 : vector<64x64xf32>
    %18 = arith.addf %10, %17 : vector<64x64xf32>
    %19 = vector.extract_strided_slice %18 {offsets = [56, 32], sizes = [8, 32], strides = [1, 1]} : vector<64x64xf32> to vector<8x32xf32>
    %20 = vector.extract_strided_slice %18 {offsets = [48, 32], sizes = [8, 32], strides = [1, 1]} : vector<64x64xf32> to vector<8x32xf32>
    %21 = vector.extract_strided_slice %18 {offsets = [40, 32], sizes = [8, 32], strides = [1, 1]} : vector<64x64xf32> to vector<8x32xf32>
    %22 = vector.extract_strided_slice %18 {offsets = [32, 32], sizes = [8, 32], strides = [1, 1]} : vector<64x64xf32> to vector<8x32xf32>
    %23 = vector.extract_strided_slice %18 {offsets = [24, 32], sizes = [8, 32], strides = [1, 1]} : vector<64x64xf32> to vector<8x32xf32>
    %24 = vector.extract_strided_slice %18 {offsets = [16, 32], sizes = [8, 32], strides = [1, 1]} : vector<64x64xf32> to vector<8x32xf32>
    %25 = vector.extract_strided_slice %18 {offsets = [8, 32], sizes = [8, 32], strides = [1, 1]} : vector<64x64xf32> to vector<8x32xf32>
    %26 = vector.extract_strided_slice %18 {offsets = [0, 32], sizes = [8, 32], strides = [1, 1]} : vector<64x64xf32> to vector<8x32xf32>
    %27 = tpu.concatenate %19, %20, %21, %22, %23, %24, %25, %26 in 0 : vector<8x32xf32>, vector<8x32xf32>, vector<8x32xf32>, vector<8x32xf32>, vector<8x32xf32>, vector<8x32xf32>, vector<8x32xf32>, vector<8x32xf32> -> vector<64x32xf32>
    %28 = tpu.concatenate %18, %27 in 1 : vector<64x64xf32>, vector<64x32xf32> -> vector<64x96xf32>
    %c0_16 = arith.constant 0 : index
    %c0_17 = arith.constant 0 : index
    %29 = vector.load %arg7[%c0_16, %c0_17] : memref<96x384xf32, #tpu.memory_space<vmem>>, vector<96x384xf32>
    %cst_18 = arith.constant dense<0.000000e+00> : vector<64x384xf32>
    %30 = tpu.matmul %28, %29, %cst_18 {dimension_numbers = #tpu.dot_dimension_numbers<[1], [0], [0], [1], [0, 0, 1, 1], [], []>} : vector<64x96xf32>, vector<96x384xf32>, vector<64x384xf32> -> vector<64x384xf32>
    %c0_19 = arith.constant 0 : index
    %c0_20 = arith.constant 0 : index
    %31 = vector.load %arg8[%c0_19, %c0_20] : memref<1x384xf32, #tpu.memory_space<vmem>>, vector<1x384xf32>
    %32 = vector.broadcast %31 : vector<1x384xf32> to vector<64x384xf32>
    %33 = arith.addf %30, %32 : vector<64x384xf32>
    %c0_21 = arith.constant 0 : index
    %c0_22 = arith.constant 0 : index
    %34 = vector.load %arg16[%c0_21, %c0_22] : memref<64x384xf32, #tpu.memory_space<vmem>>, vector<64x384xf32>
    tpu.vector_store %arg16[%c0_21, %c0_22], %33 {strides = array<i32>} : memref<64x384xf32, #tpu.memory_space<vmem>>, vector<64x384xf32>,
    %c0_23 = arith.constant 0 : index
    %c0_24 = arith.constant 0 : index
    %35 = vector.load %arg10[%c0_23, %c0_24] : memref<96x384xf32, #tpu.memory_space<vmem>>, vector<96x384xf32>
    %c0_25 = arith.constant 0 : index
    %c0_26 = arith.constant 0 : index
    %36 = vector.load %arg9[%c0_25, %c0_26] : memref<1x32xf32, #tpu.memory_space<vmem>>, vector<1x32xf32>
    %37 = vector.shape_cast %36 : vector<1x32xf32> to vector<1x32xf32>
    %38 = vector.broadcast %37 : vector<1x32xf32> to vector<8x32xf32>
    %cst_27 = arith.constant 0.000000e+00 : f32
    %39 = vector.broadcast %cst_27 : f32 to vector<8x32xf32>
    %cst_28 = arith.constant 0.000000e+00 : f32
    %40 = vector.broadcast %cst_28 : f32 to vector<8x64xf32>
    %cst_29 = arith.constant 0.000000e+00 : f32
    %41 = vector.broadcast %cst_29 : f32 to vector<8x64xf32>
    %42 = tpu.concatenate %39, %40 in 1 : vector<8x32xf32>, vector<8x64xf32> -> vector<8x96xf32>
    %cst_30 = arith.constant dense<0.000000e+00> : vector<8x384xf32>
    %43 = tpu.matmul %42, %35, %cst_30 {dimension_numbers = #tpu.dot_dimension_numbers<[1], [0], [0], [1], [0, 0, 1, 1], [], []>} : vector<8x96xf32>, vector<96x384xf32>, vector<8x384xf32> -> vector<8x384xf32>
    %c0_31 = arith.constant 0 : index
    %c0_32 = arith.constant 0 : index
    %44 = vector.load %arg16[%c0_31, %c0_32] : memref<64x384xf32, #tpu.memory_space<vmem>>, vector<8x384xf32>
    %45 = vector.extract_strided_slice %44 {offsets = [0, 0], sizes = [8, 64], strides = [1, 1]} : vector<8x384xf32> to vector<8x64xf32>
    %46 = vector.extract_strided_slice %43 {offsets = [0, 0], sizes = [8, 64], strides = [1, 1]} : vector<8x384xf32> to vector<8x64xf32>
    %47 = arith.addf %45, %46 : vector<8x64xf32>
    %48 = arith.negf %47 : vector<8x64xf32>
    %49 = math.exp %48 : vector<8x64xf32>
    %cst_33 = arith.constant 1.000000e+00 : f32
    %50 = vector.broadcast %cst_33 : f32 to vector<8x64xf32>
    %51 = arith.addf %50, %49 : vector<8x64xf32>
    %52 = arith.divf %50, %51 : vector<8x64xf32>
    %53 = vector.extract_strided_slice %52 {offsets = [0, 0], sizes = [8, 32], strides = [1, 1]} : vector<8x64xf32> to vector<8x32xf32>
    %54 = vector.extract_strided_slice %52 {offsets = [0, 32], sizes = [8, 32], strides = [1, 1]} : vector<8x64xf32> to vector<8x32xf32>
    %55 = vector.extract_strided_slice %44 {offsets = [0, 64], sizes = [8, 32], strides = [1, 1]} : vector<8x384xf32> to vector<8x32xf32>
    %56 = vector.extract_strided_slice %43 {offsets = [0, 64], sizes = [8, 32], strides = [1, 1]} : vector<8x384xf32> to vector<8x32xf32>
    %57 = arith.addf %56, %38 : vector<8x32xf32>
    %58 = arith.mulf %53, %57 : vector<8x32xf32>
    %59 = arith.addf %55, %58 : vector<8x32xf32>
    %60 = math.tanh %59 : vector<8x32xf32>
    %cst_34 = arith.constant 1.000000e+00 : f32
    %61 = vector.broadcast %cst_34 : f32 to vector<8x32xf32>
    %62 = arith.subf %61, %54 : vector<8x32xf32>
    %63 = arith.mulf %62, %60 : vector<8x32xf32>
    %64 = arith.mulf %54, %39 : vector<8x32xf32>
    %65 = arith.addf %63, %64 : vector<8x32xf32>
    %66 = vector.extract_strided_slice %44 {offsets = [0, 128], sizes = [8, 256], strides = [1, 1]} : vector<8x384xf32> to vector<8x256xf32>
    %67 = vector.extract_strided_slice %43 {offsets = [0, 128], sizes = [8, 256], strides = [1, 1]} : vector<8x384xf32> to vector<8x256xf32>
    %68 = arith.addf %66, %67 : vector<8x256xf32>
    %69 = vector.extract_strided_slice %68 {offsets = [0, 0], sizes = [8, 192], strides = [1, 1]} : vector<8x256xf32> to vector<8x192xf32>
    %70 = arith.negf %69 : vector<8x192xf32>
    %71 = math.exp %70 : vector<8x192xf32>
    %cst_35 = arith.constant 1.000000e+00 : f32
    %72 = vector.broadcast %cst_35 : f32 to vector<8x192xf32>
    %73 = arith.addf %72, %71 : vector<8x192xf32>
    %74 = arith.divf %72, %73 : vector<8x192xf32>
    %75 = vector.extract_strided_slice %68 {offsets = [0, 192], sizes = [8, 64], strides = [1, 1]} : vector<8x256xf32> to vector<8x64xf32>
    %76 = math.tanh %75 : vector<8x64xf32>
    %77 = vector.extract_strided_slice %74 {offsets = [0, 64], sizes = [8, 64], strides = [1, 1]} : vector<8x192xf32> to vector<8x64xf32>
    %78 = arith.mulf %77, %41 : vector<8x64xf32>
    %79 = vector.extract_strided_slice %74 {offsets = [0, 0], sizes = [8, 64], strides = [1, 1]} : vector<8x192xf32> to vector<8x64xf32>
    %80 = arith.mulf %79, %76 : vector<8x64xf32>
    %81 = arith.addf %78, %80 : vector<8x64xf32>
    %82 = vector.extract_strided_slice %74 {offsets = [0, 128], sizes = [8, 64], strides = [1, 1]} : vector<8x192xf32> to vector<8x64xf32>
    %83 = math.tanh %81 : vector<8x64xf32>
    %84 = arith.mulf %82, %83 : vector<8x64xf32>
    %85 = tpu.concatenate %65, %84 in 1 : vector<8x32xf32>, vector<8x64xf32> -> vector<8x96xf32>
    %cst_36 = arith.constant dense<0.000000e+00> : vector<8x384xf32>
    %86 = tpu.matmul %85, %35, %cst_36 {dimension_numbers = #tpu.dot_dimension_numbers<[1], [0], [0], [1], [0, 0, 1, 1], [], []>} : vector<8x96xf32>, vector<96x384xf32>, vector<8x384xf32> -> vector<8x384xf32>
    %c8 = arith.constant 8 : index
    %c0_37 = arith.constant 0 : index
    %87 = vector.load %arg16[%c8, %c0_37] : memref<64x384xf32, #tpu.memory_space<vmem>>, vector<8x384xf32>
    %88 = vector.extract_strided_slice %87 {offsets = [0, 0], sizes = [8, 64], strides = [1, 1]} : vector<8x384xf32> to vector<8x64xf32>
    %89 = vector.extract_strided_slice %86 {offsets = [0, 0], sizes = [8, 64], strides = [1, 1]} : vector<8x384xf32> to vector<8x64xf32>
    %90 = arith.addf %88, %89 : vector<8x64xf32>
    %91 = arith.negf %90 : vector<8x64xf32>
    %92 = math.exp %91 : vector<8x64xf32>
    %cst_38 = arith.constant 1.000000e+00 : f32
    %93 = vector.broadcast %cst_38 : f32 to vector<8x64xf32>
    %94 = arith.addf %93, %92 : vector<8x64xf32>
    %95 = arith.divf %93, %94 : vector<8x64xf32>
    %96 = vector.extract_strided_slice %95 {offsets = [0, 0], sizes = [8, 32], strides = [1, 1]} : vector<8x64xf32> to vector<8x32xf32>
    %97 = vector.extract_strided_slice %95 {offsets = [0, 32], sizes = [8, 32], strides = [1, 1]} : vector<8x64xf32> to vector<8x32xf32>
    %98 = vector.extract_strided_slice %87 {offsets = [0, 64], sizes = [8, 32], strides = [1, 1]} : vector<8x384xf32> to vector<8x32xf32>
    %99 = vector.extract_strided_slice %86 {offsets = [0, 64], sizes = [8, 32], strides = [1, 1]} : vector<8x384xf32> to vector<8x32xf32>
    %100 = arith.addf %99, %38 : vector<8x32xf32>
    %101 = arith.mulf %96, %100 : vector<8x32xf32>
    %102 = arith.addf %98, %101 : vector<8x32xf32>
    %103 = math.tanh %102 : vector<8x32xf32>
    %cst_39 = arith.constant 1.000000e+00 : f32
    %104 = vector.broadcast %cst_39 : f32 to vector<8x32xf32>
    %105 = arith.subf %104, %97 : vector<8x32xf32>
    %106 = arith.mulf %105, %103 : vector<8x32xf32>
    %107 = arith.mulf %97, %65 : vector<8x32xf32>
    %108 = arith.addf %106, %107 : vector<8x32xf32>
    %109 = vector.extract_strided_slice %87 {offsets = [0, 128], sizes = [8, 256], strides = [1, 1]} : vector<8x384xf32> to vector<8x256xf32>
    %110 = vector.extract_strided_slice %86 {offsets = [0, 128], sizes = [8, 256], strides = [1, 1]} : vector<8x384xf32> to vector<8x256xf32>
    %111 = arith.addf %109, %110 : vector<8x256xf32>
    %112 = vector.extract_strided_slice %111 {offsets = [0, 0], sizes = [8, 192], strides = [1, 1]} : vector<8x256xf32> to vector<8x192xf32>
    %113 = arith.negf %112 : vector<8x192xf32>
    %114 = math.exp %113 : vector<8x192xf32>
    %cst_40 = arith.constant 1.000000e+00 : f32
    %115 = vector.broadcast %cst_40 : f32 to vector<8x192xf32>
    %116 = arith.addf %115, %114 : vector<8x192xf32>
    %117 = arith.divf %115, %116 : vector<8x192xf32>
    %118 = vector.extract_strided_slice %111 {offsets = [0, 192], sizes = [8, 64], strides = [1, 1]} : vector<8x256xf32> to vector<8x64xf32>
    %119 = math.tanh %118 : vector<8x64xf32>
    %120 = vector.extract_strided_slice %117 {offsets = [0, 64], sizes = [8, 64], strides = [1, 1]} : vector<8x192xf32> to vector<8x64xf32>
    %121 = arith.mulf %120, %81 : vector<8x64xf32>
    %122 = vector.extract_strided_slice %117 {offsets = [0, 0], sizes = [8, 64], strides = [1, 1]} : vector<8x192xf32> to vector<8x64xf32>
    %123 = arith.mulf %122, %119 : vector<8x64xf32>
    %124 = arith.addf %121, %123 : vector<8x64xf32>
    %125 = vector.extract_strided_slice %117 {offsets = [0, 128], sizes = [8, 64], strides = [1, 1]} : vector<8x192xf32> to vector<8x64xf32>
    %126 = math.tanh %124 : vector<8x64xf32>
    %127 = arith.mulf %125, %126 : vector<8x64xf32>
    %128 = tpu.concatenate %108, %127 in 1 : vector<8x32xf32>, vector<8x64xf32> -> vector<8x96xf32>
    %cst_41 = arith.constant dense<0.000000e+00> : vector<8x384xf32>
    %129 = tpu.matmul %128, %35, %cst_41 {dimension_numbers = #tpu.dot_dimension_numbers<[1], [0], [0], [1], [0, 0, 1, 1], [], []>} : vector<8x96xf32>, vector<96x384xf32>, vector<8x384xf32> -> vector<8x384xf32>
    %c16 = arith.constant 16 : index
    %c0_42 = arith.constant 0 : index
    %130 = vector.load %arg16[%c16, %c0_42] : memref<64x384xf32, #tpu.memory_space<vmem>>, vector<8x384xf32>
    %131 = vector.extract_strided_slice %130 {offsets = [0, 0], sizes = [8, 64], strides = [1, 1]} : vector<8x384xf32> to vector<8x64xf32>
    %132 = vector.extract_strided_slice %129 {offsets = [0, 0], sizes = [8, 64], strides = [1, 1]} : vector<8x384xf32> to vector<8x64xf32>
    %133 = arith.addf %131, %132 : vector<8x64xf32>
    %134 = arith.negf %133 : vector<8x64xf32>
    %135 = math.exp %134 : vector<8x64xf32>
    %cst_43 = arith.constant 1.000000e+00 : f32
    %136 = vector.broadcast %cst_43 : f32 to vector<8x64xf32>
    %137 = arith.addf %136, %135 : vector<8x64xf32>
    %138 = arith.divf %136, %137 : vector<8x64xf32>
    %139 = vector.extract_strided_slice %138 {offsets = [0, 0], sizes = [8, 32], strides = [1, 1]} : vector<8x64xf32> to vector<8x32xf32>
    %140 = vector.extract_strided_slice %138 {offsets = [0, 32], sizes = [8, 32], strides = [1, 1]} : vector<8x64xf32> to vector<8x32xf32>
    %141 = vector.extract_strided_slice %130 {offsets = [0, 64], sizes = [8, 32], strides = [1, 1]} : vector<8x384xf32> to vector<8x32xf32>
    %142 = vector.extract_strided_slice %129 {offsets = [0, 64], sizes = [8, 32], strides = [1, 1]} : vector<8x384xf32> to vector<8x32xf32>
    %143 = arith.addf %142, %38 : vector<8x32xf32>
    %144 = arith.mulf %139, %143 : vector<8x32xf32>
    %145 = arith.addf %141, %144 : vector<8x32xf32>
    %146 = math.tanh %145 : vector<8x32xf32>
    %cst_44 = arith.constant 1.000000e+00 : f32
    %147 = vector.broadcast %cst_44 : f32 to vector<8x32xf32>
    %148 = arith.subf %147, %140 : vector<8x32xf32>
    %149 = arith.mulf %148, %146 : vector<8x32xf32>
    %150 = arith.mulf %140, %108 : vector<8x32xf32>
    %151 = arith.addf %149, %150 : vector<8x32xf32>
    %152 = vector.extract_strided_slice %130 {offsets = [0, 128], sizes = [8, 256], strides = [1, 1]} : vector<8x384xf32> to vector<8x256xf32>
    %153 = vector.extract_strided_slice %129 {offsets = [0, 128], sizes = [8, 256], strides = [1, 1]} : vector<8x384xf32> to vector<8x256xf32>
    %154 = arith.addf %152, %153 : vector<8x256xf32>
    %155 = vector.extract_strided_slice %154 {offsets = [0, 0], sizes = [8, 192], strides = [1, 1]} : vector<8x256xf32> to vector<8x192xf32>
    %156 = arith.negf %155 : vector<8x192xf32>
    %157 = math.exp %156 : vector<8x192xf32>
    %cst_45 = arith.constant 1.000000e+00 : f32
    %158 = vector.broadcast %cst_45 : f32 to vector<8x192xf32>
    %159 = arith.addf %158, %157 : vector<8x192xf32>
    %160 = arith.divf %158, %159 : vector<8x192xf32>
    %161 = vector.extract_strided_slice %154 {offsets = [0, 192], sizes = [8, 64], strides = [1, 1]} : vector<8x256xf32> to vector<8x64xf32>
    %162 = math.tanh %161 : vector<8x64xf32>
    %163 = vector.extract_strided_slice %160 {offsets = [0, 64], sizes = [8, 64], strides = [1, 1]} : vector<8x192xf32> to vector<8x64xf32>
    %164 = arith.mulf %163, %124 : vector<8x64xf32>
    %165 = vector.extract_strided_slice %160 {offsets = [0, 0], sizes = [8, 64], strides = [1, 1]} : vector<8x192xf32> to vector<8x64xf32>
    %166 = arith.mulf %165, %162 : vector<8x64xf32>
    %167 = arith.addf %164, %166 : vector<8x64xf32>
    %168 = vector.extract_strided_slice %160 {offsets = [0, 128], sizes = [8, 64], strides = [1, 1]} : vector<8x192xf32> to vector<8x64xf32>
    %169 = math.tanh %167 : vector<8x64xf32>
    %170 = arith.mulf %168, %169 : vector<8x64xf32>
    %171 = tpu.concatenate %151, %170 in 1 : vector<8x32xf32>, vector<8x64xf32> -> vector<8x96xf32>
    %cst_46 = arith.constant dense<0.000000e+00> : vector<8x384xf32>
    %172 = tpu.matmul %171, %35, %cst_46 {dimension_numbers = #tpu.dot_dimension_numbers<[1], [0], [0], [1], [0, 0, 1, 1], [], []>} : vector<8x96xf32>, vector<96x384xf32>, vector<8x384xf32> -> vector<8x384xf32>
    %c24 = arith.constant 24 : index
    %c0_47 = arith.constant 0 : index
    %173 = vector.load %arg16[%c24, %c0_47] : memref<64x384xf32, #tpu.memory_space<vmem>>, vector<8x384xf32>
    %174 = vector.extract_strided_slice %173 {offsets = [0, 0], sizes = [8, 64], strides = [1, 1]} : vector<8x384xf32> to vector<8x64xf32>
    %175 = vector.extract_strided_slice %172 {offsets = [0, 0], sizes = [8, 64], strides = [1, 1]} : vector<8x384xf32> to vector<8x64xf32>
    %176 = arith.addf %174, %175 : vector<8x64xf32>
    %177 = arith.negf %176 : vector<8x64xf32>
    %178 = math.exp %177 : vector<8x64xf32>
    %cst_48 = arith.constant 1.000000e+00 : f32
    %179 = vector.broadcast %cst_48 : f32 to vector<8x64xf32>
    %180 = arith.addf %179, %178 : vector<8x64xf32>
    %181 = arith.divf %179, %180 : vector<8x64xf32>
    %182 = vector.extract_strided_slice %181 {offsets = [0, 0], sizes = [8, 32], strides = [1, 1]} : vector<8x64xf32> to vector<8x32xf32>
    %183 = vector.extract_strided_slice %181 {offsets = [0, 32], sizes = [8, 32], strides = [1, 1]} : vector<8x64xf32> to vector<8x32xf32>
    %184 = vector.extract_strided_slice %173 {offsets = [0, 64], sizes = [8, 32], strides = [1, 1]} : vector<8x384xf32> to vector<8x32xf32>
    %185 = vector.extract_strided_slice %172 {offsets = [0, 64], sizes = [8, 32], strides = [1, 1]} : vector<8x384xf32> to vector<8x32xf32>
    %186 = arith.addf %185, %38 : vector<8x32xf32>
    %187 = arith.mulf %182, %186 : vector<8x32xf32>
    %188 = arith.addf %184, %187 : vector<8x32xf32>
    %189 = math.tanh %188 : vector<8x32xf32>
    %cst_49 = arith.constant 1.000000e+00 : f32
    %190 = vector.broadcast %cst_49 : f32 to vector<8x32xf32>
    %191 = arith.subf %190, %183 : vector<8x32xf32>
    %192 = arith.mulf %191, %189 : vector<8x32xf32>
    %193 = arith.mulf %183, %151 : vector<8x32xf32>
    %194 = arith.addf %192, %193 : vector<8x32xf32>
    %195 = vector.extract_strided_slice %173 {offsets = [0, 128], sizes = [8, 256], strides = [1, 1]} : vector<8x384xf32> to vector<8x256xf32>
    %196 = vector.extract_strided_slice %172 {offsets = [0, 128], sizes = [8, 256], strides = [1, 1]} : vector<8x384xf32> to vector<8x256xf32>
    %197 = arith.addf %195, %196 : vector<8x256xf32>
    %198 = vector.extract_strided_slice %197 {offsets = [0, 0], sizes = [8, 192], strides = [1, 1]} : vector<8x256xf32> to vector<8x192xf32>
    %199 = arith.negf %198 : vector<8x192xf32>
    %200 = math.exp %199 : vector<8x192xf32>
    %cst_50 = arith.constant 1.000000e+00 : f32
    %201 = vector.broadcast %cst_50 : f32 to vector<8x192xf32>
    %202 = arith.addf %201, %200 : vector<8x192xf32>
    %203 = arith.divf %201, %202 : vector<8x192xf32>
    %204 = vector.extract_strided_slice %197 {offsets = [0, 192], sizes = [8, 64], strides = [1, 1]} : vector<8x256xf32> to vector<8x64xf32>
    %205 = math.tanh %204 : vector<8x64xf32>
    %206 = vector.extract_strided_slice %203 {offsets = [0, 64], sizes = [8, 64], strides = [1, 1]} : vector<8x192xf32> to vector<8x64xf32>
    %207 = arith.mulf %206, %167 : vector<8x64xf32>
    %208 = vector.extract_strided_slice %203 {offsets = [0, 0], sizes = [8, 64], strides = [1, 1]} : vector<8x192xf32> to vector<8x64xf32>
    %209 = arith.mulf %208, %205 : vector<8x64xf32>
    %210 = arith.addf %207, %209 : vector<8x64xf32>
    %211 = vector.extract_strided_slice %203 {offsets = [0, 128], sizes = [8, 64], strides = [1, 1]} : vector<8x192xf32> to vector<8x64xf32>
    %212 = math.tanh %210 : vector<8x64xf32>
    %213 = arith.mulf %211, %212 : vector<8x64xf32>
    %214 = tpu.concatenate %194, %213 in 1 : vector<8x32xf32>, vector<8x64xf32> -> vector<8x96xf32>
    %cst_51 = arith.constant dense<0.000000e+00> : vector<8x384xf32>
    %215 = tpu.matmul %214, %35, %cst_51 {dimension_numbers = #tpu.dot_dimension_numbers<[1], [0], [0], [1], [0, 0, 1, 1], [], []>} : vector<8x96xf32>, vector<96x384xf32>, vector<8x384xf32> -> vector<8x384xf32>
    %c32 = arith.constant 32 : index
    %c0_52 = arith.constant 0 : index
    %216 = vector.load %arg16[%c32, %c0_52] : memref<64x384xf32, #tpu.memory_space<vmem>>, vector<8x384xf32>
    %217 = vector.extract_strided_slice %216 {offsets = [0, 0], sizes = [8, 64], strides = [1, 1]} : vector<8x384xf32> to vector<8x64xf32>
    %218 = vector.extract_strided_slice %215 {offsets = [0, 0], sizes = [8, 64], strides = [1, 1]} : vector<8x384xf32> to vector<8x64xf32>
    %219 = arith.addf %217, %218 : vector<8x64xf32>
    %220 = arith.negf %219 : vector<8x64xf32>
    %221 = math.exp %220 : vector<8x64xf32>
    %cst_53 = arith.constant 1.000000e+00 : f32
    %222 = vector.broadcast %cst_53 : f32 to vector<8x64xf32>
    %223 = arith.addf %222, %221 : vector<8x64xf32>
    %224 = arith.divf %222, %223 : vector<8x64xf32>
    %225 = vector.extract_strided_slice %224 {offsets = [0, 0], sizes = [8, 32], strides = [1, 1]} : vector<8x64xf32> to vector<8x32xf32>
    %226 = vector.extract_strided_slice %224 {offsets = [0, 32], sizes = [8, 32], strides = [1, 1]} : vector<8x64xf32> to vector<8x32xf32>
    %227 = vector.extract_strided_slice %216 {offsets = [0, 64], sizes = [8, 32], strides = [1, 1]} : vector<8x384xf32> to vector<8x32xf32>
    %228 = vector.extract_strided_slice %215 {offsets = [0, 64], sizes = [8, 32], strides = [1, 1]} : vector<8x384xf32> to vector<8x32xf32>
    %229 = arith.addf %228, %38 : vector<8x32xf32>
    %230 = arith.mulf %225, %229 : vector<8x32xf32>
    %231 = arith.addf %227, %230 : vector<8x32xf32>
    %232 = math.tanh %231 : vector<8x32xf32>
    %cst_54 = arith.constant 1.000000e+00 : f32
    %233 = vector.broadcast %cst_54 : f32 to vector<8x32xf32>
    %234 = arith.subf %233, %226 : vector<8x32xf32>
    %235 = arith.mulf %234, %232 : vector<8x32xf32>
    %236 = arith.mulf %226, %194 : vector<8x32xf32>
    %237 = arith.addf %235, %236 : vector<8x32xf32>
    %238 = vector.extract_strided_slice %216 {offsets = [0, 128], sizes = [8, 256], strides = [1, 1]} : vector<8x384xf32> to vector<8x256xf32>
    %239 = vector.extract_strided_slice %215 {offsets = [0, 128], sizes = [8, 256], strides = [1, 1]} : vector<8x384xf32> to vector<8x256xf32>
    %240 = arith.addf %238, %239 : vector<8x256xf32>
    %241 = vector.extract_strided_slice %240 {offsets = [0, 0], sizes = [8, 192], strides = [1, 1]} : vector<8x256xf32> to vector<8x192xf32>
    %242 = arith.negf %241 : vector<8x192xf32>
    %243 = math.exp %242 : vector<8x192xf32>
    %cst_55 = arith.constant 1.000000e+00 : f32
    %244 = vector.broadcast %cst_55 : f32 to vector<8x192xf32>
    %245 = arith.addf %244, %243 : vector<8x192xf32>
    %246 = arith.divf %244, %245 : vector<8x192xf32>
    %247 = vector.extract_strided_slice %240 {offsets = [0, 192], sizes = [8, 64], strides = [1, 1]} : vector<8x256xf32> to vector<8x64xf32>
    %248 = math.tanh %247 : vector<8x64xf32>
    %249 = vector.extract_strided_slice %246 {offsets = [0, 64], sizes = [8, 64], strides = [1, 1]} : vector<8x192xf32> to vector<8x64xf32>
    %250 = arith.mulf %249, %210 : vector<8x64xf32>
    %251 = vector.extract_strided_slice %246 {offsets = [0, 0], sizes = [8, 64], strides = [1, 1]} : vector<8x192xf32> to vector<8x64xf32>
    %252 = arith.mulf %251, %248 : vector<8x64xf32>
    %253 = arith.addf %250, %252 : vector<8x64xf32>
    %254 = vector.extract_strided_slice %246 {offsets = [0, 128], sizes = [8, 64], strides = [1, 1]} : vector<8x192xf32> to vector<8x64xf32>
    %255 = math.tanh %253 : vector<8x64xf32>
    %256 = arith.mulf %254, %255 : vector<8x64xf32>
    %257 = tpu.concatenate %237, %256 in 1 : vector<8x32xf32>, vector<8x64xf32> -> vector<8x96xf32>
    %cst_56 = arith.constant dense<0.000000e+00> : vector<8x384xf32>
    %258 = tpu.matmul %257, %35, %cst_56 {dimension_numbers = #tpu.dot_dimension_numbers<[1], [0], [0], [1], [0, 0, 1, 1], [], []>} : vector<8x96xf32>, vector<96x384xf32>, vector<8x384xf32> -> vector<8x384xf32>
    %c40 = arith.constant 40 : index
    %c0_57 = arith.constant 0 : index
    %259 = vector.load %arg16[%c40, %c0_57] : memref<64x384xf32, #tpu.memory_space<vmem>>, vector<8x384xf32>
    %260 = vector.extract_strided_slice %259 {offsets = [0, 0], sizes = [8, 64], strides = [1, 1]} : vector<8x384xf32> to vector<8x64xf32>
    %261 = vector.extract_strided_slice %258 {offsets = [0, 0], sizes = [8, 64], strides = [1, 1]} : vector<8x384xf32> to vector<8x64xf32>
    %262 = arith.addf %260, %261 : vector<8x64xf32>
    %263 = arith.negf %262 : vector<8x64xf32>
    %264 = math.exp %263 : vector<8x64xf32>
    %cst_58 = arith.constant 1.000000e+00 : f32
    %265 = vector.broadcast %cst_58 : f32 to vector<8x64xf32>
    %266 = arith.addf %265, %264 : vector<8x64xf32>
    %267 = arith.divf %265, %266 : vector<8x64xf32>
    %268 = vector.extract_strided_slice %267 {offsets = [0, 0], sizes = [8, 32], strides = [1, 1]} : vector<8x64xf32> to vector<8x32xf32>
    %269 = vector.extract_strided_slice %267 {offsets = [0, 32], sizes = [8, 32], strides = [1, 1]} : vector<8x64xf32> to vector<8x32xf32>
    %270 = vector.extract_strided_slice %259 {offsets = [0, 64], sizes = [8, 32], strides = [1, 1]} : vector<8x384xf32> to vector<8x32xf32>
    %271 = vector.extract_strided_slice %258 {offsets = [0, 64], sizes = [8, 32], strides = [1, 1]} : vector<8x384xf32> to vector<8x32xf32>
    %272 = arith.addf %271, %38 : vector<8x32xf32>
    %273 = arith.mulf %268, %272 : vector<8x32xf32>
    %274 = arith.addf %270, %273 : vector<8x32xf32>
    %275 = math.tanh %274 : vector<8x32xf32>
    %cst_59 = arith.constant 1.000000e+00 : f32
    %276 = vector.broadcast %cst_59 : f32 to vector<8x32xf32>
    %277 = arith.subf %276, %269 : vector<8x32xf32>
    %278 = arith.mulf %277, %275 : vector<8x32xf32>
    %279 = arith.mulf %269, %237 : vector<8x32xf32>
    %280 = arith.addf %278, %279 : vector<8x32xf32>
    %281 = vector.extract_strided_slice %259 {offsets = [0, 128], sizes = [8, 256], strides = [1, 1]} : vector<8x384xf32> to vector<8x256xf32>
    %282 = vector.extract_strided_slice %258 {offsets = [0, 128], sizes = [8, 256], strides = [1, 1]} : vector<8x384xf32> to vector<8x256xf32>
    %283 = arith.addf %281, %282 : vector<8x256xf32>
    %284 = vector.extract_strided_slice %283 {offsets = [0, 0], sizes = [8, 192], strides = [1, 1]} : vector<8x256xf32> to vector<8x192xf32>
    %285 = arith.negf %284 : vector<8x192xf32>
    %286 = math.exp %285 : vector<8x192xf32>
    %cst_60 = arith.constant 1.000000e+00 : f32
    %287 = vector.broadcast %cst_60 : f32 to vector<8x192xf32>
    %288 = arith.addf %287, %286 : vector<8x192xf32>
    %289 = arith.divf %287, %288 : vector<8x192xf32>
    %290 = vector.extract_strided_slice %283 {offsets = [0, 192], sizes = [8, 64], strides = [1, 1]} : vector<8x256xf32> to vector<8x64xf32>
    %291 = math.tanh %290 : vector<8x64xf32>
    %292 = vector.extract_strided_slice %289 {offsets = [0, 64], sizes = [8, 64], strides = [1, 1]} : vector<8x192xf32> to vector<8x64xf32>
    %293 = arith.mulf %292, %253 : vector<8x64xf32>
    %294 = vector.extract_strided_slice %289 {offsets = [0, 0], sizes = [8, 64], strides = [1, 1]} : vector<8x192xf32> to vector<8x64xf32>
    %295 = arith.mulf %294, %291 : vector<8x64xf32>
    %296 = arith.addf %293, %295 : vector<8x64xf32>
    %297 = vector.extract_strided_slice %289 {offsets = [0, 128], sizes = [8, 64], strides = [1, 1]} : vector<8x192xf32> to vector<8x64xf32>
    %298 = math.tanh %296 : vector<8x64xf32>
    %299 = arith.mulf %297, %298 : vector<8x64xf32>
    %300 = tpu.concatenate %280, %299 in 1 : vector<8x32xf32>, vector<8x64xf32> -> vector<8x96xf32>
    %cst_61 = arith.constant dense<0.000000e+00> : vector<8x384xf32>
    %301 = tpu.matmul %300, %35, %cst_61 {dimension_numbers = #tpu.dot_dimension_numbers<[1], [0], [0], [1], [0, 0, 1, 1], [], []>} : vector<8x96xf32>, vector<96x384xf32>, vector<8x384xf32> -> vector<8x384xf32>
    %c48 = arith.constant 48 : index
    %c0_62 = arith.constant 0 : index
    %302 = vector.load %arg16[%c48, %c0_62] : memref<64x384xf32, #tpu.memory_space<vmem>>, vector<8x384xf32>
    %303 = vector.extract_strided_slice %302 {offsets = [0, 0], sizes = [8, 64], strides = [1, 1]} : vector<8x384xf32> to vector<8x64xf32>
    %304 = vector.extract_strided_slice %301 {offsets = [0, 0], sizes = [8, 64], strides = [1, 1]} : vector<8x384xf32> to vector<8x64xf32>
    %305 = arith.addf %303, %304 : vector<8x64xf32>
    %306 = arith.negf %305 : vector<8x64xf32>
    %307 = math.exp %306 : vector<8x64xf32>
    %cst_63 = arith.constant 1.000000e+00 : f32
    %308 = vector.broadcast %cst_63 : f32 to vector<8x64xf32>
    %309 = arith.addf %308, %307 : vector<8x64xf32>
    %310 = arith.divf %308, %309 : vector<8x64xf32>
    %311 = vector.extract_strided_slice %310 {offsets = [0, 0], sizes = [8, 32], strides = [1, 1]} : vector<8x64xf32> to vector<8x32xf32>
    %312 = vector.extract_strided_slice %310 {offsets = [0, 32], sizes = [8, 32], strides = [1, 1]} : vector<8x64xf32> to vector<8x32xf32>
    %313 = vector.extract_strided_slice %302 {offsets = [0, 64], sizes = [8, 32], strides = [1, 1]} : vector<8x384xf32> to vector<8x32xf32>
    %314 = vector.extract_strided_slice %301 {offsets = [0, 64], sizes = [8, 32], strides = [1, 1]} : vector<8x384xf32> to vector<8x32xf32>
    %315 = arith.addf %314, %38 : vector<8x32xf32>
    %316 = arith.mulf %311, %315 : vector<8x32xf32>
    %317 = arith.addf %313, %316 : vector<8x32xf32>
    %318 = math.tanh %317 : vector<8x32xf32>
    %cst_64 = arith.constant 1.000000e+00 : f32
    %319 = vector.broadcast %cst_64 : f32 to vector<8x32xf32>
    %320 = arith.subf %319, %312 : vector<8x32xf32>
    %321 = arith.mulf %320, %318 : vector<8x32xf32>
    %322 = arith.mulf %312, %280 : vector<8x32xf32>
    %323 = arith.addf %321, %322 : vector<8x32xf32>
    %324 = vector.extract_strided_slice %302 {offsets = [0, 128], sizes = [8, 256], strides = [1, 1]} : vector<8x384xf32> to vector<8x256xf32>
    %325 = vector.extract_strided_slice %301 {offsets = [0, 128], sizes = [8, 256], strides = [1, 1]} : vector<8x384xf32> to vector<8x256xf32>
    %326 = arith.addf %324, %325 : vector<8x256xf32>
    %327 = vector.extract_strided_slice %326 {offsets = [0, 0], sizes = [8, 192], strides = [1, 1]} : vector<8x256xf32> to vector<8x192xf32>
    %328 = arith.negf %327 : vector<8x192xf32>
    %329 = math.exp %328 : vector<8x192xf32>
    %cst_65 = arith.constant 1.000000e+00 : f32
    %330 = vector.broadcast %cst_65 : f32 to vector<8x192xf32>
    %331 = arith.addf %330, %329 : vector<8x192xf32>
    %332 = arith.divf %330, %331 : vector<8x192xf32>
    %333 = vector.extract_strided_slice %326 {offsets = [0, 192], sizes = [8, 64], strides = [1, 1]} : vector<8x256xf32> to vector<8x64xf32>
    %334 = math.tanh %333 : vector<8x64xf32>
    %335 = vector.extract_strided_slice %332 {offsets = [0, 64], sizes = [8, 64], strides = [1, 1]} : vector<8x192xf32> to vector<8x64xf32>
    %336 = arith.mulf %335, %296 : vector<8x64xf32>
    %337 = vector.extract_strided_slice %332 {offsets = [0, 0], sizes = [8, 64], strides = [1, 1]} : vector<8x192xf32> to vector<8x64xf32>
    %338 = arith.mulf %337, %334 : vector<8x64xf32>
    %339 = arith.addf %336, %338 : vector<8x64xf32>
    %340 = vector.extract_strided_slice %332 {offsets = [0, 128], sizes = [8, 64], strides = [1, 1]} : vector<8x192xf32> to vector<8x64xf32>
    %341 = math.tanh %339 : vector<8x64xf32>
    %342 = arith.mulf %340, %341 : vector<8x64xf32>
    %343 = tpu.concatenate %323, %342 in 1 : vector<8x32xf32>, vector<8x64xf32> -> vector<8x96xf32>
    %cst_66 = arith.constant dense<0.000000e+00> : vector<8x384xf32>
    %344 = tpu.matmul %343, %35, %cst_66 {dimension_numbers = #tpu.dot_dimension_numbers<[1], [0], [0], [1], [0, 0, 1, 1], [], []>} : vector<8x96xf32>, vector<96x384xf32>, vector<8x384xf32> -> vector<8x384xf32>
    %c56 = arith.constant 56 : index
    %c0_67 = arith.constant 0 : index
    %345 = vector.load %arg16[%c56, %c0_67] : memref<64x384xf32, #tpu.memory_space<vmem>>, vector<8x384xf32>
    %346 = vector.extract_strided_slice %345 {offsets = [0, 0], sizes = [8, 64], strides = [1, 1]} : vector<8x384xf32> to vector<8x64xf32>
    %347 = vector.extract_strided_slice %344 {offsets = [0, 0], sizes = [8, 64], strides = [1, 1]} : vector<8x384xf32> to vector<8x64xf32>
    %348 = arith.addf %346, %347 : vector<8x64xf32>
    %349 = arith.negf %348 : vector<8x64xf32>
    %350 = math.exp %349 : vector<8x64xf32>
    %cst_68 = arith.constant 1.000000e+00 : f32
    %351 = vector.broadcast %cst_68 : f32 to vector<8x64xf32>
    %352 = arith.addf %351, %350 : vector<8x64xf32>
    %353 = arith.divf %351, %352 : vector<8x64xf32>
    %354 = vector.extract_strided_slice %353 {offsets = [0, 0], sizes = [8, 32], strides = [1, 1]} : vector<8x64xf32> to vector<8x32xf32>
    %355 = vector.extract_strided_slice %353 {offsets = [0, 32], sizes = [8, 32], strides = [1, 1]} : vector<8x64xf32> to vector<8x32xf32>
    %356 = vector.extract_strided_slice %345 {offsets = [0, 64], sizes = [8, 32], strides = [1, 1]} : vector<8x384xf32> to vector<8x32xf32>
    %357 = vector.extract_strided_slice %344 {offsets = [0, 64], sizes = [8, 32], strides = [1, 1]} : vector<8x384xf32> to vector<8x32xf32>
    %358 = arith.addf %357, %38 : vector<8x32xf32>
    %359 = arith.mulf %354, %358 : vector<8x32xf32>
    %360 = arith.addf %356, %359 : vector<8x32xf32>
    %361 = math.tanh %360 : vector<8x32xf32>
    %cst_69 = arith.constant 1.000000e+00 : f32
    %362 = vector.broadcast %cst_69 : f32 to vector<8x32xf32>
    %363 = arith.subf %362, %355 : vector<8x32xf32>
    %364 = arith.mulf %363, %361 : vector<8x32xf32>
    %365 = arith.mulf %355, %323 : vector<8x32xf32>
    %366 = arith.addf %364, %365 : vector<8x32xf32>
    %367 = vector.extract_strided_slice %345 {offsets = [0, 128], sizes = [8, 256], strides = [1, 1]} : vector<8x384xf32> to vector<8x256xf32>
    %368 = vector.extract_strided_slice %344 {offsets = [0, 128], sizes = [8, 256], strides = [1, 1]} : vector<8x384xf32> to vector<8x256xf32>
    %369 = arith.addf %367, %368 : vector<8x256xf32>
    %370 = vector.extract_strided_slice %369 {offsets = [0, 0], sizes = [8, 192], strides = [1, 1]} : vector<8x256xf32> to vector<8x192xf32>
    %371 = arith.negf %370 : vector<8x192xf32>
    %372 = math.exp %371 : vector<8x192xf32>
    %cst_70 = arith.constant 1.000000e+00 : f32
    %373 = vector.broadcast %cst_70 : f32 to vector<8x192xf32>
    %374 = arith.addf %373, %372 : vector<8x192xf32>
    %375 = arith.divf %373, %374 : vector<8x192xf32>
    %376 = vector.extract_strided_slice %369 {offsets = [0, 192], sizes = [8, 64], strides = [1, 1]} : vector<8x256xf32> to vector<8x64xf32>
    %377 = math.tanh %376 : vector<8x64xf32>
    %378 = vector.extract_strided_slice %375 {offsets = [0, 64], sizes = [8, 64], strides = [1, 1]} : vector<8x192xf32> to vector<8x64xf32>
    %379 = arith.mulf %378, %339 : vector<8x64xf32>
    %380 = vector.extract_strided_slice %375 {offsets = [0, 0], sizes = [8, 64], strides = [1, 1]} : vector<8x192xf32> to vector<8x64xf32>
    %381 = arith.mulf %380, %377 : vector<8x64xf32>
    %382 = arith.addf %379, %381 : vector<8x64xf32>
    %383 = vector.extract_strided_slice %375 {offsets = [0, 128], sizes = [8, 64], strides = [1, 1]} : vector<8x192xf32> to vector<8x64xf32>
    %384 = math.tanh %382 : vector<8x64xf32>
    %385 = arith.mulf %383, %384 : vector<8x64xf32>
    %386 = vector.extract_strided_slice %385 {offsets = [0, 0], sizes = [8, 32], strides = [1, 1]} : vector<8x64xf32> to vector<8x32xf32>
    %387 = vector.extract_strided_slice %385 {offsets = [0, 32], sizes = [8, 32], strides = [1, 1]} : vector<8x64xf32> to vector<8x32xf32>
    %388 = arith.addf %386, %387 : vector<8x32xf32>
    %cst_71 = arith.constant 5.000000e-01 : f32
    %389 = vector.broadcast %cst_71 : f32 to vector<8x32xf32>
    %390 = arith.mulf %388, %389 : vector<8x32xf32>
    %391 = tpu.concatenate %366, %390 in 1 : vector<8x32xf32>, vector<8x32xf32> -> vector<8x64xf32>
    %c0_72 = arith.constant 0 : index
    %c0_73 = arith.constant 0 : index
    %392 = vector.load %arg11[%c0_72, %c0_73] : memref<64x32xf32, #tpu.memory_space<vmem>>, vector<64x32xf32>
    %cst_74 = arith.constant dense<0.000000e+00> : vector<8x32xf32>
    %393 = tpu.matmul %391, %392, %cst_74 {dimension_numbers = #tpu.dot_dimension_numbers<[1], [0], [0], [1], [0, 0, 1, 1], [], []>} : vector<8x64xf32>, vector<64x32xf32>, vector<8x32xf32> -> vector<8x32xf32>
    %c0_75 = arith.constant 0 : index
    %c0_76 = arith.constant 0 : index
    %394 = vector.load %arg12[%c0_75, %c0_76] : memref<1x32xf32, #tpu.memory_space<vmem>>, vector<1x32xf32>
    %395 = vector.broadcast %394 : vector<1x32xf32> to vector<8x32xf32>
    %396 = arith.addf %393, %395 : vector<8x32xf32>
    %cst_77 = arith.constant 0.000000e+00 : f32
    %397 = vector.broadcast %cst_77 : f32 to vector<8x32xf32>
    %398 = arith.maximumf %396, %397 : vector<8x32xf32>
    %c0_78 = arith.constant 0 : index
    %c0_79 = arith.constant 0 : index
    %399 = vector.load %arg13[%c0_78, %c0_79] : memref<32x2xf32, #tpu.memory_space<vmem>>, vector<32x2xf32>
    %cst_80 = arith.constant dense<0.000000e+00> : vector<8x2xf32>
    %400 = tpu.matmul %398, %399, %cst_80 {dimension_numbers = #tpu.dot_dimension_numbers<[1], [0], [0], [1], [0, 0, 1, 1], [], []>} : vector<8x32xf32>, vector<32x2xf32>, vector<8x2xf32> -> vector<8x2xf32>
    %c0_81 = arith.constant 0 : index
    %c0_82 = arith.constant 0 : index
    %401 = vector.load %arg14[%c0_81, %c0_82] : memref<1x2xf32, #tpu.memory_space<vmem>>, vector<1x2xf32>
    %402 = vector.broadcast %401 : vector<1x2xf32> to vector<8x2xf32>
    %403 = arith.addf %400, %402 : vector<8x2xf32>
    %c0_83 = arith.constant 0 : index
    %c0_84 = arith.constant 0 : index
    %404 = vector.load %arg15[%c0_83, %c0_84] : memref<8x2xf32, #tpu.memory_space<vmem>>, vector<8x2xf32>
    tpu.vector_store %arg15[%c0_83, %c0_84], %403 {strides = array<i32>} : memref<8x2xf32, #tpu.memory_space<vmem>>, vector<8x2xf32>,
    return
  }
  func.func @transform_0(%arg0: i32) -> (i32, i32, i32) {
    %c0_i32 = arith.constant 0 : i32
    %c0_i32_0 = arith.constant 0 : i32
    %c0_i32_1 = arith.constant 0 : i32
    return %c0_i32, %arg0, %c0_i32_0 : i32, i32, i32
  }
  func.func @transform_1(%arg0: i32) -> (i32, i32, i32) {
    %c0_i32 = arith.constant 0 : i32
    %c0_i32_0 = arith.constant 0 : i32
    %c0_i32_1 = arith.constant 0 : i32
    return %c0_i32, %arg0, %c0_i32_0 : i32, i32, i32
  }
  func.func @transform_2(%arg0: i32) -> (i32, i32) {
    %c0_i32 = arith.constant 0 : i32
    %c0_i32_0 = arith.constant 0 : i32
    %c0_i32_1 = arith.constant 0 : i32
    return %c0_i32, %c0_i32_0 : i32, i32
  }
  func.func @transform_3(%arg0: i32) -> (i32, i32) {
    %c0_i32 = arith.constant 0 : i32
    %c0_i32_0 = arith.constant 0 : i32
    %c0_i32_1 = arith.constant 0 : i32
    return %c0_i32, %c0_i32_0 : i32, i32
  }
  func.func @transform_4(%arg0: i32) -> (i32, i32) {
    %c0_i32 = arith.constant 0 : i32
    %c0_i32_0 = arith.constant 0 : i32
    %c0_i32_1 = arith.constant 0 : i32
    return %c0_i32, %c0_i32_0 : i32, i32
  }
  func.func @transform_5(%arg0: i32) -> (i32, i32) {
    %c0_i32 = arith.constant 0 : i32
    %c0_i32_0 = arith.constant 0 : i32
    %c0_i32_1 = arith.constant 0 : i32
    return %c0_i32, %c0_i32_0 : i32, i32
  }
  func.func @transform_6(%arg0: i32) -> (i32, i32) {
    %c0_i32 = arith.constant 0 : i32
    %c0_i32_0 = arith.constant 0 : i32
    %c0_i32_1 = arith.constant 0 : i32
    return %c0_i32, %c0_i32_0 : i32, i32
  }
  func.func @transform_7(%arg0: i32) -> (i32, i32) {
    %c0_i32 = arith.constant 0 : i32
    %c0_i32_0 = arith.constant 0 : i32
    %c0_i32_1 = arith.constant 0 : i32
    return %c0_i32, %c0_i32_0 : i32, i32
  }
  func.func @transform_8(%arg0: i32) -> (i32, i32) {
    %c0_i32 = arith.constant 0 : i32
    %c0_i32_0 = arith.constant 0 : i32
    %c0_i32_1 = arith.constant 0 : i32
    return %c0_i32, %c0_i32_0 : i32, i32
  }
  func.func @transform_9(%arg0: i32) -> (i32, i32) {
    %c0_i32 = arith.constant 0 : i32
    %c0_i32_0 = arith.constant 0 : i32
    %c0_i32_1 = arith.constant 0 : i32
    return %c0_i32, %c0_i32_0 : i32, i32
  }
  func.func @transform_10(%arg0: i32) -> (i32, i32) {
    %c0_i32 = arith.constant 0 : i32
    %c0_i32_0 = arith.constant 0 : i32
    %c0_i32_1 = arith.constant 0 : i32
    return %c0_i32, %c0_i32_0 : i32, i32
  }
  func.func @transform_11(%arg0: i32) -> (i32, i32) {
    %c0_i32 = arith.constant 0 : i32
    %c0_i32_0 = arith.constant 0 : i32
    %c0_i32_1 = arith.constant 0 : i32
    return %c0_i32, %c0_i32_0 : i32, i32
  }
  func.func @transform_12(%arg0: i32) -> (i32, i32) {
    %c0_i32 = arith.constant 0 : i32
    %c0_i32_0 = arith.constant 0 : i32
    %c0_i32_1 = arith.constant 0 : i32
    return %c0_i32, %c0_i32_0 : i32, i32
  }
  func.func @transform_13(%arg0: i32) -> (i32, i32) {
    %c0_i32 = arith.constant 0 : i32
    %c0_i32_0 = arith.constant 0 : i32
    %c0_i32_1 = arith.constant 0 : i32
    return %c0_i32, %c0_i32_0 : i32, i32
  }
  func.func @transform_14(%arg0: i32) -> (i32, i32) {
    %c0_i32 = arith.constant 0 : i32
    %c0_i32_0 = arith.constant 0 : i32
    return %arg0, %c0_i32 : i32, i32
  }
}

</mosaic_0001>

<llo_original>
// kernel: full_model_forward.1
$region0: #{full_model_forward.1}
  #allocation0 [shape = 'u32[]', space=smem, size = 0x4, offset = 0x4, fixed_abs, tag = 'smem constant byte address 0x4 - core index']
  #allocation1 [shape = 'u32[144,128]{1,0:T(1,128)}', space=vmem, size = 0x12000, scoped, tag = 'internal scratch']
  #allocation2 [shape = 'f32[64,384]{1,0:T(8,128)}', space=vmem, size = 0x18000, scoped, tag = 'scratch operand']
  %s0 = inlined_call_operand.vmem [shape: f32[8,8,9], index: 0, kind: input, shape index: {}]
  %s1 = inlined_call_operand.vmem [shape: f32[8,8,768], index: 1, kind: input, shape index: {}]
  %s2 = inlined_call_operand.vmem [shape: f32[9,64], index: 2, kind: input, shape index: {}]
  %s3 = inlined_call_operand.vmem [shape: f32[1,64], index: 3, kind: input, shape index: {}]
  %s4 = inlined_call_operand.vmem [shape: f32[768,64], index: 4, kind: input, shape index: {}]
  %s5 = inlined_call_operand.vmem [shape: f32[1,64], index: 5, kind: input, shape index: {}]
  %s6 = inlined_call_operand.vmem [shape: f32[96,384], index: 6, kind: input, shape index: {}]
  %s7 = inlined_call_operand.vmem [shape: f32[1,384], index: 7, kind: input, shape index: {}]
  %s8 = inlined_call_operand.vmem [shape: f32[1,32], index: 8, kind: input, shape index: {}]
  %s9 = inlined_call_operand.vmem [shape: f32[96,384], index: 9, kind: input, shape index: {}]
  %s10 = inlined_call_operand.vmem [shape: f32[64,32], index: 10, kind: input, shape index: {}]
  %s11 = inlined_call_operand.vmem [shape: f32[1,32], index: 11, kind: input, shape index: {}]
  %s12 = inlined_call_operand.vmem [shape: f32[32,2], index: 12, kind: input, shape index: {}]
  %s13 = inlined_call_operand.vmem [shape: f32[1,2], index: 13, kind: input, shape index: {}]
  %s14 = inlined_call_operand.vmem [shape: f32[8,2], index: 14, kind: output, shape index: {}]
  %s15 = sld [smem:[#allocation0]]
  $region66: #{full_model_forward.1} parent=0
    _
  %s17 = ssub.s32 1, %s15
  %s18 = scalar_select 0, %s17, %s15
  // Predicated region
  $region2: #{full_model_forward.1} parent=0 // pred_check
    _
  $region3: #{full_model_forward.1} parent=0 // pred_check_branch
    %20 = sbr.rel (0) target = $region5
  $region4: #{full_model_forward.1} parent=0 // pred_region
    _
  $region5: #{full_model_forward.1} parent=0 // pred_fallthru
    _
  // Predicated region
  $region6: #{full_model_forward.1} parent=0 // pred_check
    _
  $region7: #{full_model_forward.1} parent=0 // pred_check_branch
    %22 = sbr.rel (0) target = $region9
  $region8: #{full_model_forward.1} parent=0 // pred_region
    _
  $region9: #{full_model_forward.1} parent=0 // pred_fallthru
    _
  // Predicated region
  $region10: #{full_model_forward.1} parent=0 // pred_check
    _
  $region11: #{full_model_forward.1} parent=0 // pred_check_branch
    %24 = sbr.rel (0) target = $region13
  $region12: #{full_model_forward.1} parent=0 // pred_region
    _
  $region13: #{full_model_forward.1} parent=0 // pred_fallthru
    _
  // Predicated region
  $region14: #{full_model_forward.1} parent=0 // pred_check
    _
  $region15: #{full_model_forward.1} parent=0 // pred_check_branch
    %26 = sbr.rel (0) target = $region17
  $region16: #{full_model_forward.1} parent=0 // pred_region
    _
  $region17: #{full_model_forward.1} parent=0 // pred_fallthru
    _
  // Predicated region
  $region18: #{full_model_forward.1} parent=0 // pred_check
    _
  $region19: #{full_model_forward.1} parent=0 // pred_check_branch
    %28 = sbr.rel (0) target = $region21
  $region20: #{full_model_forward.1} parent=0 // pred_region
    _
  $region21: #{full_model_forward.1} parent=0 // pred_fallthru
    _
  // Predicated region
  $region22: #{full_model_forward.1} parent=0 // pred_check
    _
  $region23: #{full_model_forward.1} parent=0 // pred_check_branch
    %30 = sbr.rel (0) target = $region25
  $region24: #{full_model_forward.1} parent=0 // pred_region
    _
  $region25: #{full_model_forward.1} parent=0 // pred_fallthru
    _
  // Predicated region
  $region26: #{full_model_forward.1} parent=0 // pred_check
    _
  $region27: #{full_model_forward.1} parent=0 // pred_check_branch
    %32 = sbr.rel (0) target = $region29
  $region28: #{full_model_forward.1} parent=0 // pred_region
    _
  $region29: #{full_model_forward.1} parent=0 // pred_fallthru
    _
  // Predicated region
  $region30: #{full_model_forward.1} parent=0 // pred_check
    _
  $region31: #{full_model_forward.1} parent=0 // pred_check_branch
    %34 = sbr.rel (0) target = $region33
  $region32: #{full_model_forward.1} parent=0 // pred_region
    _
  $region33: #{full_model_forward.1} parent=0 // pred_fallthru
    _
  // Predicated region
  $region34: #{full_model_forward.1} parent=0 // pred_check
    _
  $region35: #{full_model_forward.1} parent=0 // pred_check_branch
    %36 = sbr.rel (0) target = $region37
  $region36: #{full_model_forward.1} parent=0 // pred_region
    _
  $region37: #{full_model_forward.1} parent=0 // pred_fallthru
    _
  // Predicated region
  $region38: #{full_model_forward.1} parent=0 // pred_check
    _
  $region39: #{full_model_forward.1} parent=0 // pred_check_branch
    %38 = sbr.rel (0) target = $region41
  $region40: #{full_model_forward.1} parent=0 // pred_region
    _
  $region41: #{full_model_forward.1} parent=0 // pred_fallthru
    _
  // Predicated region
  $region42: #{full_model_forward.1} parent=0 // pred_check
    _
  $region43: #{full_model_forward.1} parent=0 // pred_check_branch
    %40 = sbr.rel (0) target = $region45
  $region44: #{full_model_forward.1} parent=0 // pred_region
    _
  $region45: #{full_model_forward.1} parent=0 // pred_fallthru
    _
  // Predicated region
  $region46: #{full_model_forward.1} parent=0 // pred_check
    _
  $region47: #{full_model_forward.1} parent=0 // pred_check_branch
    %42 = sbr.rel (0) target = $region49
  $region48: #{full_model_forward.1} parent=0 // pred_region
    _
  $region49: #{full_model_forward.1} parent=0 // pred_fallthru
    _
  // Predicated region
  $region50: #{full_model_forward.1} parent=0 // pred_check
    _
  $region51: #{full_model_forward.1} parent=0 // pred_check_branch
    %44 = sbr.rel (0) target = $region53
  $region52: #{full_model_forward.1} parent=0 // pred_region
    _
  $region53: #{full_model_forward.1} parent=0 // pred_fallthru
    _
  // Predicated region
  $region54: #{full_model_forward.1} parent=0 // pred_check
    _
  $region55: #{full_model_forward.1} parent=0 // pred_check_branch
    %46 = sbr.rel (0) target = $region57
  $region56: #{full_model_forward.1} parent=0 // pred_region
    _
  $region57: #{full_model_forward.1} parent=0 // pred_fallthru
    _
  %v47 = vld [vmem:[%s0] sm:$0xff]
  %v48 = vld [vmem:[%s0 + $0x8] sm:$0xff]
  %v49 = vld [vmem:[%s0 + $0x10] sm:$0xff]
  %v50 = vld [vmem:[%s0 + $0x18] sm:$0xff]
  %v51 = vld [vmem:[%s0 + $0x20] sm:$0xff]
  %v52 = vld [vmem:[%s0 + $0x28] sm:$0xff]
  %v53 = vld [vmem:[%s0 + $0x30] sm:$0xff]
  %v54 = vld [vmem:[%s0 + $0x38] sm:$0xff]
  %v55 = vld [vmem:[%s1] sm:$0xff]
  %v56 = vld [vmem:[%s1 + $0x8] sm:$0xff]
  %v57 = vld [vmem:[%s1 + $0x10] sm:$0xff]
  %v58 = vld [vmem:[%s1 + $0x18] sm:$0xff]
  %v59 = vld [vmem:[%s1 + $0x20] sm:$0xff]
  %v60 = vld [vmem:[%s1 + $0x28] sm:$0xff]
  %v61 = vld [vmem:[%s1 + $0x30] sm:$0xff]
  %v62 = vld [vmem:[%s1 + $0x38] sm:$0xff]
  %v63 = vld [vmem:[%s1 + $0x40] sm:$0xff]
  %v64 = vld [vmem:[%s1 + $0x48] sm:$0xff]
  %v65 = vld [vmem:[%s1 + $0x50] sm:$0xff]
  %v66 = vld [vmem:[%s1 + $0x58] sm:$0xff]
  %v67 = vld [vmem:[%s1 + $0x60] sm:$0xff]
  %v68 = vld [vmem:[%s1 + $0x68] sm:$0xff]
  %v69 = vld [vmem:[%s1 + $0x70] sm:$0xff]
  %v70 = vld [vmem:[%s1 + $0x78] sm:$0xff]
  %v71 = vld [vmem:[%s1 + $0x80] sm:$0xff]
  %v72 = vld [vmem:[%s1 + $0x88] sm:$0xff]
  %v73 = vld [vmem:[%s1 + $0x90] sm:$0xff]
  %v74 = vld [vmem:[%s1 + $0x98] sm:$0xff]
  %v75 = vld [vmem:[%s1 + $0xa0] sm:$0xff]
  %v76 = vld [vmem:[%s1 + $0xa8] sm:$0xff]
  %v77 = vld [vmem:[%s1 + $0xb0] sm:$0xff]
  %v78 = vld [vmem:[%s1 + $0xb8] sm:$0xff]
  %v79 = vld [vmem:[%s1 + $0xc0] sm:$0xff]
  %v80 = vld [vmem:[%s1 + $0xc8] sm:$0xff]
  %v81 = vld [vmem:[%s1 + $0xd0] sm:$0xff]
  %v82 = vld [vmem:[%s1 + $0xd8] sm:$0xff]
  %v83 = vld [vmem:[%s1 + $0xe0] sm:$0xff]
  %v84 = vld [vmem:[%s1 + $0xe8] sm:$0xff]
  %v85 = vld [vmem:[%s1 + $0xf0] sm:$0xff]
  %v86 = vld [vmem:[%s1 + $0xf8] sm:$0xff]
  %v87 = vld [vmem:[%s1 + $0x100] sm:$0xff]
  %v88 = vld [vmem:[%s1 + $0x108] sm:$0xff]
  %v89 = vld [vmem:[%s1 + $0x110] sm:$0xff]
  %v90 = vld [vmem:[%s1 + $0x118] sm:$0xff]
  %v91 = vld [vmem:[%s1 + $0x120] sm:$0xff]
  %v92 = vld [vmem:[%s1 + $0x128] sm:$0xff]
  %v93 = vld [vmem:[%s1 + $0x130] sm:$0xff]
  %v94 = vld [vmem:[%s1 + $0x138] sm:$0xff]
  %v95 = vld [vmem:[%s1 + $0x140] sm:$0xff]
  %v96 = vld [vmem:[%s1 + $0x148] sm:$0xff]
  %v97 = vld [vmem:[%s1 + $0x150] sm:$0xff]
  %v98 = vld [vmem:[%s1 + $0x158] sm:$0xff]
  %v99 = vld [vmem:[%s1 + $0x160] sm:$0xff]
  %v100 = vld [vmem:[%s1 + $0x168] sm:$0xff]
  %v101 = vld [vmem:[%s1 + $0x170] sm:$0xff]
  %v102 = vld [vmem:[%s1 + $0x178] sm:$0xff]
  %v103 = vld [vmem:[%s2] sm:$0xff]
  %v104 = vld [vmem:[%s2 + $0x8] sm:$0x1]
  %v105 = vld [vmem:[%s3] sm:$0x1]
  %v107 = vlaneseq
  %v108 = vshrl.u32 %v107, 7
  %v109 = vsub.s32 0, %v108
  %v110 = vrot.slane %v105, %v109
  %vm112 = vcmask 72704
  %v114 = vsel %vm112, %v47, 0
  %v117 = vsel %vm112, %v48, 0
  %v120 = vsel %vm112, %v49, 0
  %v123 = vsel %vm112, %v50, 0
  %v126 = vsel %vm112, %v51, 0
  %v129 = vsel %vm112, %v52, 0
  %v132 = vsel %vm112, %v53, 0
  %v135 = vsel %vm112, %v54, 0
  %vm137 = vcmask 1040384
  %v139 = vsel %vm137, %v104, 0
  %141 = vmatprep.subr.mxu0 0.0
  %142 = vmatpush1.msra.mxu0 0.0
  %143 = vmatprep.subr.mxu0 0.0
  %144 = vmatpush1.msra.mxu0 0.0
  %145 = vmatprep.subr.mxu0 0.0
  %146 = vmatpush1.msra.mxu0 0.0
  %147 = vmatprep.subr.mxu0 0.0
  %148 = vmatpush1.msra.mxu0 0.0
  %149 = vmatprep.subr.mxu0 0.0
  %150 = vmatpush1.msra.mxu0 0.0
  %151 = vmatprep.subr.mxu0 0.0
  %152 = vmatpush1.msra.mxu0 0.0
  %153 = vmatprep.subr.mxu0 0.0
  %154 = vmatpush1.msra.mxu0 0.0
  %155 = vmatprep.subr.mxu0 0.0
  %156 = vmatpush1.msra.mxu0 0.0
  %157 = vmatprep.subr.mxu0 0.0
  %158 = vmatpush1.msra.mxu0 0.0
  %159 = vmatprep.subr.mxu0 0.0
  %160 = vmatpush1.msra.mxu0 0.0
  %161 = vmatprep.subr.mxu0 0.0
  %162 = vmatpush1.msra.mxu0 0.0
  %163 = vmatprep.subr.mxu0 0.0
  %164 = vmatpush1.msra.mxu0 0.0
  %165 = vmatprep.subr.mxu0 0.0
  %166 = vmatpush1.msra.mxu0 0.0
  %167 = vmatprep.subr.mxu0 0.0
  %168 = vmatpush1.msra.mxu0 0.0
  %169 = vmatprep.subr.mxu0 0.0
  %170 = vmatpush1.msra.mxu0 %v139
  %171 = vmatprep.subr.mxu0 0.0
  %172 = vmatpush1.msra.mxu0 %v103
  %173 = vmatprep.subr.mxu0 0.0
  %174 = vmatpush2.msra.mxu0 0.0
  %175 = vmatprep.subr.mxu0 0.0
  %176 = vmatpush2.msra.mxu0 0.0
  %177 = vmatprep.subr.mxu0 0.0
  %178 = vmatpush2.msra.mxu0 0.0
  %179 = vmatprep.subr.mxu0 0.0
  %180 = vmatpush2.msra.mxu0 0.0
  %181 = vmatprep.subr.mxu0 0.0
  %182 = vmatpush2.msra.mxu0 0.0
  %183 = vmatprep.subr.mxu0 0.0
  %184 = vmatpush2.msra.mxu0 0.0
  %185 = vmatprep.subr.mxu0 0.0
  %186 = vmatpush2.msra.mxu0 0.0
  %187 = vmatprep.subr.mxu0 0.0
  %188 = vmatpush2.msra.mxu0 0.0
  %189 = vmatprep.subr.mxu0 0.0
  %190 = vmatpush2.msra.mxu0 0.0
  %191 = vmatprep.subr.mxu0 0.0
  %192 = vmatpush2.msra.mxu0 0.0
  %193 = vmatprep.subr.mxu0 0.0
  %194 = vmatpush2.msra.mxu0 0.0
  %195 = vmatprep.subr.mxu0 0.0
  %196 = vmatpush2.msra.mxu0 0.0
  %197 = vmatprep.subr.mxu0 0.0
  %198 = vmatpush2.msra.mxu0 0.0
  %199 = vmatprep.subr.mxu0 0.0
  %200 = vmatpush2.msra.mxu0 0.0
  %201 = vmatprep.subr.mxu0 0.0
  %202 = vmatpush2.msra.mxu0 0.0
  %203 = vmatprep.subr.mxu0 0.0
  %204 = vmatpush2.msra.mxu0 0.0
  %205 = vmatprep.mubr.f32.mxu0 0.0
  %206 = vmatmul.mubr.f32.gmra.mxu0 %v114
  %v207 = vpop.f32.mrf.mxu0
  %v208 = vadd.f32 %v110, %v207
  %v209 = vpop.f32.mrf.mxu0
  %210 = vmatprep.mubr.f32.mxu0 0.0
  %211 = vmatmul.mubr.f32.gmra.mxu0 %v117
  %v212 = vpop.f32.mrf.mxu0
  %v213 = vadd.f32 %v110, %v212
  %v214 = vpop.f32.mrf.mxu0
  %215 = vmatprep.mubr.f32.mxu0 0.0
  %216 = vmatmul.mubr.f32.gmra.mxu0 %v120
  %v217 = vpop.f32.mrf.mxu0
  %v218 = vadd.f32 %v110, %v217
  %v219 = vpop.f32.mrf.mxu0
  %220 = vmatprep.mubr.f32.mxu0 0.0
  %221 = vmatmul.mubr.f32.gmra.mxu0 %v123
  %v222 = vpop.f32.mrf.mxu0
  %v223 = vadd.f32 %v110, %v222
  %v224 = vpop.f32.mrf.mxu0
  %225 = vmatprep.mubr.f32.mxu0 0.0
  %226 = vmatmul.mubr.f32.gmra.mxu0 %v126
  %v227 = vpop.f32.mrf.mxu0
  %v228 = vadd.f32 %v110, %v227
  %v229 = vpop.f32.mrf.mxu0
  %230 = vmatprep.mubr.f32.mxu0 0.0
  %231 = vmatmul.mubr.f32.gmra.mxu0 %v129
  %v232 = vpop.f32.mrf.mxu0
  %v233 = vadd.f32 %v110, %v232
  %v234 = vpop.f32.mrf.mxu0
  %235 = vmatprep.mubr.f32.mxu0 0.0
  %236 = vmatmul.mubr.f32.gmra.mxu0 %v132
  %v237 = vpop.f32.mrf.mxu0
  %v238 = vadd.f32 %v110, %v237
  %v239 = vpop.f32.mrf.mxu0
  %240 = vmatprep.mubr.f32.mxu0 0.0
  %241 = vmatmul.mubr.f32.gmra.mxu0 %v135
  %v242 = vpop.f32.mrf.mxu0
  %v243 = vadd.f32 %v110, %v242
  %v244 = vpop.f32.mrf.mxu0
  %245 = vdwg.mxu0
  %v246 = vmax.f32 %v208, 0.0
  %v247 = vmax.f32 %v213, 0.0
  %v248 = vmax.f32 %v218, 0.0
  %v249 = vmax.f32 %v223, 0.0
  %v250 = vmax.f32 %v228, 0.0
  %v251 = vmax.f32 %v233, 0.0
  %v252 = vmax.f32 %v238, 0.0
  %v253 = vmax.f32 %v243, 0.0
  %v254 = vld [vmem:[%s4] sm:$0xff]
  %v255 = vld [vmem:[%s4 + $0x8] sm:$0xff]
  %v256 = vld [vmem:[%s4 + $0x10] sm:$0xff]
  %v257 = vld [vmem:[%s4 + $0x18] sm:$0xff]
  %v258 = vld [vmem:[%s4 + $0x20] sm:$0xff]
  %v259 = vld [vmem:[%s4 + $0x28] sm:$0xff]
  %v260 = vld [vmem:[%s4 + $0x30] sm:$0xff]
  %v261 = vld [vmem:[%s4 + $0x38] sm:$0xff]
  %v262 = vld [vmem:[%s4 + $0x40] sm:$0xff]
  %v263 = vld [vmem:[%s4 + $0x48] sm:$0xff]
  %v264 = vld [vmem:[%s4 + $0x50] sm:$0xff]
  %v265 = vld [vmem:[%s4 + $0x58] sm:$0xff]
  %v266 = vld [vmem:[%s4 + $0x60] sm:$0xff]
  %v267 = vld [vmem:[%s4 + $0x68] sm:$0xff]
  %v268 = vld [vmem:[%s4 + $0x70] sm:$0xff]
  %v269 = vld [vmem:[%s4 + $0x78] sm:$0xff]
  %v270 = vld [vmem:[%s4 + $0x80] sm:$0xff]
  %v271 = vld [vmem:[%s4 + $0x88] sm:$0xff]
  %v272 = vld [vmem:[%s4 + $0x90] sm:$0xff]
  %v273 = vld [vmem:[%s4 + $0x98] sm:$0xff]
  %v274 = vld [vmem:[%s4 + $0xa0] sm:$0xff]
  %v275 = vld [vmem:[%s4 + $0xa8] sm:$0xff]
  %v276 = vld [vmem:[%s4 + $0xb0] sm:$0xff]
  %v277 = vld [vmem:[%s4 + $0xb8] sm:$0xff]
  %v278 = vld [vmem:[%s4 + $0xc0] sm:$0xff]
  %v279 = vld [vmem:[%s4 + $0xc8] sm:$0xff]
  %v280 = vld [vmem:[%s4 + $0xd0] sm:$0xff]
  %v281 = vld [vmem:[%s4 + $0xd8] sm:$0xff]
  %v282 = vld [vmem:[%s4 + $0xe0] sm:$0xff]
  %v283 = vld [vmem:[%s4 + $0xe8] sm:$0xff]
  %v284 = vld [vmem:[%s4 + $0xf0] sm:$0xff]
  %v285 = vld [vmem:[%s4 + $0xf8] sm:$0xff]
  %v286 = vld [vmem:[%s4 + $0x100] sm:$0xff]
  %v287 = vld [vmem:[%s4 + $0x108] sm:$0xff]
  %v288 = vld [vmem:[%s4 + $0x110] sm:$0xff]
  %v289 = vld [vmem:[%s4 + $0x118] sm:$0xff]
  %v290 = vld [vmem:[%s4 + $0x120] sm:$0xff]
  %v291 = vld [vmem:[%s4 + $0x128] sm:$0xff]
  %v292 = vld [vmem:[%s4 + $0x130] sm:$0xff]
  %v293 = vld [vmem:[%s4 + $0x138] sm:$0xff]
  %v294 = vld [vmem:[%s4 + $0x140] sm:$0xff]
  %v295 = vld [vmem:[%s4 + $0x148] sm:$0xff]
  %v296 = vld [vmem:[%s4 + $0x150] sm:$0xff]
  %v297 = vld [vmem:[%s4 + $0x158] sm:$0xff]
  %v298 = vld [vmem:[%s4 + $0x160] sm:$0xff]
  %v299 = vld [vmem:[%s4 + $0x168] sm:$0xff]
  %v300 = vld [vmem:[%s4 + $0x170] sm:$0xff]
  %v301 = vld [vmem:[%s4 + $0x178] sm:$0xff]
  %v302 = vld [vmem:[%s4 + $0x180] sm:$0xff]
  %v303 = vld [vmem:[%s4 + $0x188] sm:$0xff]
  %v304 = vld [vmem:[%s4 + $0x190] sm:$0xff]
  %v305 = vld [vmem:[%s4 + $0x198] sm:$0xff]
  %v306 = vld [vmem:[%s4 + $0x1a0] sm:$0xff]
  %v307 = vld [vmem:[%s4 + $0x1a8] sm:$0xff]
  %v308 = vld [vmem:[%s4 + $0x1b0] sm:$0xff]
  %v309 = vld [vmem:[%s4 + $0x1b8] sm:$0xff]
  %v310 = vld [vmem:[%s4 + $0x1c0] sm:$0xff]
  %v311 = vld [vmem:[%s4 + $0x1c8] sm:$0xff]
  %v312 = vld [vmem:[%s4 + $0x1d0] sm:$0xff]
  %v313 = vld [vmem:[%s4 + $0x1d8] sm:$0xff]
  %v314 = vld [vmem:[%s4 + $0x1e0] sm:$0xff]
  %v315 = vld [vmem:[%s4 + $0x1e8] sm:$0xff]
  %v316 = vld [vmem:[%s4 + $0x1f0] sm:$0xff]
  %v317 = vld [vmem:[%s4 + $0x1f8] sm:$0xff]
  %v318 = vld [vmem:[%s4 + $0x200] sm:$0xff]
  %v319 = vld [vmem:[%s4 + $0x208] sm:$0xff]
  %v320 = vld [vmem:[%s4 + $0x210] sm:$0xff]
  %v321 = vld [vmem:[%s4 + $0x218] sm:$0xff]
  %v322 = vld [vmem:[%s4 + $0x220] sm:$0xff]
  %v323 = vld [vmem:[%s4 + $0x228] sm:$0xff]
  %v324 = vld [vmem:[%s4 + $0x230] sm:$0xff]
  %v325 = vld [vmem:[%s4 + $0x238] sm:$0xff]
  %v326 = vld [vmem:[%s4 + $0x240] sm:$0xff]
  %v327 = vld [vmem:[%s4 + $0x248] sm:$0xff]
  %v328 = vld [vmem:[%s4 + $0x250] sm:$0xff]
  %v329 = vld [vmem:[%s4 + $0x258] sm:$0xff]
  %v330 = vld [vmem:[%s4 + $0x260] sm:$0xff]
  %v331 = vld [vmem:[%s4 + $0x268] sm:$0xff]
  %v332 = vld [vmem:[%s4 + $0x270] sm:$0xff]
  %v333 = vld [vmem:[%s4 + $0x278] sm:$0xff]
  %v334 = vld [vmem:[%s4 + $0x280] sm:$0xff]
  %v335 = vld [vmem:[%s4 + $0x288] sm:$0xff]
  %v336 = vld [vmem:[%s4 + $0x290] sm:$0xff]
  %v337 = vld [vmem:[%s4 + $0x298] sm:$0xff]
  %v338 = vld [vmem:[%s4 + $0x2a0] sm:$0xff]
  %v339 = vld [vmem:[%s4 + $0x2a8] sm:$0xff]
  %v340 = vld [vmem:[%s4 + $0x2b0] sm:$0xff]
  %v341 = vld [vmem:[%s4 + $0x2b8] sm:$0xff]
  %v342 = vld [vmem:[%s4 + $0x2c0] sm:$0xff]
  %v343 = vld [vmem:[%s4 + $0x2c8] sm:$0xff]
  %v344 = vld [vmem:[%s4 + $0x2d0] sm:$0xff]
  %v345 = vld [vmem:[%s4 + $0x2d8] sm:$0xff]
  %v346 = vld [vmem:[%s4 + $0x2e0] sm:$0xff]
  %v347 = vld [vmem:[%s4 + $0x2e8] sm:$0xff]
  %v348 = vld [vmem:[%s4 + $0x2f0] sm:$0xff]
  %v349 = vld [vmem:[%s4 + $0x2f8] sm:$0xff]
  %v350 = vld [vmem:[%s5] sm:$0x1]
  %v352 = vlaneseq
  %v353 = vshrl.u32 %v352, 7
  %v354 = vsub.s32 0, %v353
  %v355 = vrot.slane %v350, %v354
  %357 = vmatprep.subr.mxu0 0.0
  %358 = vmatpush1.msra.mxu0 %v269
  %359 = vmatprep.subr.mxu0 0.0
  %360 = vmatpush1.msra.mxu0 %v268
  %361 = vmatprep.subr.mxu0 0.0
  %362 = vmatpush1.msra.mxu0 %v267
  %363 = vmatprep.subr.mxu0 0.0
  %364 = vmatpush1.msra.mxu0 %v266
  %365 = vmatprep.subr.mxu0 0.0
  %366 = vmatpush1.msra.mxu0 %v265
  %367 = vmatprep.subr.mxu0 0.0
  %368 = vmatpush1.msra.mxu0 %v264
  %369 = vmatprep.subr.mxu0 0.0
  %370 = vmatpush1.msra.mxu0 %v263
  %371 = vmatprep.subr.mxu0 0.0
  %372 = vmatpush1.msra.mxu0 %v262
  %373 = vmatprep.subr.mxu0 0.0
  %374 = vmatpush1.msra.mxu0 %v261
  %375 = vmatprep.subr.mxu0 0.0
  %376 = vmatpush1.msra.mxu0 %v260
  %377 = vmatprep.subr.mxu0 0.0
  %378 = vmatpush1.msra.mxu0 %v259
  %379 = vmatprep.subr.mxu0 0.0
  %380 = vmatpush1.msra.mxu0 %v258
  %381 = vmatprep.subr.mxu0 0.0
  %382 = vmatpush1.msra.mxu0 %v257
  %383 = vmatprep.subr.mxu0 0.0
  %384 = vmatpush1.msra.mxu0 %v256
  %385 = vmatprep.subr.mxu0 0.0
  %386 = vmatpush1.msra.mxu0 %v255
  %387 = vmatprep.subr.mxu0 0.0
  %388 = vmatpush1.msra.mxu0 %v254
  %389 = vmatprep.subr.mxu0 0.0
  %390 = vmatpush2.msra.mxu0 %v285
  %391 = vmatprep.subr.mxu0 0.0
  %392 = vmatpush2.msra.mxu0 %v284
  %393 = vmatprep.subr.mxu0 0.0
  %394 = vmatpush2.msra.mxu0 %v283
  %395 = vmatprep.subr.mxu0 0.0
  %396 = vmatpush2.msra.mxu0 %v282
  %397 = vmatprep.subr.mxu0 0.0
  %398 = vmatpush2.msra.mxu0 %v281
  %399 = vmatprep.subr.mxu0 0.0
  %400 = vmatpush2.msra.mxu0 %v280
  %401 = vmatprep.subr.mxu0 0.0
  %402 = vmatpush2.msra.mxu0 %v279
  %403 = vmatprep.subr.mxu0 0.0
  %404 = vmatpush2.msra.mxu0 %v278
  %405 = vmatprep.subr.mxu0 0.0
  %406 = vmatpush2.msra.mxu0 %v277
  %407 = vmatprep.subr.mxu0 0.0
  %408 = vmatpush2.msra.mxu0 %v276
  %409 = vmatprep.subr.mxu0 0.0
  %410 = vmatpush2.msra.mxu0 %v275
  %411 = vmatprep.subr.mxu0 0.0
  %412 = vmatpush2.msra.mxu0 %v274
  %413 = vmatprep.subr.mxu0 0.0
  %414 = vmatpush2.msra.mxu0 %v273
  %415 = vmatprep.subr.mxu0 0.0
  %416 = vmatpush2.msra.mxu0 %v272
  %417 = vmatprep.subr.mxu0 0.0
  %418 = vmatpush2.msra.mxu0 %v271
  %419 = vmatprep.subr.mxu0 0.0
  %420 = vmatpush2.msra.mxu0 %v270
  %421 = vmatprep.mubr.f32.mxu0 %v56
  %422 = vmatmul.mubr.f32.gmra.mxu0 %v55
  %v423 = vpop.f32.mrf.mxu0
  %v424 = vadd.f32 %v355, %v423
  %v425 = vpop.f32.mrf.mxu0
  %426 = vmatprep.mubr.f32.mxu0 %v62
  %427 = vmatmul.mubr.f32.gmra.mxu0 %v61
  %v428 = vpop.f32.mrf.mxu0
  %v429 = vadd.f32 %v355, %v428
  %v430 = vpop.f32.mrf.mxu0
  %431 = vmatprep.mubr.f32.mxu0 %v68
  %432 = vmatmul.mubr.f32.gmra.mxu0 %v67
  %v433 = vpop.f32.mrf.mxu0
  %v434 = vadd.f32 %v355, %v433
  %v435 = vpop.f32.mrf.mxu0
  %436 = vmatprep.mubr.f32.mxu0 %v74
  %437 = vmatmul.mubr.f32.gmra.mxu0 %v73
  %v438 = vpop.f32.mrf.mxu0
  %v439 = vadd.f32 %v355, %v438
  %v440 = vpop.f32.mrf.mxu0
  %441 = vmatprep.mubr.f32.mxu0 %v80
  %442 = vmatmul.mubr.f32.gmra.mxu0 %v79
  %v443 = vpop.f32.mrf.mxu0
  %v444 = vadd.f32 %v355, %v443
  %v445 = vpop.f32.mrf.mxu0
  %446 = vmatprep.mubr.f32.mxu0 %v86
  %447 = vmatmul.mubr.f32.gmra.mxu0 %v85
  %v448 = vpop.f32.mrf.mxu0
  %v449 = vadd.f32 %v355, %v448
  %v450 = vpop.f32.mrf.mxu0
  %451 = vmatprep.mubr.f32.mxu0 %v92
  %452 = vmatmul.mubr.f32.gmra.mxu0 %v91
  %v453 = vpop.f32.mrf.mxu0
  %v454 = vadd.f32 %v355, %v453
  %v455 = vpop.f32.mrf.mxu0
  %456 = vmatprep.mubr.f32.mxu0 %v98
  %457 = vmatmul.mubr.f32.gmra.mxu0 %v97
  %v458 = vpop.f32.mrf.mxu0
  %v459 = vadd.f32 %v355, %v458
  %v460 = vpop.f32.mrf.mxu0
  %461 = vdwg.mxu0
  %462 = vmatprep.subr.mxu0 0.0
  %463 = vmatpush1.msra.mxu0 %v301
  %464 = vmatprep.subr.mxu0 0.0
  %465 = vmatpush1.msra.mxu0 %v300
  %466 = vmatprep.subr.mxu0 0.0
  %467 = vmatpush1.msra.mxu0 %v299
  %468 = vmatprep.subr.mxu0 0.0
  %469 = vmatpush1.msra.mxu0 %v298
  %470 = vmatprep.subr.mxu0 0.0
  %471 = vmatpush1.msra.mxu0 %v297
  %472 = vmatprep.subr.mxu0 0.0
  %473 = vmatpush1.msra.mxu0 %v296
  %474 = vmatprep.subr.mxu0 0.0
  %475 = vmatpush1.msra.mxu0 %v295
  %476 = vmatprep.subr.mxu0 0.0
  %477 = vmatpush1.msra.mxu0 %v294
  %478 = vmatprep.subr.mxu0 0.0
  %479 = vmatpush1.msra.mxu0 %v293
  %480 = vmatprep.subr.mxu0 0.0
  %481 = vmatpush1.msra.mxu0 %v292
  %482 = vmatprep.subr.mxu0 0.0
  %483 = vmatpush1.msra.mxu0 %v291
  %484 = vmatprep.subr.mxu0 0.0
  %485 = vmatpush1.msra.mxu0 %v290
  %486 = vmatprep.subr.mxu0 0.0
  %487 = vmatpush1.msra.mxu0 %v289
  %488 = vmatprep.subr.mxu0 0.0
  %489 = vmatpush1.msra.mxu0 %v288
  %490 = vmatprep.subr.mxu0 0.0
  %491 = vmatpush1.msra.mxu0 %v287
  %492 = vmatprep.subr.mxu0 0.0
  %493 = vmatpush1.msra.mxu0 %v286
  %494 = vmatprep.subr.mxu0 0.0
  %495 = vmatpush2.msra.mxu0 %v317
  %496 = vmatprep.subr.mxu0 0.0
  %497 = vmatpush2.msra.mxu0 %v316
  %498 = vmatprep.subr.mxu0 0.0
  %499 = vmatpush2.msra.mxu0 %v315
  %500 = vmatprep.subr.mxu0 0.0
  %501 = vmatpush2.msra.mxu0 %v314
  %502 = vmatprep.subr.mxu0 0.0
  %503 = vmatpush2.msra.mxu0 %v313
  %504 = vmatprep.subr.mxu0 0.0
  %505 = vmatpush2.msra.mxu0 %v312
  %506 = vmatprep.subr.mxu0 0.0
  %507 = vmatpush2.msra.mxu0 %v311
  %508 = vmatprep.subr.mxu0 0.0
  %509 = vmatpush2.msra.mxu0 %v310
  %510 = vmatprep.subr.mxu0 0.0
  %511 = vmatpush2.msra.mxu0 %v309
  %512 = vmatprep.subr.mxu0 0.0
  %513 = vmatpush2.msra.mxu0 %v308
  %514 = vmatprep.subr.mxu0 0.0
  %515 = vmatpush2.msra.mxu0 %v307
  %516 = vmatprep.subr.mxu0 0.0
  %517 = vmatpush2.msra.mxu0 %v306
  %518 = vmatprep.subr.mxu0 0.0
  %519 = vmatpush2.msra.mxu0 %v305
  %520 = vmatprep.subr.mxu0 0.0
  %521 = vmatpush2.msra.mxu0 %v304
  %522 = vmatprep.subr.mxu0 0.0
  %523 = vmatpush2.msra.mxu0 %v303
  %524 = vmatprep.subr.mxu0 0.0
  %525 = vmatpush2.msra.mxu0 %v302
  %526 = vmatprep.mubr.f32.mxu0 %v58
  %527 = vmatmul.mubr.f32.gmra.mxu0 %v57
  %v528 = vpop.f32.mrf.mxu0
  %v529 = vadd.f32 %v424, %v528
  %v530 = vpop.f32.mrf.mxu0
  %531 = vmatprep.mubr.f32.mxu0 %v64
  %532 = vmatmul.mubr.f32.gmra.mxu0 %v63
  %v533 = vpop.f32.mrf.mxu0
  %v534 = vadd.f32 %v429, %v533
  %v535 = vpop.f32.mrf.mxu0
  %536 = vmatprep.mubr.f32.mxu0 %v70
  %537 = vmatmul.mubr.f32.gmra.mxu0 %v69
  %v538 = vpop.f32.mrf.mxu0
  %v539 = vadd.f32 %v434, %v538
  %v540 = vpop.f32.mrf.mxu0
  %541 = vmatprep.mubr.f32.mxu0 %v76
  %542 = vmatmul.mubr.f32.gmra.mxu0 %v75
  %v543 = vpop.f32.mrf.mxu0
  %v544 = vadd.f32 %v439, %v543
  %v545 = vpop.f32.mrf.mxu0
  %546 = vmatprep.mubr.f32.mxu0 %v82
  %547 = vmatmul.mubr.f32.gmra.mxu0 %v81
  %v548 = vpop.f32.mrf.mxu0
  %v549 = vadd.f32 %v444, %v548
  %v550 = vpop.f32.mrf.mxu0
  %551 = vmatprep.mubr.f32.mxu0 %v88
  %552 = vmatmul.mubr.f32.gmra.mxu0 %v87
  %v553 = vpop.f32.mrf.mxu0
  %v554 = vadd.f32 %v449, %v553
  %v555 = vpop.f32.mrf.mxu0
  %556 = vmatprep.mubr.f32.mxu0 %v94
  %557 = vmatmul.mubr.f32.gmra.mxu0 %v93
  %v558 = vpop.f32.mrf.mxu0
  %v559 = vadd.f32 %v454, %v558
  %v560 = vpop.f32.mrf.mxu0
  %561 = vmatprep.mubr.f32.mxu0 %v100
  %562 = vmatmul.mubr.f32.gmra.mxu0 %v99
  %v563 = vpop.f32.mrf.mxu0
  %v564 = vadd.f32 %v459, %v563
  %v565 = vpop.f32.mrf.mxu0
  %566 = vdwg.mxu0
  %567 = vmatprep.subr.mxu0 0.0
  %568 = vmatpush1.msra.mxu0 %v333
  %569 = vmatprep.subr.mxu0 0.0
  %570 = vmatpush1.msra.mxu0 %v332
  %571 = vmatprep.subr.mxu0 0.0
  %572 = vmatpush1.msra.mxu0 %v331
  %573 = vmatprep.subr.mxu0 0.0
  %574 = vmatpush1.msra.mxu0 %v330
  %575 = vmatprep.subr.mxu0 0.0
  %576 = vmatpush1.msra.mxu0 %v329
  %577 = vmatprep.subr.mxu0 0.0
  %578 = vmatpush1.msra.mxu0 %v328
  %579 = vmatprep.subr.mxu0 0.0
  %580 = vmatpush1.msra.mxu0 %v327
  %581 = vmatprep.subr.mxu0 0.0
  %582 = vmatpush1.msra.mxu0 %v326
  %583 = vmatprep.subr.mxu0 0.0
  %584 = vmatpush1.msra.mxu0 %v325
  %585 = vmatprep.subr.mxu0 0.0
  %586 = vmatpush1.msra.mxu0 %v324
  %587 = vmatprep.subr.mxu0 0.0
  %588 = vmatpush1.msra.mxu0 %v323
  %589 = vmatprep.subr.mxu0 0.0
  %590 = vmatpush1.msra.mxu0 %v322
  %591 = vmatprep.subr.mxu0 0.0
  %592 = vmatpush1.msra.mxu0 %v321
  %593 = vmatprep.subr.mxu0 0.0
  %594 = vmatpush1.msra.mxu0 %v320
  %595 = vmatprep.subr.mxu0 0.0
  %596 = vmatpush1.msra.mxu0 %v319
  %597 = vmatprep.subr.mxu0 0.0
  %598 = vmatpush1.msra.mxu0 %v318
  %599 = vmatprep.subr.mxu0 0.0
  %600 = vmatpush2.msra.mxu0 %v349
  %601 = vmatprep.subr.mxu0 0.0
  %602 = vmatpush2.msra.mxu0 %v348
  %603 = vmatprep.subr.mxu0 0.0
  %604 = vmatpush2.msra.mxu0 %v347
  %605 = vmatprep.subr.mxu0 0.0
  %606 = vmatpush2.msra.mxu0 %v346
  %607 = vmatprep.subr.mxu0 0.0
  %608 = vmatpush2.msra.mxu0 %v345
  %609 = vmatprep.subr.mxu0 0.0
  %610 = vmatpush2.msra.mxu0 %v344
  %611 = vmatprep.subr.mxu0 0.0
  %612 = vmatpush2.msra.mxu0 %v343
  %613 = vmatprep.subr.mxu0 0.0
  %614 = vmatpush2.msra.mxu0 %v342
  %615 = vmatprep.subr.mxu0 0.0
  %616 = vmatpush2.msra.mxu0 %v341
  %617 = vmatprep.subr.mxu0 0.0
  %618 = vmatpush2.msra.mxu0 %v340
  %619 = vmatprep.subr.mxu0 0.0
  %620 = vmatpush2.msra.mxu0 %v339
  %621 = vmatprep.subr.mxu0 0.0
  %622 = vmatpush2.msra.mxu0 %v338
  %623 = vmatprep.subr.mxu0 0.0
  %624 = vmatpush2.msra.mxu0 %v337
  %625 = vmatprep.subr.mxu0 0.0
  %626 = vmatpush2.msra.mxu0 %v336
  %627 = vmatprep.subr.mxu0 0.0
  %628 = vmatpush2.msra.mxu0 %v335
  %629 = vmatprep.subr.mxu0 0.0
  %630 = vmatpush2.msra.mxu0 %v334
  %631 = vmatprep.mubr.f32.mxu0 %v60
  %632 = vmatmul.mubr.f32.gmra.mxu0 %v59
  %v633 = vpop.f32.mrf.mxu0
  %v634 = vadd.f32 %v529, %v633
  %v635 = vpop.f32.mrf.mxu0
  %636 = vmatprep.mubr.f32.mxu0 %v66
  %637 = vmatmul.mubr.f32.gmra.mxu0 %v65
  %v638 = vpop.f32.mrf.mxu0
  %v639 = vadd.f32 %v534, %v638
  %v640 = vpop.f32.mrf.mxu0
  %641 = vmatprep.mubr.f32.mxu0 %v72
  %642 = vmatmul.mubr.f32.gmra.mxu0 %v71
  %v643 = vpop.f32.mrf.mxu0
  %v644 = vadd.f32 %v539, %v643
  %v645 = vpop.f32.mrf.mxu0
  %646 = vmatprep.mubr.f32.mxu0 %v78
  %647 = vmatmul.mubr.f32.gmra.mxu0 %v77
  %v648 = vpop.f32.mrf.mxu0
  %v649 = vadd.f32 %v544, %v648
  %v650 = vpop.f32.mrf.mxu0
  %651 = vmatprep.mubr.f32.mxu0 %v84
  %652 = vmatmul.mubr.f32.gmra.mxu0 %v83
  %v653 = vpop.f32.mrf.mxu0
  %v654 = vadd.f32 %v549, %v653
  %v655 = vpop.f32.mrf.mxu0
  %656 = vmatprep.mubr.f32.mxu0 %v90
  %657 = vmatmul.mubr.f32.gmra.mxu0 %v89
  %v658 = vpop.f32.mrf.mxu0
  %v659 = vadd.f32 %v554, %v658
  %v660 = vpop.f32.mrf.mxu0
  %661 = vmatprep.mubr.f32.mxu0 %v96
  %662 = vmatmul.mubr.f32.gmra.mxu0 %v95
  %v663 = vpop.f32.mrf.mxu0
  %v664 = vadd.f32 %v559, %v663
  %v665 = vpop.f32.mrf.mxu0
  %666 = vmatprep.mubr.f32.mxu0 %v102
  %667 = vmatmul.mubr.f32.gmra.mxu0 %v101
  %v668 = vpop.f32.mrf.mxu0
  %v669 = vadd.f32 %v564, %v668
  %v670 = vpop.f32.mrf.mxu0
  %671 = vdwg.mxu0
  %v672 = vmax.f32 %v634, 0.0
  %v673 = vmax.f32 %v639, 0.0
  %v674 = vmax.f32 %v644, 0.0
  %v675 = vmax.f32 %v649, 0.0
  %v676 = vmax.f32 %v654, 0.0
  %v677 = vmax.f32 %v659, 0.0
  %v678 = vmax.f32 %v664, 0.0
  %v679 = vmax.f32 %v669, 0.0
  %v680 = vadd.f32 %v246, %v672
  %v681 = vadd.f32 %v247, %v673
  %v682 = vadd.f32 %v248, %v674
  %v683 = vadd.f32 %v249, %v675
  %v684 = vadd.f32 %v250, %v676
  %v685 = vadd.f32 %v251, %v677
  %v686 = vadd.f32 %v252, %v678
  %v687 = vadd.f32 %v253, %v679
  %696 = vrot.lane.b32.xlu0 %v687, 32
  %v697 = vpop.permute.xlu0 %696
  %698 = vrot.lane.b32.xlu0 %v686, 32
  %v699 = vpop.permute.xlu0 %698
  %700 = vrot.lane.b32.xlu0 %v685, 32
  %v701 = vpop.permute.xlu0 %700
  %702 = vrot.lane.b32.xlu0 %v684, 32
  %v703 = vpop.permute.xlu0 %702
  %704 = vrot.lane.b32.xlu0 %v683, 32
  %v705 = vpop.permute.xlu0 %704
  %706 = vrot.lane.b32.xlu0 %v682, 32
  %v707 = vpop.permute.xlu0 %706
  %708 = vrot.lane.b32.xlu0 %v681, 32
  %v709 = vpop.permute.xlu0 %708
  %710 = vrot.lane.b32.xlu0 %v680, 32
  %v711 = vpop.permute.xlu0 %710
  %vm720 = vcmask 523264
  %v721 = vsel %vm720, %v680, %v697
  %v722 = vsel %vm720, %v681, %v699
  %v723 = vsel %vm720, %v682, %v701
  %v724 = vsel %vm720, %v683, %v703
  %v725 = vsel %vm720, %v684, %v705
  %v726 = vsel %vm720, %v685, %v707
  %v727 = vsel %vm720, %v686, %v709
  %v728 = vsel %vm720, %v687, %v711
  %v729 = vld [vmem:[%s6] sm:$0xff]
  %v730 = vld [vmem:[%s6 + $0x8] sm:$0xff]
  %v731 = vld [vmem:[%s6 + $0x10] sm:$0xff]
  %v732 = vld [vmem:[%s6 + $0x18] sm:$0xff]
  %v733 = vld [vmem:[%s6 + $0x20] sm:$0xff]
  %v734 = vld [vmem:[%s6 + $0x28] sm:$0xff]
  %v735 = vld [vmem:[%s6 + $0x30] sm:$0xff]
  %v736 = vld [vmem:[%s6 + $0x38] sm:$0xff]
  %v737 = vld [vmem:[%s6 + $0x40] sm:$0xff]
  %v738 = vld [vmem:[%s6 + $0x48] sm:$0xff]
  %v739 = vld [vmem:[%s6 + $0x50] sm:$0xff]
  %v740 = vld [vmem:[%s6 + $0x58] sm:$0xff]
  %v741 = vld [vmem:[%s6 + $0x60] sm:$0xff]
  %v742 = vld [vmem:[%s6 + $0x68] sm:$0xff]
  %v743 = vld [vmem:[%s6 + $0x70] sm:$0xff]
  %v744 = vld [vmem:[%s6 + $0x78] sm:$0xff]
  %v745 = vld [vmem:[%s6 + $0x80] sm:$0xff]
  %v746 = vld [vmem:[%s6 + $0x88] sm:$0xff]
  %v747 = vld [vmem:[%s6 + $0x90] sm:$0xff]
  %v748 = vld [vmem:[%s6 + $0x98] sm:$0xff]
  %v749 = vld [vmem:[%s6 + $0xa0] sm:$0xff]
  %v750 = vld [vmem:[%s6 + $0xa8] sm:$0xff]
  %v751 = vld [vmem:[%s6 + $0xb0] sm:$0xff]
  %v752 = vld [vmem:[%s6 + $0xb8] sm:$0xff]
  %v753 = vld [vmem:[%s6 + $0xc0] sm:$0xff]
  %v754 = vld [vmem:[%s6 + $0xc8] sm:$0xff]
  %v755 = vld [vmem:[%s6 + $0xd0] sm:$0xff]
  %v756 = vld [vmem:[%s6 + $0xd8] sm:$0xff]
  %v757 = vld [vmem:[%s6 + $0xe0] sm:$0xff]
  %v758 = vld [vmem:[%s6 + $0xe8] sm:$0xff]
  %v759 = vld [vmem:[%s6 + $0xf0] sm:$0xff]
  %v760 = vld [vmem:[%s6 + $0xf8] sm:$0xff]
  %v761 = vld [vmem:[%s6 + $0x100] sm:$0xff]
  %v762 = vld [vmem:[%s6 + $0x108] sm:$0xff]
  %v763 = vld [vmem:[%s6 + $0x110] sm:$0xff]
  %v764 = vld [vmem:[%s6 + $0x118] sm:$0xff]
  %v765 = vld [vmem:[%s7] sm:$0x7]
  %v767 = vlaneseq
  %v768 = vshrl.u32 %v767, 7
  %v769 = vsub.s32 0, %v768
  %v770 = vrot.slane %v765, %v769
  %v771 = vlaneseq
  %v772 = vshrl.u32 %v771, 7
  %v773 = vsub.s32 1, %v772
  %v774 = vrot.slane %v765, %v773
  %v775 = vlaneseq
  %v776 = vshrl.u32 %v775, 7
  %v777 = vsub.s32 2, %v776
  %v778 = vrot.slane %v765, %v777
  %vm782 = vcmask 785408
  %v784 = vsel %vm782, %v721, 0
  %v787 = vsel %vm782, %v722, 0
  %v790 = vsel %vm782, %v723, 0
  %v793 = vsel %vm782, %v724, 0
  %v796 = vsel %vm782, %v725, 0
  %v799 = vsel %vm782, %v726, 0
  %v802 = vsel %vm782, %v727, 0
  %v805 = vsel %vm782, %v728, 0
  %807 = vmatprep.subr.mxu0 0.0
  %808 = vmatpush1.msra.mxu0 0.0
  %809 = vmatprep.subr.mxu0 0.0
  %810 = vmatpush1.msra.mxu0 0.0
  %811 = vmatprep.subr.mxu0 0.0
  %812 = vmatpush1.msra.mxu0 0.0
  %813 = vmatprep.subr.mxu0 0.0
  %814 = vmatpush1.msra.mxu0 0.0
  %815 = vmatprep.subr.mxu0 %v763
  %816 = vmatpush1.msra.mxu0 %v762
  %817 = vmatprep.subr.mxu0 %v760
  %818 = vmatpush1.msra.mxu0 %v759
  %819 = vmatprep.subr.mxu0 %v757
  %820 = vmatpush1.msra.mxu0 %v756
  %821 = vmatprep.subr.mxu0 %v754
  %822 = vmatpush1.msra.mxu0 %v753
  %823 = vmatprep.subr.mxu0 %v751
  %824 = vmatpush1.msra.mxu0 %v750
  %825 = vmatprep.subr.mxu0 %v748
  %826 = vmatpush1.msra.mxu0 %v747
  %827 = vmatprep.subr.mxu0 %v745
  %828 = vmatpush1.msra.mxu0 %v744
  %829 = vmatprep.subr.mxu0 %v742
  %830 = vmatpush1.msra.mxu0 %v741
  %831 = vmatprep.subr.mxu0 %v739
  %832 = vmatpush1.msra.mxu0 %v738
  %833 = vmatprep.subr.mxu0 %v736
  %834 = vmatpush1.msra.mxu0 %v735
  %835 = vmatprep.subr.mxu0 %v733
  %836 = vmatpush1.msra.mxu0 %v732
  %837 = vmatprep.subr.mxu0 %v730
  %838 = vmatpush1.msra.mxu0 %v729
  %839 = vmatprep.subr.mxu0 0.0
  %840 = vmatpush2.msra.mxu0 0.0
  %841 = vmatprep.subr.mxu0 0.0
  %842 = vmatpush2.msra.mxu0 0.0
  %843 = vmatprep.subr.mxu0 0.0
  %844 = vmatpush2.msra.mxu0 0.0
  %845 = vmatprep.subr.mxu0 0.0
  %846 = vmatpush2.msra.mxu0 0.0
  %847 = vmatprep.subr.mxu0 0.0
  %848 = vmatpush2.msra.mxu0 0.0
  %849 = vmatprep.subr.mxu0 0.0
  %850 = vmatpush2.msra.mxu0 0.0
  %851 = vmatprep.subr.mxu0 0.0
  %852 = vmatpush2.msra.mxu0 0.0
  %853 = vmatprep.subr.mxu0 0.0
  %854 = vmatpush2.msra.mxu0 0.0
  %855 = vmatprep.subr.mxu0 0.0
  %856 = vmatpush2.msra.mxu0 0.0
  %857 = vmatprep.subr.mxu0 0.0
  %858 = vmatpush2.msra.mxu0 0.0
  %859 = vmatprep.subr.mxu0 0.0
  %860 = vmatpush2.msra.mxu0 0.0
  %861 = vmatprep.subr.mxu0 0.0
  %862 = vmatpush2.msra.mxu0 0.0
  %863 = vmatprep.subr.mxu0 0.0
  %864 = vmatpush2.msra.mxu0 0.0
  %865 = vmatprep.subr.mxu0 0.0
  %866 = vmatpush2.msra.mxu0 0.0
  %867 = vmatprep.subr.mxu0 0.0
  %868 = vmatpush2.msra.mxu0 0.0
  %869 = vmatprep.subr.mxu0 0.0
  %870 = vmatpush2.msra.mxu0 0.0
  %871 = vmatprep.mubr.f32.mxu0 0.0
  %872 = vmatmul.mubr.f32.gmra.mxu0 %v784
  %v873 = vpop.f32.mrf.mxu0
  %v874 = vadd.f32 %v770, %v873
  %v875 = vpop.f32.mrf.mxu0
  %v876 = vadd.f32 %v774, %v875
  %877 = vmatprep.mubr.f32.mxu0 0.0
  %878 = vmatmul.mubr.f32.gmra.mxu0 %v787
  %v879 = vpop.f32.mrf.mxu0
  %v880 = vadd.f32 %v770, %v879
  %v881 = vpop.f32.mrf.mxu0
  %v882 = vadd.f32 %v774, %v881
  %883 = vmatprep.mubr.f32.mxu0 0.0
  %884 = vmatmul.mubr.f32.gmra.mxu0 %v790
  %v885 = vpop.f32.mrf.mxu0
  %v886 = vadd.f32 %v770, %v885
  %v887 = vpop.f32.mrf.mxu0
  %v888 = vadd.f32 %v774, %v887
  %889 = vmatprep.mubr.f32.mxu0 0.0
  %890 = vmatmul.mubr.f32.gmra.mxu0 %v793
  %v891 = vpop.f32.mrf.mxu0
  %v892 = vadd.f32 %v770, %v891
  %v893 = vpop.f32.mrf.mxu0
  %v894 = vadd.f32 %v774, %v893
  %895 = vmatprep.mubr.f32.mxu0 0.0
  %896 = vmatmul.mubr.f32.gmra.mxu0 %v796
  %v897 = vpop.f32.mrf.mxu0
  %v898 = vadd.f32 %v770, %v897
  %v899 = vpop.f32.mrf.mxu0
  %v900 = vadd.f32 %v774, %v899
  %901 = vmatprep.mubr.f32.mxu0 0.0
  %902 = vmatmul.mubr.f32.gmra.mxu0 %v799
  %v903 = vpop.f32.mrf.mxu0
  %v904 = vadd.f32 %v770, %v903
  %v905 = vpop.f32.mrf.mxu0
  %v906 = vadd.f32 %v774, %v905
  %907 = vmatprep.mubr.f32.mxu0 0.0
  %908 = vmatmul.mubr.f32.gmra.mxu0 %v802
  %v909 = vpop.f32.mrf.mxu0
  %v910 = vadd.f32 %v770, %v909
  %v911 = vpop.f32.mrf.mxu0
  %v912 = vadd.f32 %v774, %v911
  %913 = vmatprep.mubr.f32.mxu0 0.0
  %914 = vmatmul.mubr.f32.gmra.mxu0 %v805
  %v915 = vpop.f32.mrf.mxu0
  %v916 = vadd.f32 %v770, %v915
  %v917 = vpop.f32.mrf.mxu0
  %v918 = vadd.f32 %v774, %v917
  %919 = vdwg.mxu0
  %920 = vmatprep.subr.mxu0 0.0
  %921 = vmatpush1.msra.mxu0 0.0
  %922 = vmatprep.subr.mxu0 0.0
  %923 = vmatpush1.msra.mxu0 0.0
  %924 = vmatprep.subr.mxu0 0.0
  %925 = vmatpush1.msra.mxu0 0.0
  %926 = vmatprep.subr.mxu0 0.0
  %927 = vmatpush1.msra.mxu0 0.0
  %928 = vmatprep.subr.mxu0 0.0
  %929 = vmatpush1.msra.mxu0 %v764
  %930 = vmatprep.subr.mxu0 0.0
  %931 = vmatpush1.msra.mxu0 %v761
  %932 = vmatprep.subr.mxu0 0.0
  %933 = vmatpush1.msra.mxu0 %v758
  %934 = vmatprep.subr.mxu0 0.0
  %935 = vmatpush1.msra.mxu0 %v755
  %936 = vmatprep.subr.mxu0 0.0
  %937 = vmatpush1.msra.mxu0 %v752
  %938 = vmatprep.subr.mxu0 0.0
  %939 = vmatpush1.msra.mxu0 %v749
  %940 = vmatprep.subr.mxu0 0.0
  %941 = vmatpush1.msra.mxu0 %v746
  %942 = vmatprep.subr.mxu0 0.0
  %943 = vmatpush1.msra.mxu0 %v743
  %944 = vmatprep.subr.mxu0 0.0
  %945 = vmatpush1.msra.mxu0 %v740
  %946 = vmatprep.subr.mxu0 0.0
  %947 = vmatpush1.msra.mxu0 %v737
  %948 = vmatprep.subr.mxu0 0.0
  %949 = vmatpush1.msra.mxu0 %v734
  %950 = vmatprep.subr.mxu0 0.0
  %951 = vmatpush1.msra.mxu0 %v731
  %952 = vmatprep.subr.mxu0 0.0
  %953 = vmatpush2.msra.mxu0 0.0
  %954 = vmatprep.subr.mxu0 0.0
  %955 = vmatpush2.msra.mxu0 0.0
  %956 = vmatprep.subr.mxu0 0.0
  %957 = vmatpush2.msra.mxu0 0.0
  %958 = vmatprep.subr.mxu0 0.0
  %959 = vmatpush2.msra.mxu0 0.0
  %960 = vmatprep.subr.mxu0 0.0
  %961 = vmatpush2.msra.mxu0 0.0
  %962 = vmatprep.subr.mxu0 0.0
  %963 = vmatpush2.msra.mxu0 0.0
  %964 = vmatprep.subr.mxu0 0.0
  %965 = vmatpush2.msra.mxu0 0.0
  %966 = vmatprep.subr.mxu0 0.0
  %967 = vmatpush2.msra.mxu0 0.0
  %968 = vmatprep.subr.mxu0 0.0
  %969 = vmatpush2.msra.mxu0 0.0
  %970 = vmatprep.subr.mxu0 0.0
  %971 = vmatpush2.msra.mxu0 0.0
  %972 = vmatprep.subr.mxu0 0.0
  %973 = vmatpush2.msra.mxu0 0.0
  %974 = vmatprep.subr.mxu0 0.0
  %975 = vmatpush2.msra.mxu0 0.0
  %976 = vmatprep.subr.mxu0 0.0
  %977 = vmatpush2.msra.mxu0 0.0
  %978 = vmatprep.subr.mxu0 0.0
  %979 = vmatpush2.msra.mxu0 0.0
  %980 = vmatprep.subr.mxu0 0.0
  %981 = vmatpush2.msra.mxu0 0.0
  %982 = vmatprep.subr.mxu0 0.0
  %983 = vmatpush2.msra.mxu0 0.0
  %984 = vmatprep.mubr.f32.mxu0 0.0
  %985 = vmatmul.mubr.f32.gmra.mxu0 %v784
  %v986 = vpop.f32.mrf.mxu0
  %v987 = vadd.f32 %v778, %v986
  %v988 = vpop.f32.mrf.mxu0
  %989 = vmatprep.mubr.f32.mxu0 0.0
  %990 = vmatmul.mubr.f32.gmra.mxu0 %v787
  %v991 = vpop.f32.mrf.mxu0
  %v992 = vadd.f32 %v778, %v991
  %v993 = vpop.f32.mrf.mxu0
  %994 = vmatprep.mubr.f32.mxu0 0.0
  %995 = vmatmul.mubr.f32.gmra.mxu0 %v790
  %v996 = vpop.f32.mrf.mxu0
  %v997 = vadd.f32 %v778, %v996
  %v998 = vpop.f32.mrf.mxu0
  %999 = vmatprep.mubr.f32.mxu0 0.0
  %1000 = vmatmul.mubr.f32.gmra.mxu0 %v793
  %v1001 = vpop.f32.mrf.mxu0
  %v1002 = vadd.f32 %v778, %v1001
  %v1003 = vpop.f32.mrf.mxu0
  %1004 = vmatprep.mubr.f32.mxu0 0.0
  %1005 = vmatmul.mubr.f32.gmra.mxu0 %v796
  %v1006 = vpop.f32.mrf.mxu0
  %v1007 = vadd.f32 %v778, %v1006
  %v1008 = vpop.f32.mrf.mxu0
  %1009 = vmatprep.mubr.f32.mxu0 0.0
  %1010 = vmatmul.mubr.f32.gmra.mxu0 %v799
  %v1011 = vpop.f32.mrf.mxu0
  %v1012 = vadd.f32 %v778, %v1011
  %v1013 = vpop.f32.mrf.mxu0
  %1014 = vmatprep.mubr.f32.mxu0 0.0
  %1015 = vmatmul.mubr.f32.gmra.mxu0 %v802
  %v1016 = vpop.f32.mrf.mxu0
  %v1017 = vadd.f32 %v778, %v1016
  %v1018 = vpop.f32.mrf.mxu0
  %1019 = vmatprep.mubr.f32.mxu0 0.0
  %1020 = vmatmul.mubr.f32.gmra.mxu0 %v805
  %v1021 = vpop.f32.mrf.mxu0
  %v1022 = vadd.f32 %v778, %v1021
  %v1023 = vpop.f32.mrf.mxu0
  %1024 = vdwg.mxu0
  %1025 = vst [vmem:[#allocation2] sm:$0xff] %v874
  %1026 = vst [vmem:[#allocation2 + $0x8] sm:$0xff] %v876
  %1027 = vst [vmem:[#allocation2 + $0x10] sm:$0xff] %v987
  %1028 = vst [vmem:[#allocation2 + $0x18] sm:$0xff] %v880
  %1029 = vst [vmem:[#allocation2 + $0x20] sm:$0xff] %v882
  %1030 = vst [vmem:[#allocation2 + $0x28] sm:$0xff] %v992
  %1031 = vst [vmem:[#allocation2 + $0x30] sm:$0xff] %v886
  %1032 = vst [vmem:[#allocation2 + $0x38] sm:$0xff] %v888
  %1033 = vst [vmem:[#allocation2 + $0x40] sm:$0xff] %v997
  %1034 = vst [vmem:[#allocation2 + $0x48] sm:$0xff] %v892
  %1035 = vst [vmem:[#allocation2 + $0x50] sm:$0xff] %v894
  %1036 = vst [vmem:[#allocation2 + $0x58] sm:$0xff] %v1002
  %1037 = vst [vmem:[#allocation2 + $0x60] sm:$0xff] %v898
  %1038 = vst [vmem:[#allocation2 + $0x68] sm:$0xff] %v900
  %1039 = vst [vmem:[#allocation2 + $0x70] sm:$0xff] %v1007
  %1040 = vst [vmem:[#allocation2 + $0x78] sm:$0xff] %v904
  %1041 = vst [vmem:[#allocation2 + $0x80] sm:$0xff] %v906
  %1042 = vst [vmem:[#allocation2 + $0x88] sm:$0xff] %v1012
  %1043 = vst [vmem:[#allocation2 + $0x90] sm:$0xff] %v910
  %1044 = vst [vmem:[#allocation2 + $0x98] sm:$0xff] %v912
  %1045 = vst [vmem:[#allocation2 + $0xa0] sm:$0xff] %v1017
  %1046 = vst [vmem:[#allocation2 + $0xa8] sm:$0xff] %v916
  %1047 = vst [vmem:[#allocation2 + $0xb0] sm:$0xff] %v918
  %1048 = vst [vmem:[#allocation2 + $0xb8] sm:$0xff] %v1022
  %v1049 = vld [vmem:[%s9] sm:$0xff]
  %v1050 = vld [vmem:[%s9 + $0x8] sm:$0xff]
  %v1051 = vld [vmem:[%s9 + $0x10] sm:$0xff]
  %v1052 = vld [vmem:[%s9 + $0x18] sm:$0xff]
  %v1053 = vld [vmem:[%s9 + $0x20] sm:$0xff]
  %v1054 = vld [vmem:[%s9 + $0x28] sm:$0xff]
  %v1055 = vld [vmem:[%s9 + $0x30] sm:$0xff]
  %v1056 = vld [vmem:[%s9 + $0x38] sm:$0xff]
  %v1057 = vld [vmem:[%s9 + $0x40] sm:$0xff]
  %v1058 = vld [vmem:[%s9 + $0x48] sm:$0xff]
  %v1059 = vld [vmem:[%s9 + $0x50] sm:$0xff]
  %v1060 = vld [vmem:[%s9 + $0x58] sm:$0xff]
  %v1061 = vld [vmem:[%s9 + $0x60] sm:$0xff]
  %v1062 = vld [vmem:[%s9 + $0x68] sm:$0xff]
  %v1063 = vld [vmem:[%s9 + $0x70] sm:$0xff]
  %v1064 = vld [vmem:[%s9 + $0x78] sm:$0xff]
  %v1065 = vld [vmem:[%s9 + $0x80] sm:$0xff]
  %v1066 = vld [vmem:[%s9 + $0x88] sm:$0xff]
  %v1067 = vld [vmem:[%s9 + $0x90] sm:$0xff]
  %v1068 = vld [vmem:[%s9 + $0x98] sm:$0xff]
  %v1069 = vld [vmem:[%s9 + $0xa0] sm:$0xff]
  %v1070 = vld [vmem:[%s9 + $0xa8] sm:$0xff]
  %v1071 = vld [vmem:[%s9 + $0xb0] sm:$0xff]
  %v1072 = vld [vmem:[%s9 + $0xb8] sm:$0xff]
  %v1073 = vld [vmem:[%s9 + $0xc0] sm:$0xff]
  %v1074 = vld [vmem:[%s9 + $0xc8] sm:$0xff]
  %v1075 = vld [vmem:[%s9 + $0xd0] sm:$0xff]
  %v1076 = vld [vmem:[%s9 + $0xd8] sm:$0xff]
  %v1077 = vld [vmem:[%s9 + $0xe0] sm:$0xff]
  %v1078 = vld [vmem:[%s9 + $0xe8] sm:$0xff]
  %v1079 = vld [vmem:[%s9 + $0xf0] sm:$0xff]
  %v1080 = vld [vmem:[%s9 + $0xf8] sm:$0xff]
  %v1081 = vld [vmem:[%s9 + $0x100] sm:$0xff]
  %v1082 = vld [vmem:[%s9 + $0x108] sm:$0xff]
  %v1083 = vld [vmem:[%s9 + $0x110] sm:$0xff]
  %v1084 = vld [vmem:[%s9 + $0x118] sm:$0xff]
  %v1085 = vld [vmem:[%s8] sm:$0x1]
  %v1087 = vlaneseq
  %v1088 = vshrl.u32 %v1087, 7
  %v1089 = vsub.s32 0, %v1088
  %v1090 = vrot.slane %v1085, %v1089
  %v1092 = vsel %vm782, 0.0, 0
  %1094 = vmatprep.subr.mxu0 0.0
  %1095 = vmatpush1.msra.mxu0 0.0
  %1096 = vmatprep.subr.mxu0 0.0
  %1097 = vmatpush1.msra.mxu0 0.0
  %1098 = vmatprep.subr.mxu0 0.0
  %1099 = vmatpush1.msra.mxu0 0.0
  %1100 = vmatprep.subr.mxu0 0.0
  %1101 = vmatpush1.msra.mxu0 0.0
  %1102 = vmatprep.subr.mxu0 %v1083
  %1103 = vmatpush1.msra.mxu0 %v1082
  %1104 = vmatprep.subr.mxu0 %v1080
  %1105 = vmatpush1.msra.mxu0 %v1079
  %1106 = vmatprep.subr.mxu0 %v1077
  %1107 = vmatpush1.msra.mxu0 %v1076
  %1108 = vmatprep.subr.mxu0 %v1074
  %1109 = vmatpush1.msra.mxu0 %v1073
  %1110 = vmatprep.subr.mxu0 %v1071
  %1111 = vmatpush1.msra.mxu0 %v1070
  %1112 = vmatprep.subr.mxu0 %v1068
  %1113 = vmatpush1.msra.mxu0 %v1067
  %1114 = vmatprep.subr.mxu0 %v1065
  %1115 = vmatpush1.msra.mxu0 %v1064
  %1116 = vmatprep.subr.mxu0 %v1062
  %1117 = vmatpush1.msra.mxu0 %v1061
  %1118 = vmatprep.subr.mxu0 %v1059
  %1119 = vmatpush1.msra.mxu0 %v1058
  %1120 = vmatprep.subr.mxu0 %v1056
  %1121 = vmatpush1.msra.mxu0 %v1055
  %1122 = vmatprep.subr.mxu0 %v1053
  %1123 = vmatpush1.msra.mxu0 %v1052
  %1124 = vmatprep.subr.mxu0 %v1050
  %1125 = vmatpush1.msra.mxu0 %v1049
  %1126 = vmatprep.subr.mxu0 0.0
  %1127 = vmatpush2.msra.mxu0 0.0
  %1128 = vmatprep.subr.mxu0 0.0
  %1129 = vmatpush2.msra.mxu0 0.0
  %1130 = vmatprep.subr.mxu0 0.0
  %1131 = vmatpush2.msra.mxu0 0.0
  %1132 = vmatprep.subr.mxu0 0.0
  %1133 = vmatpush2.msra.mxu0 0.0
  %1134 = vmatprep.subr.mxu0 0.0
  %1135 = vmatpush2.msra.mxu0 0.0
  %1136 = vmatprep.subr.mxu0 0.0
  %1137 = vmatpush2.msra.mxu0 0.0
  %1138 = vmatprep.subr.mxu0 0.0
  %1139 = vmatpush2.msra.mxu0 0.0
  %1140 = vmatprep.subr.mxu0 0.0
  %1141 = vmatpush2.msra.mxu0 0.0
  %1142 = vmatprep.subr.mxu0 0.0
  %1143 = vmatpush2.msra.mxu0 0.0
  %1144 = vmatprep.subr.mxu0 0.0
  %1145 = vmatpush2.msra.mxu0 0.0
  %1146 = vmatprep.subr.mxu0 0.0
  %1147 = vmatpush2.msra.mxu0 0.0
  %1148 = vmatprep.subr.mxu0 0.0
  %1149 = vmatpush2.msra.mxu0 0.0
  %1150 = vmatprep.subr.mxu0 0.0
  %1151 = vmatpush2.msra.mxu0 0.0
  %1152 = vmatprep.subr.mxu0 0.0
  %1153 = vmatpush2.msra.mxu0 0.0
  %1154 = vmatprep.subr.mxu0 0.0
  %1155 = vmatpush2.msra.mxu0 0.0
  %1156 = vmatprep.subr.mxu0 0.0
  %1157 = vmatpush2.msra.mxu0 0.0
  %1158 = vmatprep.mubr.f32.mxu0 0.0
  %1159 = vmatmul.mubr.f32.gmra.mxu0 %v1092
  %v1160 = vpop.f32.mrf.mxu0
  %v1161 = vadd.f32 0.0, %v1160
  %v1162 = vpop.f32.mrf.mxu0
  %v1163 = vadd.f32 0.0, %v1162
  %1164 = vdwg.mxu0
  %1165 = vmatprep.subr.mxu0 0.0
  %1166 = vmatpush1.msra.mxu0 0.0
  %1167 = vmatprep.subr.mxu0 0.0
  %1168 = vmatpush1.msra.mxu0 0.0
  %1169 = vmatprep.subr.mxu0 0.0
  %1170 = vmatpush1.msra.mxu0 0.0
  %1171 = vmatprep.subr.mxu0 0.0
  %1172 = vmatpush1.msra.mxu0 0.0
  %1173 = vmatprep.subr.mxu0 0.0
  %1174 = vmatpush1.msra.mxu0 %v1084
  %1175 = vmatprep.subr.mxu0 0.0
  %1176 = vmatpush1.msra.mxu0 %v1081
  %1177 = vmatprep.subr.mxu0 0.0
  %1178 = vmatpush1.msra.mxu0 %v1078
  %1179 = vmatprep.subr.mxu0 0.0
  %1180 = vmatpush1.msra.mxu0 %v1075
  %1181 = vmatprep.subr.mxu0 0.0
  %1182 = vmatpush1.msra.mxu0 %v1072
  %1183 = vmatprep.subr.mxu0 0.0
  %1184 = vmatpush1.msra.mxu0 %v1069
  %1185 = vmatprep.subr.mxu0 0.0
  %1186 = vmatpush1.msra.mxu0 %v1066
  %1187 = vmatprep.subr.mxu0 0.0
  %1188 = vmatpush1.msra.mxu0 %v1063
  %1189 = vmatprep.subr.mxu0 0.0
  %1190 = vmatpush1.msra.mxu0 %v1060
  %1191 = vmatprep.subr.mxu0 0.0
  %1192 = vmatpush1.msra.mxu0 %v1057
  %1193 = vmatprep.subr.mxu0 0.0
  %1194 = vmatpush1.msra.mxu0 %v1054
  %1195 = vmatprep.subr.mxu0 0.0
  %1196 = vmatpush1.msra.mxu0 %v1051
  %1197 = vmatprep.subr.mxu0 0.0
  %1198 = vmatpush2.msra.mxu0 0.0
  %1199 = vmatprep.subr.mxu0 0.0
  %1200 = vmatpush2.msra.mxu0 0.0
  %1201 = vmatprep.subr.mxu0 0.0
  %1202 = vmatpush2.msra.mxu0 0.0
  %1203 = vmatprep.subr.mxu0 0.0
  %1204 = vmatpush2.msra.mxu0 0.0
  %1205 = vmatprep.subr.mxu0 0.0
  %1206 = vmatpush2.msra.mxu0 0.0
  %1207 = vmatprep.subr.mxu0 0.0
  %1208 = vmatpush2.msra.mxu0 0.0
  %1209 = vmatprep.subr.mxu0 0.0
  %1210 = vmatpush2.msra.mxu0 0.0
  %1211 = vmatprep.subr.mxu0 0.0
  %1212 = vmatpush2.msra.mxu0 0.0
  %1213 = vmatprep.subr.mxu0 0.0
  %1214 = vmatpush2.msra.mxu0 0.0
  %1215 = vmatprep.subr.mxu0 0.0
  %1216 = vmatpush2.msra.mxu0 0.0
  %1217 = vmatprep.subr.mxu0 0.0
  %1218 = vmatpush2.msra.mxu0 0.0
  %1219 = vmatprep.subr.mxu0 0.0
  %1220 = vmatpush2.msra.mxu0 0.0
  %1221 = vmatprep.subr.mxu0 0.0
  %1222 = vmatpush2.msra.mxu0 0.0
  %1223 = vmatprep.subr.mxu0 0.0
  %1224 = vmatpush2.msra.mxu0 0.0
  %1225 = vmatprep.subr.mxu0 0.0
  %1226 = vmatpush2.msra.mxu0 0.0
  %1227 = vmatprep.subr.mxu0 0.0
  %1228 = vmatpush2.msra.mxu0 0.0
  %1229 = vmatprep.mubr.f32.mxu0 0.0
  %1230 = vmatmul.mubr.f32.gmra.mxu0 %v1092
  %v1231 = vpop.f32.mrf.mxu0
  %v1232 = vadd.f32 0.0, %v1231
  %v1233 = vpop.f32.mrf.mxu0
  %1234 = vdwg.mxu0
  %v1235 = vld [vmem:[#allocation2] sm:$0xff]
  %v1236 = vld [vmem:[#allocation2 + $0x8] sm:$0xff]
  %v1237 = vld [vmem:[#allocation2 + $0x10] sm:$0xff]
  %v1238 = vadd.f32 %v1235, %v1161
  %v1239 = vxor.u32 %v1238, 2147483648
  %v1240 = vmul.f32 %v1239, 1.442695
  %v1241 = vpow.pop %v1240
  %v1242 = vadd.f32 %v1241, 1.0
  %v1243 = vrcp.pop %v1242
  %v1244 = vmul.f32 1.0, %v1243
  %1245 = vrot.lane.b32.xlu0 %v1090, 64
  %v1246 = vpop.permute.xlu0 %1245
  %v1248 = vadd.f32 %v1161, %v1246
  %1250 = vrot.lane.b32.xlu0 %v1248, 64
  %v1251 = vpop.permute.xlu0 %1250
  %v1253 = vmul.f32 %v1244, %v1251
  %1255 = vrot.lane.b32.xlu0 %v1253, 64
  %v1256 = vpop.permute.xlu0 %1255
  %v1258 = vadd.f32 %v1235, %v1256
  %v1259 = vtanh.pop %v1258
  %v1260 = vsub.f32 1.0, %v1244
  %1262 = vrot.lane.b32.xlu0 %v1259, 96
  %v1263 = vpop.permute.xlu0 %1262
  %v1265 = vmul.f32 %v1260, %v1263
  %v1266 = vmul.f32 %v1244, 0.0
  %v1267 = vadd.f32 %v1265, %v1266
  %v1268 = vadd.f32 %v1236, %v1163
  %v1269 = vadd.f32 %v1237, %v1232
  %v1270 = vxor.u32 %v1268, 2147483648
  %v1271 = vxor.u32 %v1269, 2147483648
  %v1272 = vmul.f32 %v1270, 1.442695
  %v1273 = vpow.pop %v1272
  %v1274 = vmul.f32 %v1271, 1.442695
  %v1275 = vpow.pop %v1274
  %v1276 = vadd.f32 %v1273, 1.0
  %v1277 = vadd.f32 %v1275, 1.0
  %v1278 = vrcp.pop %v1276
  %v1279 = vmul.f32 1.0, %v1278
  %v1280 = vrcp.pop %v1277
  %v1281 = vmul.f32 1.0, %v1280
  %v1282 = vtanh.pop %v1269
  %v1283 = vmul.f32 %v1279, 0.0
  %1285 = vrot.lane.b32.xlu0 %v1282, 64
  %v1286 = vpop.permute.xlu0 %1285
  %v1288 = vmul.f32 %v1279, %v1286
  %1290 = vrot.lane.b32.xlu0 %v1288, 64
  %v1291 = vpop.permute.xlu0 %1290
  %v1293 = vadd.f32 %v1283, %v1291
  %v1294 = vtanh.pop %v1293
  %1296 = vrot.lane.b32.xlu0 %v1294, 64
  %v1297 = vpop.permute.xlu0 %1296
  %v1299 = vmul.f32 %v1281, %v1297
  %1301 = vrot.lane.b32.xlu0 %v1267, 96
  %v1302 = vpop.permute.xlu0 %1301
  %1305 = vrot.lane.b32.xlu0 %v1299, 32
  %v1306 = vpop.permute.xlu0 %1305
  %vm1308 = vcmask 261120
  %v1309 = vsel %vm1308, %v1302, %v1306
  %v1311 = vsel %vm782, %v1309, 0
  %1313 = vmatprep.subr.mxu0 0.0
  %1314 = vmatpush1.msra.mxu0 0.0
  %1315 = vmatprep.subr.mxu0 0.0
  %1316 = vmatpush1.msra.mxu0 0.0
  %1317 = vmatprep.subr.mxu0 0.0
  %1318 = vmatpush1.msra.mxu0 0.0
  %1319 = vmatprep.subr.mxu0 0.0
  %1320 = vmatpush1.msra.mxu0 0.0
  %1321 = vmatprep.subr.mxu0 %v1083
  %1322 = vmatpush1.msra.mxu0 %v1082
  %1323 = vmatprep.subr.mxu0 %v1080
  %1324 = vmatpush1.msra.mxu0 %v1079
  %1325 = vmatprep.subr.mxu0 %v1077
  %1326 = vmatpush1.msra.mxu0 %v1076
  %1327 = vmatprep.subr.mxu0 %v1074
  %1328 = vmatpush1.msra.mxu0 %v1073
  %1329 = vmatprep.subr.mxu0 %v1071
  %1330 = vmatpush1.msra.mxu0 %v1070
  %1331 = vmatprep.subr.mxu0 %v1068
  %1332 = vmatpush1.msra.mxu0 %v1067
  %1333 = vmatprep.subr.mxu0 %v1065
  %1334 = vmatpush1.msra.mxu0 %v1064
  %1335 = vmatprep.subr.mxu0 %v1062
  %1336 = vmatpush1.msra.mxu0 %v1061
  %1337 = vmatprep.subr.mxu0 %v1059
  %1338 = vmatpush1.msra.mxu0 %v1058
  %1339 = vmatprep.subr.mxu0 %v1056
  %1340 = vmatpush1.msra.mxu0 %v1055
  %1341 = vmatprep.subr.mxu0 %v1053
  %1342 = vmatpush1.msra.mxu0 %v1052
  %1343 = vmatprep.subr.mxu0 %v1050
  %1344 = vmatpush1.msra.mxu0 %v1049
  %1345 = vmatprep.subr.mxu0 0.0
  %1346 = vmatpush2.msra.mxu0 0.0
  %1347 = vmatprep.subr.mxu0 0.0
  %1348 = vmatpush2.msra.mxu0 0.0
  %1349 = vmatprep.subr.mxu0 0.0
  %1350 = vmatpush2.msra.mxu0 0.0
  %1351 = vmatprep.subr.mxu0 0.0
  %1352 = vmatpush2.msra.mxu0 0.0
  %1353 = vmatprep.subr.mxu0 0.0
  %1354 = vmatpush2.msra.mxu0 0.0
  %1355 = vmatprep.subr.mxu0 0.0
  %1356 = vmatpush2.msra.mxu0 0.0
  %1357 = vmatprep.subr.mxu0 0.0
  %1358 = vmatpush2.msra.mxu0 0.0
  %1359 = vmatprep.subr.mxu0 0.0
  %1360 = vmatpush2.msra.mxu0 0.0
  %1361 = vmatprep.subr.mxu0 0.0
  %1362 = vmatpush2.msra.mxu0 0.0
  %1363 = vmatprep.subr.mxu0 0.0
  %1364 = vmatpush2.msra.mxu0 0.0
  %1365 = vmatprep.subr.mxu0 0.0
  %1366 = vmatpush2.msra.mxu0 0.0
  %1367 = vmatprep.subr.mxu0 0.0
  %1368 = vmatpush2.msra.mxu0 0.0
  %1369 = vmatprep.subr.mxu0 0.0
  %1370 = vmatpush2.msra.mxu0 0.0
  %1371 = vmatprep.subr.mxu0 0.0
  %1372 = vmatpush2.msra.mxu0 0.0
  %1373 = vmatprep.subr.mxu0 0.0
  %1374 = vmatpush2.msra.mxu0 0.0
  %1375 = vmatprep.subr.mxu0 0.0
  %1376 = vmatpush2.msra.mxu0 0.0
  %1377 = vmatprep.mubr.f32.mxu0 0.0
  %1378 = vmatmul.mubr.f32.gmra.mxu0 %v1311
  %v1379 = vpop.f32.mrf.mxu0
  %v1380 = vadd.f32 0.0, %v1379
  %v1381 = vpop.f32.mrf.mxu0
  %v1382 = vadd.f32 0.0, %v1381
  %1383 = vdwg.mxu0
  %1384 = vmatprep.subr.mxu0 0.0
  %1385 = vmatpush1.msra.mxu0 0.0
  %1386 = vmatprep.subr.mxu0 0.0
  %1387 = vmatpush1.msra.mxu0 0.0
  %1388 = vmatprep.subr.mxu0 0.0
  %1389 = vmatpush1.msra.mxu0 0.0
  %1390 = vmatprep.subr.mxu0 0.0
  %1391 = vmatpush1.msra.mxu0 0.0
  %1392 = vmatprep.subr.mxu0 0.0
  %1393 = vmatpush1.msra.mxu0 %v1084
  %1394 = vmatprep.subr.mxu0 0.0
  %1395 = vmatpush1.msra.mxu0 %v1081
  %1396 = vmatprep.subr.mxu0 0.0
  %1397 = vmatpush1.msra.mxu0 %v1078
  %1398 = vmatprep.subr.mxu0 0.0
  %1399 = vmatpush1.msra.mxu0 %v1075
  %1400 = vmatprep.subr.mxu0 0.0
  %1401 = vmatpush1.msra.mxu0 %v1072
  %1402 = vmatprep.subr.mxu0 0.0
  %1403 = vmatpush1.msra.mxu0 %v1069
  %1404 = vmatprep.subr.mxu0 0.0
  %1405 = vmatpush1.msra.mxu0 %v1066
  %1406 = vmatprep.subr.mxu0 0.0
  %1407 = vmatpush1.msra.mxu0 %v1063
  %1408 = vmatprep.subr.mxu0 0.0
  %1409 = vmatpush1.msra.mxu0 %v1060
  %1410 = vmatprep.subr.mxu0 0.0
  %1411 = vmatpush1.msra.mxu0 %v1057
  %1412 = vmatprep.subr.mxu0 0.0
  %1413 = vmatpush1.msra.mxu0 %v1054
  %1414 = vmatprep.subr.mxu0 0.0
  %1415 = vmatpush1.msra.mxu0 %v1051
  %1416 = vmatprep.subr.mxu0 0.0
  %1417 = vmatpush2.msra.mxu0 0.0
  %1418 = vmatprep.subr.mxu0 0.0
  %1419 = vmatpush2.msra.mxu0 0.0
  %1420 = vmatprep.subr.mxu0 0.0
  %1421 = vmatpush2.msra.mxu0 0.0
  %1422 = vmatprep.subr.mxu0 0.0
  %1423 = vmatpush2.msra.mxu0 0.0
  %1424 = vmatprep.subr.mxu0 0.0
  %1425 = vmatpush2.msra.mxu0 0.0
  %1426 = vmatprep.subr.mxu0 0.0
  %1427 = vmatpush2.msra.mxu0 0.0
  %1428 = vmatprep.subr.mxu0 0.0
  %1429 = vmatpush2.msra.mxu0 0.0
  %1430 = vmatprep.subr.mxu0 0.0
  %1431 = vmatpush2.msra.mxu0 0.0
  %1432 = vmatprep.subr.mxu0 0.0
  %1433 = vmatpush2.msra.mxu0 0.0
  %1434 = vmatprep.subr.mxu0 0.0
  %1435 = vmatpush2.msra.mxu0 0.0
  %1436 = vmatprep.subr.mxu0 0.0
  %1437 = vmatpush2.msra.mxu0 0.0
  %1438 = vmatprep.subr.mxu0 0.0
  %1439 = vmatpush2.msra.mxu0 0.0
  %1440 = vmatprep.subr.mxu0 0.0
  %1441 = vmatpush2.msra.mxu0 0.0
  %1442 = vmatprep.subr.mxu0 0.0
  %1443 = vmatpush2.msra.mxu0 0.0
  %1444 = vmatprep.subr.mxu0 0.0
  %1445 = vmatpush2.msra.mxu0 0.0
  %1446 = vmatprep.subr.mxu0 0.0
  %1447 = vmatpush2.msra.mxu0 0.0
  %1448 = vmatprep.mubr.f32.mxu0 0.0
  %1449 = vmatmul.mubr.f32.gmra.mxu0 %v1311
  %v1450 = vpop.f32.mrf.mxu0
  %v1451 = vadd.f32 0.0, %v1450
  %v1452 = vpop.f32.mrf.mxu0
  %1453 = vdwg.mxu0
  %v1454 = vld [vmem:[#allocation2 + $0x18] sm:$0xff]
  %v1455 = vld [vmem:[#allocation2 + $0x20] sm:$0xff]
  %v1456 = vld [vmem:[#allocation2 + $0x28] sm:$0xff]
  %v1457 = vadd.f32 %v1454, %v1380
  %v1458 = vxor.u32 %v1457, 2147483648
  %v1459 = vmul.f32 %v1458, 1.442695
  %v1460 = vpow.pop %v1459
  %v1461 = vadd.f32 %v1460, 1.0
  %v1462 = vrcp.pop %v1461
  %v1463 = vmul.f32 1.0, %v1462
  %v1464 = vadd.f32 %v1380, %v1246
  %1466 = vrot.lane.b32.xlu0 %v1464, 64
  %v1467 = vpop.permute.xlu0 %1466
  %v1469 = vmul.f32 %v1463, %v1467
  %1471 = vrot.lane.b32.xlu0 %v1469, 64
  %v1472 = vpop.permute.xlu0 %1471
  %v1474 = vadd.f32 %v1454, %v1472
  %v1475 = vtanh.pop %v1474
  %v1476 = vsub.f32 1.0, %v1463
  %1478 = vrot.lane.b32.xlu0 %v1475, 96
  %v1479 = vpop.permute.xlu0 %1478
  %v1481 = vmul.f32 %v1476, %v1479
  %v1482 = vmul.f32 %v1463, %v1267
  %v1483 = vadd.f32 %v1481, %v1482
  %v1484 = vadd.f32 %v1455, %v1382
  %v1485 = vadd.f32 %v1456, %v1451
  %v1486 = vxor.u32 %v1484, 2147483648
  %v1487 = vxor.u32 %v1485, 2147483648
  %v1488 = vmul.f32 %v1486, 1.442695
  %v1489 = vpow.pop %v1488
  %v1490 = vmul.f32 %v1487, 1.442695
  %v1491 = vpow.pop %v1490
  %v1492 = vadd.f32 %v1489, 1.0
  %v1493 = vadd.f32 %v1491, 1.0
  %v1494 = vrcp.pop %v1492
  %v1495 = vmul.f32 1.0, %v1494
  %v1496 = vrcp.pop %v1493
  %v1497 = vmul.f32 1.0, %v1496
  %v1498 = vtanh.pop %v1485
  %v1499 = vmul.f32 %v1495, %v1293
  %1501 = vrot.lane.b32.xlu0 %v1498, 64
  %v1502 = vpop.permute.xlu0 %1501
  %v1504 = vmul.f32 %v1495, %v1502
  %1506 = vrot.lane.b32.xlu0 %v1504, 64
  %v1507 = vpop.permute.xlu0 %1506
  %v1509 = vadd.f32 %v1499, %v1507
  %v1510 = vtanh.pop %v1509
  %1512 = vrot.lane.b32.xlu0 %v1510, 64
  %v1513 = vpop.permute.xlu0 %1512
  %v1515 = vmul.f32 %v1497, %v1513
  %1517 = vrot.lane.b32.xlu0 %v1483, 96
  %v1518 = vpop.permute.xlu0 %1517
  %1521 = vrot.lane.b32.xlu0 %v1515, 32
  %v1522 = vpop.permute.xlu0 %1521
  %v1524 = vsel %vm1308, %v1518, %v1522
  %v1526 = vsel %vm782, %v1524, 0
  %1528 = vmatprep.subr.mxu0 0.0
  %1529 = vmatpush1.msra.mxu0 0.0
  %1530 = vmatprep.subr.mxu0 0.0
  %1531 = vmatpush1.msra.mxu0 0.0
  %1532 = vmatprep.subr.mxu0 0.0
  %1533 = vmatpush1.msra.mxu0 0.0
  %1534 = vmatprep.subr.mxu0 0.0
  %1535 = vmatpush1.msra.mxu0 0.0
  %1536 = vmatprep.subr.mxu0 %v1083
  %1537 = vmatpush1.msra.mxu0 %v1082
  %1538 = vmatprep.subr.mxu0 %v1080
  %1539 = vmatpush1.msra.mxu0 %v1079
  %1540 = vmatprep.subr.mxu0 %v1077
  %1541 = vmatpush1.msra.mxu0 %v1076
  %1542 = vmatprep.subr.mxu0 %v1074
  %1543 = vmatpush1.msra.mxu0 %v1073
  %1544 = vmatprep.subr.mxu0 %v1071
  %1545 = vmatpush1.msra.mxu0 %v1070
  %1546 = vmatprep.subr.mxu0 %v1068
  %1547 = vmatpush1.msra.mxu0 %v1067
  %1548 = vmatprep.subr.mxu0 %v1065
  %1549 = vmatpush1.msra.mxu0 %v1064
  %1550 = vmatprep.subr.mxu0 %v1062
  %1551 = vmatpush1.msra.mxu0 %v1061
  %1552 = vmatprep.subr.mxu0 %v1059
  %1553 = vmatpush1.msra.mxu0 %v1058
  %1554 = vmatprep.subr.mxu0 %v1056
  %1555 = vmatpush1.msra.mxu0 %v1055
  %1556 = vmatprep.subr.mxu0 %v1053
  %1557 = vmatpush1.msra.mxu0 %v1052
  %1558 = vmatprep.subr.mxu0 %v1050
  %1559 = vmatpush1.msra.mxu0 %v1049
  %1560 = vmatprep.subr.mxu0 0.0
  %1561 = vmatpush2.msra.mxu0 0.0
  %1562 = vmatprep.subr.mxu0 0.0
  %1563 = vmatpush2.msra.mxu0 0.0
  %1564 = vmatprep.subr.mxu0 0.0
  %1565 = vmatpush2.msra.mxu0 0.0
  %1566 = vmatprep.subr.mxu0 0.0
  %1567 = vmatpush2.msra.mxu0 0.0
  %1568 = vmatprep.subr.mxu0 0.0
  %1569 = vmatpush2.msra.mxu0 0.0
  %1570 = vmatprep.subr.mxu0 0.0
  %1571 = vmatpush2.msra.mxu0 0.0
  %1572 = vmatprep.subr.mxu0 0.0
  %1573 = vmatpush2.msra.mxu0 0.0
  %1574 = vmatprep.subr.mxu0 0.0
  %1575 = vmatpush2.msra.mxu0 0.0
  %1576 = vmatprep.subr.mxu0 0.0
  %1577 = vmatpush2.msra.mxu0 0.0
  %1578 = vmatprep.subr.mxu0 0.0
  %1579 = vmatpush2.msra.mxu0 0.0
  %1580 = vmatprep.subr.mxu0 0.0
  %1581 = vmatpush2.msra.mxu0 0.0
  %1582 = vmatprep.subr.mxu0 0.0
  %1583 = vmatpush2.msra.mxu0 0.0
  %1584 = vmatprep.subr.mxu0 0.0
  %1585 = vmatpush2.msra.mxu0 0.0
  %1586 = vmatprep.subr.mxu0 0.0
  %1587 = vmatpush2.msra.mxu0 0.0
  %1588 = vmatprep.subr.mxu0 0.0
  %1589 = vmatpush2.msra.mxu0 0.0
  %1590 = vmatprep.subr.mxu0 0.0
  %1591 = vmatpush2.msra.mxu0 0.0
  %1592 = vmatprep.mubr.f32.mxu0 0.0
  %1593 = vmatmul.mubr.f32.gmra.mxu0 %v1526
  %v1594 = vpop.f32.mrf.mxu0
  %v1595 = vadd.f32 0.0, %v1594
  %v1596 = vpop.f32.mrf.mxu0
  %v1597 = vadd.f32 0.0, %v1596
  %1598 = vdwg.mxu0
  %1599 = vmatprep.subr.mxu0 0.0
  %1600 = vmatpush1.msra.mxu0 0.0
  %1601 = vmatprep.subr.mxu0 0.0
  %1602 = vmatpush1.msra.mxu0 0.0
  %1603 = vmatprep.subr.mxu0 0.0
  %1604 = vmatpush1.msra.mxu0 0.0
  %1605 = vmatprep.subr.mxu0 0.0
  %1606 = vmatpush1.msra.mxu0 0.0
  %1607 = vmatprep.subr.mxu0 0.0
  %1608 = vmatpush1.msra.mxu0 %v1084
  %1609 = vmatprep.subr.mxu0 0.0
  %1610 = vmatpush1.msra.mxu0 %v1081
  %1611 = vmatprep.subr.mxu0 0.0
  %1612 = vmatpush1.msra.mxu0 %v1078
  %1613 = vmatprep.subr.mxu0 0.0
  %1614 = vmatpush1.msra.mxu0 %v1075
  %1615 = vmatprep.subr.mxu0 0.0
  %1616 = vmatpush1.msra.mxu0 %v1072
  %1617 = vmatprep.subr.mxu0 0.0
  %1618 = vmatpush1.msra.mxu0 %v1069
  %1619 = vmatprep.subr.mxu0 0.0
  %1620 = vmatpush1.msra.mxu0 %v1066
  %1621 = vmatprep.subr.mxu0 0.0
  %1622 = vmatpush1.msra.mxu0 %v1063
  %1623 = vmatprep.subr.mxu0 0.0
  %1624 = vmatpush1.msra.mxu0 %v1060
  %1625 = vmatprep.subr.mxu0 0.0
  %1626 = vmatpush1.msra.mxu0 %v1057
  %1627 = vmatprep.subr.mxu0 0.0
  %1628 = vmatpush1.msra.mxu0 %v1054
  %1629 = vmatprep.subr.mxu0 0.0
  %1630 = vmatpush1.msra.mxu0 %v1051
  %1631 = vmatprep.subr.mxu0 0.0
  %1632 = vmatpush2.msra.mxu0 0.0
  %1633 = vmatprep.subr.mxu0 0.0
  %1634 = vmatpush2.msra.mxu0 0.0
  %1635 = vmatprep.subr.mxu0 0.0
  %1636 = vmatpush2.msra.mxu0 0.0
  %1637 = vmatprep.subr.mxu0 0.0
  %1638 = vmatpush2.msra.mxu0 0.0
  %1639 = vmatprep.subr.mxu0 0.0
  %1640 = vmatpush2.msra.mxu0 0.0
  %1641 = vmatprep.subr.mxu0 0.0
  %1642 = vmatpush2.msra.mxu0 0.0
  %1643 = vmatprep.subr.mxu0 0.0
  %1644 = vmatpush2.msra.mxu0 0.0
  %1645 = vmatprep.subr.mxu0 0.0
  %1646 = vmatpush2.msra.mxu0 0.0
  %1647 = vmatprep.subr.mxu0 0.0
  %1648 = vmatpush2.msra.mxu0 0.0
  %1649 = vmatprep.subr.mxu0 0.0
  %1650 = vmatpush2.msra.mxu0 0.0
  %1651 = vmatprep.subr.mxu0 0.0
  %1652 = vmatpush2.msra.mxu0 0.0
  %1653 = vmatprep.subr.mxu0 0.0
  %1654 = vmatpush2.msra.mxu0 0.0
  %1655 = vmatprep.subr.mxu0 0.0
  %1656 = vmatpush2.msra.mxu0 0.0
  %1657 = vmatprep.subr.mxu0 0.0
  %1658 = vmatpush2.msra.mxu0 0.0
  %1659 = vmatprep.subr.mxu0 0.0
  %1660 = vmatpush2.msra.mxu0 0.0
  %1661 = vmatprep.subr.mxu0 0.0
  %1662 = vmatpush2.msra.mxu0 0.0
  %1663 = vmatprep.mubr.f32.mxu0 0.0
  %1664 = vmatmul.mubr.f32.gmra.mxu0 %v1526
  %v1665 = vpop.f32.mrf.mxu0
  %v1666 = vadd.f32 0.0, %v1665
  %v1667 = vpop.f32.mrf.mxu0
  %1668 = vdwg.mxu0
  %v1669 = vld [vmem:[#allocation2 + $0x30] sm:$0xff]
  %v1670 = vld [vmem:[#allocation2 + $0x38] sm:$0xff]
  %v1671 = vld [vmem:[#allocation2 + $0x40] sm:$0xff]
  %v1672 = vadd.f32 %v1669, %v1595
  %v1673 = vxor.u32 %v1672, 2147483648
  %v1674 = vmul.f32 %v1673, 1.442695
  %v1675 = vpow.pop %v1674
  %v1676 = vadd.f32 %v1675, 1.0
  %v1677 = vrcp.pop %v1676
  %v1678 = vmul.f32 1.0, %v1677
  %v1679 = vadd.f32 %v1595, %v1246
  %1681 = vrot.lane.b32.xlu0 %v1679, 64
  %v1682 = vpop.permute.xlu0 %1681
  %v1684 = vmul.f32 %v1678, %v1682
  %1686 = vrot.lane.b32.xlu0 %v1684, 64
  %v1687 = vpop.permute.xlu0 %1686
  %v1689 = vadd.f32 %v1669, %v1687
  %v1690 = vtanh.pop %v1689
  %v1691 = vsub.f32 1.0, %v1678
  %1693 = vrot.lane.b32.xlu0 %v1690, 96
  %v1694 = vpop.permute.xlu0 %1693
  %v1696 = vmul.f32 %v1691, %v1694
  %v1697 = vmul.f32 %v1678, %v1483
  %v1698 = vadd.f32 %v1696, %v1697
  %v1699 = vadd.f32 %v1670, %v1597
  %v1700 = vadd.f32 %v1671, %v1666
  %v1701 = vxor.u32 %v1699, 2147483648
  %v1702 = vxor.u32 %v1700, 2147483648
  %v1703 = vmul.f32 %v1701, 1.442695
  %v1704 = vpow.pop %v1703
  %v1705 = vmul.f32 %v1702, 1.442695
  %v1706 = vpow.pop %v1705
  %v1707 = vadd.f32 %v1704, 1.0
  %v1708 = vadd.f32 %v1706, 1.0
  %v1709 = vrcp.pop %v1707
  %v1710 = vmul.f32 1.0, %v1709
  %v1711 = vrcp.pop %v1708
  %v1712 = vmul.f32 1.0, %v1711
  %v1713 = vtanh.pop %v1700
  %v1714 = vmul.f32 %v1710, %v1509
  %1716 = vrot.lane.b32.xlu0 %v1713, 64
  %v1717 = vpop.permute.xlu0 %1716
  %v1719 = vmul.f32 %v1710, %v1717
  %1721 = vrot.lane.b32.xlu0 %v1719, 64
  %v1722 = vpop.permute.xlu0 %1721
  %v1724 = vadd.f32 %v1714, %v1722
  %v1725 = vtanh.pop %v1724
  %1727 = vrot.lane.b32.xlu0 %v1725, 64
  %v1728 = vpop.permute.xlu0 %1727
  %v1730 = vmul.f32 %v1712, %v1728
  %1732 = vrot.lane.b32.xlu0 %v1698, 96
  %v1733 = vpop.permute.xlu0 %1732
  %1736 = vrot.lane.b32.xlu0 %v1730, 32
  %v1737 = vpop.permute.xlu0 %1736
  %v1739 = vsel %vm1308, %v1733, %v1737
  %v1741 = vsel %vm782, %v1739, 0
  %1743 = vmatprep.subr.mxu0 0.0
  %1744 = vmatpush1.msra.mxu0 0.0
  %1745 = vmatprep.subr.mxu0 0.0
  %1746 = vmatpush1.msra.mxu0 0.0
  %1747 = vmatprep.subr.mxu0 0.0
  %1748 = vmatpush1.msra.mxu0 0.0
  %1749 = vmatprep.subr.mxu0 0.0
  %1750 = vmatpush1.msra.mxu0 0.0
  %1751 = vmatprep.subr.mxu0 %v1083
  %1752 = vmatpush1.msra.mxu0 %v1082
  %1753 = vmatprep.subr.mxu0 %v1080
  %1754 = vmatpush1.msra.mxu0 %v1079
  %1755 = vmatprep.subr.mxu0 %v1077
  %1756 = vmatpush1.msra.mxu0 %v1076
  %1757 = vmatprep.subr.mxu0 %v1074
  %1758 = vmatpush1.msra.mxu0 %v1073
  %1759 = vmatprep.subr.mxu0 %v1071
  %1760 = vmatpush1.msra.mxu0 %v1070
  %1761 = vmatprep.subr.mxu0 %v1068
  %1762 = vmatpush1.msra.mxu0 %v1067
  %1763 = vmatprep.subr.mxu0 %v1065
  %1764 = vmatpush1.msra.mxu0 %v1064
  %1765 = vmatprep.subr.mxu0 %v1062
  %1766 = vmatpush1.msra.mxu0 %v1061
  %1767 = vmatprep.subr.mxu0 %v1059
  %1768 = vmatpush1.msra.mxu0 %v1058
  %1769 = vmatprep.subr.mxu0 %v1056
  %1770 = vmatpush1.msra.mxu0 %v1055
  %1771 = vmatprep.subr.mxu0 %v1053
  %1772 = vmatpush1.msra.mxu0 %v1052
  %1773 = vmatprep.subr.mxu0 %v1050
  %1774 = vmatpush1.msra.mxu0 %v1049
  %1775 = vmatprep.subr.mxu0 0.0
  %1776 = vmatpush2.msra.mxu0 0.0
  %1777 = vmatprep.subr.mxu0 0.0
  %1778 = vmatpush2.msra.mxu0 0.0
  %1779 = vmatprep.subr.mxu0 0.0
  %1780 = vmatpush2.msra.mxu0 0.0
  %1781 = vmatprep.subr.mxu0 0.0
  %1782 = vmatpush2.msra.mxu0 0.0
  %1783 = vmatprep.subr.mxu0 0.0
  %1784 = vmatpush2.msra.mxu0 0.0
  %1785 = vmatprep.subr.mxu0 0.0
  %1786 = vmatpush2.msra.mxu0 0.0
  %1787 = vmatprep.subr.mxu0 0.0
  %1788 = vmatpush2.msra.mxu0 0.0
  %1789 = vmatprep.subr.mxu0 0.0
  %1790 = vmatpush2.msra.mxu0 0.0
  %1791 = vmatprep.subr.mxu0 0.0
  %1792 = vmatpush2.msra.mxu0 0.0
  %1793 = vmatprep.subr.mxu0 0.0
  %1794 = vmatpush2.msra.mxu0 0.0
  %1795 = vmatprep.subr.mxu0 0.0
  %1796 = vmatpush2.msra.mxu0 0.0
  %1797 = vmatprep.subr.mxu0 0.0
  %1798 = vmatpush2.msra.mxu0 0.0
  %1799 = vmatprep.subr.mxu0 0.0
  %1800 = vmatpush2.msra.mxu0 0.0
  %1801 = vmatprep.subr.mxu0 0.0
  %1802 = vmatpush2.msra.mxu0 0.0
  %1803 = vmatprep.subr.mxu0 0.0
  %1804 = vmatpush2.msra.mxu0 0.0
  %1805 = vmatprep.subr.mxu0 0.0
  %1806 = vmatpush2.msra.mxu0 0.0
  %1807 = vmatprep.mubr.f32.mxu0 0.0
  %1808 = vmatmul.mubr.f32.gmra.mxu0 %v1741
  %v1809 = vpop.f32.mrf.mxu0
  %v1810 = vadd.f32 0.0, %v1809
  %v1811 = vpop.f32.mrf.mxu0
  %v1812 = vadd.f32 0.0, %v1811
  %1813 = vdwg.mxu0
  %1814 = vmatprep.subr.mxu0 0.0
  %1815 = vmatpush1.msra.mxu0 0.0
  %1816 = vmatprep.subr.mxu0 0.0
  %1817 = vmatpush1.msra.mxu0 0.0
  %1818 = vmatprep.subr.mxu0 0.0
  %1819 = vmatpush1.msra.mxu0 0.0
  %1820 = vmatprep.subr.mxu0 0.0
  %1821 = vmatpush1.msra.mxu0 0.0
  %1822 = vmatprep.subr.mxu0 0.0
  %1823 = vmatpush1.msra.mxu0 %v1084
  %1824 = vmatprep.subr.mxu0 0.0
  %1825 = vmatpush1.msra.mxu0 %v1081
  %1826 = vmatprep.subr.mxu0 0.0
  %1827 = vmatpush1.msra.mxu0 %v1078
  %1828 = vmatprep.subr.mxu0 0.0
  %1829 = vmatpush1.msra.mxu0 %v1075
  %1830 = vmatprep.subr.mxu0 0.0
  %1831 = vmatpush1.msra.mxu0 %v1072
  %1832 = vmatprep.subr.mxu0 0.0
  %1833 = vmatpush1.msra.mxu0 %v1069
  %1834 = vmatprep.subr.mxu0 0.0
  %1835 = vmatpush1.msra.mxu0 %v1066
  %1836 = vmatprep.subr.mxu0 0.0
  %1837 = vmatpush1.msra.mxu0 %v1063
  %1838 = vmatprep.subr.mxu0 0.0
  %1839 = vmatpush1.msra.mxu0 %v1060
  %1840 = vmatprep.subr.mxu0 0.0
  %1841 = vmatpush1.msra.mxu0 %v1057
  %1842 = vmatprep.subr.mxu0 0.0
  %1843 = vmatpush1.msra.mxu0 %v1054
  %1844 = vmatprep.subr.mxu0 0.0
  %1845 = vmatpush1.msra.mxu0 %v1051
  %1846 = vmatprep.subr.mxu0 0.0
  %1847 = vmatpush2.msra.mxu0 0.0
  %1848 = vmatprep.subr.mxu0 0.0
  %1849 = vmatpush2.msra.mxu0 0.0
  %1850 = vmatprep.subr.mxu0 0.0
  %1851 = vmatpush2.msra.mxu0 0.0
  %1852 = vmatprep.subr.mxu0 0.0
  %1853 = vmatpush2.msra.mxu0 0.0
  %1854 = vmatprep.subr.mxu0 0.0
  %1855 = vmatpush2.msra.mxu0 0.0
  %1856 = vmatprep.subr.mxu0 0.0
  %1857 = vmatpush2.msra.mxu0 0.0
  %1858 = vmatprep.subr.mxu0 0.0
  %1859 = vmatpush2.msra.mxu0 0.0
  %1860 = vmatprep.subr.mxu0 0.0
  %1861 = vmatpush2.msra.mxu0 0.0
  %1862 = vmatprep.subr.mxu0 0.0
  %1863 = vmatpush2.msra.mxu0 0.0
  %1864 = vmatprep.subr.mxu0 0.0
  %1865 = vmatpush2.msra.mxu0 0.0
  %1866 = vmatprep.subr.mxu0 0.0
  %1867 = vmatpush2.msra.mxu0 0.0
  %1868 = vmatprep.subr.mxu0 0.0
  %1869 = vmatpush2.msra.mxu0 0.0
  %1870 = vmatprep.subr.mxu0 0.0
  %1871 = vmatpush2.msra.mxu0 0.0
  %1872 = vmatprep.subr.mxu0 0.0
  %1873 = vmatpush2.msra.mxu0 0.0
  %1874 = vmatprep.subr.mxu0 0.0
  %1875 = vmatpush2.msra.mxu0 0.0
  %1876 = vmatprep.subr.mxu0 0.0
  %1877 = vmatpush2.msra.mxu0 0.0
  %1878 = vmatprep.mubr.f32.mxu0 0.0
  %1879 = vmatmul.mubr.f32.gmra.mxu0 %v1741
  %v1880 = vpop.f32.mrf.mxu0
  %v1881 = vadd.f32 0.0, %v1880
  %v1882 = vpop.f32.mrf.mxu0
  %1883 = vdwg.mxu0
  %v1884 = vld [vmem:[#allocation2 + $0x48] sm:$0xff]
  %v1885 = vld [vmem:[#allocation2 + $0x50] sm:$0xff]
  %v1886 = vld [vmem:[#allocation2 + $0x58] sm:$0xff]
  %v1887 = vadd.f32 %v1884, %v1810
  %v1888 = vxor.u32 %v1887, 2147483648
  %v1889 = vmul.f32 %v1888, 1.442695
  %v1890 = vpow.pop %v1889
  %v1891 = vadd.f32 %v1890, 1.0
  %v1892 = vrcp.pop %v1891
  %v1893 = vmul.f32 1.0, %v1892
  %v1894 = vadd.f32 %v1810, %v1246
  %1896 = vrot.lane.b32.xlu0 %v1894, 64
  %v1897 = vpop.permute.xlu0 %1896
  %v1899 = vmul.f32 %v1893, %v1897
  %1901 = vrot.lane.b32.xlu0 %v1899, 64
  %v1902 = vpop.permute.xlu0 %1901
  %v1904 = vadd.f32 %v1884, %v1902
  %v1905 = vtanh.pop %v1904
  %v1906 = vsub.f32 1.0, %v1893
  %1908 = vrot.lane.b32.xlu0 %v1905, 96
  %v1909 = vpop.permute.xlu0 %1908
  %v1911 = vmul.f32 %v1906, %v1909
  %v1912 = vmul.f32 %v1893, %v1698
  %v1913 = vadd.f32 %v1911, %v1912
  %v1914 = vadd.f32 %v1885, %v1812
  %v1915 = vadd.f32 %v1886, %v1881
  %v1916 = vxor.u32 %v1914, 2147483648
  %v1917 = vxor.u32 %v1915, 2147483648
  %v1918 = vmul.f32 %v1916, 1.442695
  %v1919 = vpow.pop %v1918
  %v1920 = vmul.f32 %v1917, 1.442695
  %v1921 = vpow.pop %v1920
  %v1922 = vadd.f32 %v1919, 1.0
  %v1923 = vadd.f32 %v1921, 1.0
  %v1924 = vrcp.pop %v1922
  %v1925 = vmul.f32 1.0, %v1924
  %v1926 = vrcp.pop %v1923
  %v1927 = vmul.f32 1.0, %v1926
  %v1928 = vtanh.pop %v1915
  %v1929 = vmul.f32 %v1925, %v1724
  %1931 = vrot.lane.b32.xlu0 %v1928, 64
  %v1932 = vpop.permute.xlu0 %1931
  %v1934 = vmul.f32 %v1925, %v1932
  %1936 = vrot.lane.b32.xlu0 %v1934, 64
  %v1937 = vpop.permute.xlu0 %1936
  %v1939 = vadd.f32 %v1929, %v1937
  %v1940 = vtanh.pop %v1939
  %1942 = vrot.lane.b32.xlu0 %v1940, 64
  %v1943 = vpop.permute.xlu0 %1942
  %v1945 = vmul.f32 %v1927, %v1943
  %1947 = vrot.lane.b32.xlu0 %v1913, 96
  %v1948 = vpop.permute.xlu0 %1947
  %1951 = vrot.lane.b32.xlu0 %v1945, 32
  %v1952 = vpop.permute.xlu0 %1951
  %v1954 = vsel %vm1308, %v1948, %v1952
  %v1956 = vsel %vm782, %v1954, 0
  %1958 = vmatprep.subr.mxu0 0.0
  %1959 = vmatpush1.msra.mxu0 0.0
  %1960 = vmatprep.subr.mxu0 0.0
  %1961 = vmatpush1.msra.mxu0 0.0
  %1962 = vmatprep.subr.mxu0 0.0
  %1963 = vmatpush1.msra.mxu0 0.0
  %1964 = vmatprep.subr.mxu0 0.0
  %1965 = vmatpush1.msra.mxu0 0.0
  %1966 = vmatprep.subr.mxu0 %v1083
  %1967 = vmatpush1.msra.mxu0 %v1082
  %1968 = vmatprep.subr.mxu0 %v1080
  %1969 = vmatpush1.msra.mxu0 %v1079
  %1970 = vmatprep.subr.mxu0 %v1077
  %1971 = vmatpush1.msra.mxu0 %v1076
  %1972 = vmatprep.subr.mxu0 %v1074
  %1973 = vmatpush1.msra.mxu0 %v1073
  %1974 = vmatprep.subr.mxu0 %v1071
  %1975 = vmatpush1.msra.mxu0 %v1070
  %1976 = vmatprep.subr.mxu0 %v1068
  %1977 = vmatpush1.msra.mxu0 %v1067
  %1978 = vmatprep.subr.mxu0 %v1065
  %1979 = vmatpush1.msra.mxu0 %v1064
  %1980 = vmatprep.subr.mxu0 %v1062
  %1981 = vmatpush1.msra.mxu0 %v1061
  %1982 = vmatprep.subr.mxu0 %v1059
  %1983 = vmatpush1.msra.mxu0 %v1058
  %1984 = vmatprep.subr.mxu0 %v1056
  %1985 = vmatpush1.msra.mxu0 %v1055
  %1986 = vmatprep.subr.mxu0 %v1053
  %1987 = vmatpush1.msra.mxu0 %v1052
  %1988 = vmatprep.subr.mxu0 %v1050
  %1989 = vmatpush1.msra.mxu0 %v1049
  %1990 = vmatprep.subr.mxu0 0.0
  %1991 = vmatpush2.msra.mxu0 0.0
  %1992 = vmatprep.subr.mxu0 0.0
  %1993 = vmatpush2.msra.mxu0 0.0
  %1994 = vmatprep.subr.mxu0 0.0
  %1995 = vmatpush2.msra.mxu0 0.0
  %1996 = vmatprep.subr.mxu0 0.0
  %1997 = vmatpush2.msra.mxu0 0.0
  %1998 = vmatprep.subr.mxu0 0.0
  %1999 = vmatpush2.msra.mxu0 0.0
  %2000 = vmatprep.subr.mxu0 0.0
  %2001 = vmatpush2.msra.mxu0 0.0
  %2002 = vmatprep.subr.mxu0 0.0
  %2003 = vmatpush2.msra.mxu0 0.0
  %2004 = vmatprep.subr.mxu0 0.0
  %2005 = vmatpush2.msra.mxu0 0.0
  %2006 = vmatprep.subr.mxu0 0.0
  %2007 = vmatpush2.msra.mxu0 0.0
  %2008 = vmatprep.subr.mxu0 0.0
  %2009 = vmatpush2.msra.mxu0 0.0
  %2010 = vmatprep.subr.mxu0 0.0
  %2011 = vmatpush2.msra.mxu0 0.0
  %2012 = vmatprep.subr.mxu0 0.0
  %2013 = vmatpush2.msra.mxu0 0.0
  %2014 = vmatprep.subr.mxu0 0.0
  %2015 = vmatpush2.msra.mxu0 0.0
  %2016 = vmatprep.subr.mxu0 0.0
  %2017 = vmatpush2.msra.mxu0 0.0
  %2018 = vmatprep.subr.mxu0 0.0
  %2019 = vmatpush2.msra.mxu0 0.0
  %2020 = vmatprep.subr.mxu0 0.0
  %2021 = vmatpush2.msra.mxu0 0.0
  %2022 = vmatprep.mubr.f32.mxu0 0.0
  %2023 = vmatmul.mubr.f32.gmra.mxu0 %v1956
  %v2024 = vpop.f32.mrf.mxu0
  %v2025 = vadd.f32 0.0, %v2024
  %v2026 = vpop.f32.mrf.mxu0
  %v2027 = vadd.f32 0.0, %v2026
  %2028 = vdwg.mxu0
  %2029 = vmatprep.subr.mxu0 0.0
  %2030 = vmatpush1.msra.mxu0 0.0
  %2031 = vmatprep.subr.mxu0 0.0
  %2032 = vmatpush1.msra.mxu0 0.0
  %2033 = vmatprep.subr.mxu0 0.0
  %2034 = vmatpush1.msra.mxu0 0.0
  %2035 = vmatprep.subr.mxu0 0.0
  %2036 = vmatpush1.msra.mxu0 0.0
  %2037 = vmatprep.subr.mxu0 0.0
  %2038 = vmatpush1.msra.mxu0 %v1084
  %2039 = vmatprep.subr.mxu0 0.0
  %2040 = vmatpush1.msra.mxu0 %v1081
  %2041 = vmatprep.subr.mxu0 0.0
  %2042 = vmatpush1.msra.mxu0 %v1078
  %2043 = vmatprep.subr.mxu0 0.0
  %2044 = vmatpush1.msra.mxu0 %v1075
  %2045 = vmatprep.subr.mxu0 0.0
  %2046 = vmatpush1.msra.mxu0 %v1072
  %2047 = vmatprep.subr.mxu0 0.0
  %2048 = vmatpush1.msra.mxu0 %v1069
  %2049 = vmatprep.subr.mxu0 0.0
  %2050 = vmatpush1.msra.mxu0 %v1066
  %2051 = vmatprep.subr.mxu0 0.0
  %2052 = vmatpush1.msra.mxu0 %v1063
  %2053 = vmatprep.subr.mxu0 0.0
  %2054 = vmatpush1.msra.mxu0 %v1060
  %2055 = vmatprep.subr.mxu0 0.0
  %2056 = vmatpush1.msra.mxu0 %v1057
  %2057 = vmatprep.subr.mxu0 0.0
  %2058 = vmatpush1.msra.mxu0 %v1054
  %2059 = vmatprep.subr.mxu0 0.0
  %2060 = vmatpush1.msra.mxu0 %v1051
  %2061 = vmatprep.subr.mxu0 0.0
  %2062 = vmatpush2.msra.mxu0 0.0
  %2063 = vmatprep.subr.mxu0 0.0
  %2064 = vmatpush2.msra.mxu0 0.0
  %2065 = vmatprep.subr.mxu0 0.0
  %2066 = vmatpush2.msra.mxu0 0.0
  %2067 = vmatprep.subr.mxu0 0.0
  %2068 = vmatpush2.msra.mxu0 0.0
  %2069 = vmatprep.subr.mxu0 0.0
  %2070 = vmatpush2.msra.mxu0 0.0
  %2071 = vmatprep.subr.mxu0 0.0
  %2072 = vmatpush2.msra.mxu0 0.0
  %2073 = vmatprep.subr.mxu0 0.0
  %2074 = vmatpush2.msra.mxu0 0.0
  %2075 = vmatprep.subr.mxu0 0.0
  %2076 = vmatpush2.msra.mxu0 0.0
  %2077 = vmatprep.subr.mxu0 0.0
  %2078 = vmatpush2.msra.mxu0 0.0
  %2079 = vmatprep.subr.mxu0 0.0
  %2080 = vmatpush2.msra.mxu0 0.0
  %2081 = vmatprep.subr.mxu0 0.0
  %2082 = vmatpush2.msra.mxu0 0.0
  %2083 = vmatprep.subr.mxu0 0.0
  %2084 = vmatpush2.msra.mxu0 0.0
  %2085 = vmatprep.subr.mxu0 0.0
  %2086 = vmatpush2.msra.mxu0 0.0
  %2087 = vmatprep.subr.mxu0 0.0
  %2088 = vmatpush2.msra.mxu0 0.0
  %2089 = vmatprep.subr.mxu0 0.0
  %2090 = vmatpush2.msra.mxu0 0.0
  %2091 = vmatprep.subr.mxu0 0.0
  %2092 = vmatpush2.msra.mxu0 0.0
  %2093 = vmatprep.mubr.f32.mxu0 0.0
  %2094 = vmatmul.mubr.f32.gmra.mxu0 %v1956
  %v2095 = vpop.f32.mrf.mxu0
  %v2096 = vadd.f32 0.0, %v2095
  %v2097 = vpop.f32.mrf.mxu0
  %2098 = vdwg.mxu0
  %v2099 = vld [vmem:[#allocation2 + $0x60] sm:$0xff]
  %v2100 = vld [vmem:[#allocation2 + $0x68] sm:$0xff]
  %v2101 = vld [vmem:[#allocation2 + $0x70] sm:$0xff]
  %v2102 = vadd.f32 %v2099, %v2025
  %v2103 = vxor.u32 %v2102, 2147483648
  %v2104 = vmul.f32 %v2103, 1.442695
  %v2105 = vpow.pop %v2104
  %v2106 = vadd.f32 %v2105, 1.0
  %v2107 = vrcp.pop %v2106
  %v2108 = vmul.f32 1.0, %v2107
  %v2109 = vadd.f32 %v2025, %v1246
  %2111 = vrot.lane.b32.xlu0 %v2109, 64
  %v2112 = vpop.permute.xlu0 %2111
  %v2114 = vmul.f32 %v2108, %v2112
  %2116 = vrot.lane.b32.xlu0 %v2114, 64
  %v2117 = vpop.permute.xlu0 %2116
  %v2119 = vadd.f32 %v2099, %v2117
  %v2120 = vtanh.pop %v2119
  %v2121 = vsub.f32 1.0, %v2108
  %2123 = vrot.lane.b32.xlu0 %v2120, 96
  %v2124 = vpop.permute.xlu0 %2123
  %v2126 = vmul.f32 %v2121, %v2124
  %v2127 = vmul.f32 %v2108, %v1913
  %v2128 = vadd.f32 %v2126, %v2127
  %v2129 = vadd.f32 %v2100, %v2027
  %v2130 = vadd.f32 %v2101, %v2096
  %v2131 = vxor.u32 %v2129, 2147483648
  %v2132 = vxor.u32 %v2130, 2147483648
  %v2133 = vmul.f32 %v2131, 1.442695
  %v2134 = vpow.pop %v2133
  %v2135 = vmul.f32 %v2132, 1.442695
  %v2136 = vpow.pop %v2135
  %v2137 = vadd.f32 %v2134, 1.0
  %v2138 = vadd.f32 %v2136, 1.0
  %v2139 = vrcp.pop %v2137
  %v2140 = vmul.f32 1.0, %v2139
  %v2141 = vrcp.pop %v2138
  %v2142 = vmul.f32 1.0, %v2141
  %v2143 = vtanh.pop %v2130
  %v2144 = vmul.f32 %v2140, %v1939
  %2146 = vrot.lane.b32.xlu0 %v2143, 64
  %v2147 = vpop.permute.xlu0 %2146
  %v2149 = vmul.f32 %v2140, %v2147
  %2151 = vrot.lane.b32.xlu0 %v2149, 64
  %v2152 = vpop.permute.xlu0 %2151
  %v2154 = vadd.f32 %v2144, %v2152
  %v2155 = vtanh.pop %v2154
  %2157 = vrot.lane.b32.xlu0 %v2155, 64
  %v2158 = vpop.permute.xlu0 %2157
  %v2160 = vmul.f32 %v2142, %v2158
  %2162 = vrot.lane.b32.xlu0 %v2128, 96
  %v2163 = vpop.permute.xlu0 %2162
  %2166 = vrot.lane.b32.xlu0 %v2160, 32
  %v2167 = vpop.permute.xlu0 %2166
  %v2169 = vsel %vm1308, %v2163, %v2167
  %v2171 = vsel %vm782, %v2169, 0
  %2173 = vmatprep.subr.mxu0 0.0
  %2174 = vmatpush1.msra.mxu0 0.0
  %2175 = vmatprep.subr.mxu0 0.0
  %2176 = vmatpush1.msra.mxu0 0.0
  %2177 = vmatprep.subr.mxu0 0.0
  %2178 = vmatpush1.msra.mxu0 0.0
  %2179 = vmatprep.subr.mxu0 0.0
  %2180 = vmatpush1.msra.mxu0 0.0
  %2181 = vmatprep.subr.mxu0 %v1083
  %2182 = vmatpush1.msra.mxu0 %v1082
  %2183 = vmatprep.subr.mxu0 %v1080
  %2184 = vmatpush1.msra.mxu0 %v1079
  %2185 = vmatprep.subr.mxu0 %v1077
  %2186 = vmatpush1.msra.mxu0 %v1076
  %2187 = vmatprep.subr.mxu0 %v1074
  %2188 = vmatpush1.msra.mxu0 %v1073
  %2189 = vmatprep.subr.mxu0 %v1071
  %2190 = vmatpush1.msra.mxu0 %v1070
  %2191 = vmatprep.subr.mxu0 %v1068
  %2192 = vmatpush1.msra.mxu0 %v1067
  %2193 = vmatprep.subr.mxu0 %v1065
  %2194 = vmatpush1.msra.mxu0 %v1064
  %2195 = vmatprep.subr.mxu0 %v1062
  %2196 = vmatpush1.msra.mxu0 %v1061
  %2197 = vmatprep.subr.mxu0 %v1059
  %2198 = vmatpush1.msra.mxu0 %v1058
  %2199 = vmatprep.subr.mxu0 %v1056
  %2200 = vmatpush1.msra.mxu0 %v1055
  %2201 = vmatprep.subr.mxu0 %v1053
  %2202 = vmatpush1.msra.mxu0 %v1052
  %2203 = vmatprep.subr.mxu0 %v1050
  %2204 = vmatpush1.msra.mxu0 %v1049
  %2205 = vmatprep.subr.mxu0 0.0
  %2206 = vmatpush2.msra.mxu0 0.0
  %2207 = vmatprep.subr.mxu0 0.0
  %2208 = vmatpush2.msra.mxu0 0.0
  %2209 = vmatprep.subr.mxu0 0.0
  %2210 = vmatpush2.msra.mxu0 0.0
  %2211 = vmatprep.subr.mxu0 0.0
  %2212 = vmatpush2.msra.mxu0 0.0
  %2213 = vmatprep.subr.mxu0 0.0
  %2214 = vmatpush2.msra.mxu0 0.0
  %2215 = vmatprep.subr.mxu0 0.0
  %2216 = vmatpush2.msra.mxu0 0.0
  %2217 = vmatprep.subr.mxu0 0.0
  %2218 = vmatpush2.msra.mxu0 0.0
  %2219 = vmatprep.subr.mxu0 0.0
  %2220 = vmatpush2.msra.mxu0 0.0
  %2221 = vmatprep.subr.mxu0 0.0
  %2222 = vmatpush2.msra.mxu0 0.0
  %2223 = vmatprep.subr.mxu0 0.0
  %2224 = vmatpush2.msra.mxu0 0.0
  %2225 = vmatprep.subr.mxu0 0.0
  %2226 = vmatpush2.msra.mxu0 0.0
  %2227 = vmatprep.subr.mxu0 0.0
  %2228 = vmatpush2.msra.mxu0 0.0
  %2229 = vmatprep.subr.mxu0 0.0
  %2230 = vmatpush2.msra.mxu0 0.0
  %2231 = vmatprep.subr.mxu0 0.0
  %2232 = vmatpush2.msra.mxu0 0.0
  %2233 = vmatprep.subr.mxu0 0.0
  %2234 = vmatpush2.msra.mxu0 0.0
  %2235 = vmatprep.subr.mxu0 0.0
  %2236 = vmatpush2.msra.mxu0 0.0
  %2237 = vmatprep.mubr.f32.mxu0 0.0
  %2238 = vmatmul.mubr.f32.gmra.mxu0 %v2171
  %v2239 = vpop.f32.mrf.mxu0
  %v2240 = vadd.f32 0.0, %v2239
  %v2241 = vpop.f32.mrf.mxu0
  %v2242 = vadd.f32 0.0, %v2241
  %2243 = vdwg.mxu0
  %2244 = vmatprep.subr.mxu0 0.0
  %2245 = vmatpush1.msra.mxu0 0.0
  %2246 = vmatprep.subr.mxu0 0.0
  %2247 = vmatpush1.msra.mxu0 0.0
  %2248 = vmatprep.subr.mxu0 0.0
  %2249 = vmatpush1.msra.mxu0 0.0
  %2250 = vmatprep.subr.mxu0 0.0
  %2251 = vmatpush1.msra.mxu0 0.0
  %2252 = vmatprep.subr.mxu0 0.0
  %2253 = vmatpush1.msra.mxu0 %v1084
  %2254 = vmatprep.subr.mxu0 0.0
  %2255 = vmatpush1.msra.mxu0 %v1081
  %2256 = vmatprep.subr.mxu0 0.0
  %2257 = vmatpush1.msra.mxu0 %v1078
  %2258 = vmatprep.subr.mxu0 0.0
  %2259 = vmatpush1.msra.mxu0 %v1075
  %2260 = vmatprep.subr.mxu0 0.0
  %2261 = vmatpush1.msra.mxu0 %v1072
  %2262 = vmatprep.subr.mxu0 0.0
  %2263 = vmatpush1.msra.mxu0 %v1069
  %2264 = vmatprep.subr.mxu0 0.0
  %2265 = vmatpush1.msra.mxu0 %v1066
  %2266 = vmatprep.subr.mxu0 0.0
  %2267 = vmatpush1.msra.mxu0 %v1063
  %2268 = vmatprep.subr.mxu0 0.0
  %2269 = vmatpush1.msra.mxu0 %v1060
  %2270 = vmatprep.subr.mxu0 0.0
  %2271 = vmatpush1.msra.mxu0 %v1057
  %2272 = vmatprep.subr.mxu0 0.0
  %2273 = vmatpush1.msra.mxu0 %v1054
  %2274 = vmatprep.subr.mxu0 0.0
  %2275 = vmatpush1.msra.mxu0 %v1051
  %2276 = vmatprep.subr.mxu0 0.0
  %2277 = vmatpush2.msra.mxu0 0.0
  %2278 = vmatprep.subr.mxu0 0.0
  %2279 = vmatpush2.msra.mxu0 0.0
  %2280 = vmatprep.subr.mxu0 0.0
  %2281 = vmatpush2.msra.mxu0 0.0
  %2282 = vmatprep.subr.mxu0 0.0
  %2283 = vmatpush2.msra.mxu0 0.0
  %2284 = vmatprep.subr.mxu0 0.0
  %2285 = vmatpush2.msra.mxu0 0.0
  %2286 = vmatprep.subr.mxu0 0.0
  %2287 = vmatpush2.msra.mxu0 0.0
  %2288 = vmatprep.subr.mxu0 0.0
  %2289 = vmatpush2.msra.mxu0 0.0
  %2290 = vmatprep.subr.mxu0 0.0
  %2291 = vmatpush2.msra.mxu0 0.0
  %2292 = vmatprep.subr.mxu0 0.0
  %2293 = vmatpush2.msra.mxu0 0.0
  %2294 = vmatprep.subr.mxu0 0.0
  %2295 = vmatpush2.msra.mxu0 0.0
  %2296 = vmatprep.subr.mxu0 0.0
  %2297 = vmatpush2.msra.mxu0 0.0
  %2298 = vmatprep.subr.mxu0 0.0
  %2299 = vmatpush2.msra.mxu0 0.0
  %2300 = vmatprep.subr.mxu0 0.0
  %2301 = vmatpush2.msra.mxu0 0.0
  %2302 = vmatprep.subr.mxu0 0.0
  %2303 = vmatpush2.msra.mxu0 0.0
  %2304 = vmatprep.subr.mxu0 0.0
  %2305 = vmatpush2.msra.mxu0 0.0
  %2306 = vmatprep.subr.mxu0 0.0
  %2307 = vmatpush2.msra.mxu0 0.0
  %2308 = vmatprep.mubr.f32.mxu0 0.0
  %2309 = vmatmul.mubr.f32.gmra.mxu0 %v2171
  %v2310 = vpop.f32.mrf.mxu0
  %v2311 = vadd.f32 0.0, %v2310
  %v2312 = vpop.f32.mrf.mxu0
  %2313 = vdwg.mxu0
  %v2314 = vld [vmem:[#allocation2 + $0x78] sm:$0xff]
  %v2315 = vld [vmem:[#allocation2 + $0x80] sm:$0xff]
  %v2316 = vld [vmem:[#allocation2 + $0x88] sm:$0xff]
  %v2317 = vadd.f32 %v2314, %v2240
  %v2318 = vxor.u32 %v2317, 2147483648
  %v2319 = vmul.f32 %v2318, 1.442695
  %v2320 = vpow.pop %v2319
  %v2321 = vadd.f32 %v2320, 1.0
  %v2322 = vrcp.pop %v2321
  %v2323 = vmul.f32 1.0, %v2322
  %v2324 = vadd.f32 %v2240, %v1246
  %2326 = vrot.lane.b32.xlu0 %v2324, 64
  %v2327 = vpop.permute.xlu0 %2326
  %v2329 = vmul.f32 %v2323, %v2327
  %2331 = vrot.lane.b32.xlu0 %v2329, 64
  %v2332 = vpop.permute.xlu0 %2331
  %v2334 = vadd.f32 %v2314, %v2332
  %v2335 = vtanh.pop %v2334
  %v2336 = vsub.f32 1.0, %v2323
  %2338 = vrot.lane.b32.xlu0 %v2335, 96
  %v2339 = vpop.permute.xlu0 %2338
  %v2341 = vmul.f32 %v2336, %v2339
  %v2342 = vmul.f32 %v2323, %v2128
  %v2343 = vadd.f32 %v2341, %v2342
  %v2344 = vadd.f32 %v2315, %v2242
  %v2345 = vadd.f32 %v2316, %v2311
  %v2346 = vxor.u32 %v2344, 2147483648
  %v2347 = vxor.u32 %v2345, 2147483648
  %v2348 = vmul.f32 %v2346, 1.442695
  %v2349 = vpow.pop %v2348
  %v2350 = vmul.f32 %v2347, 1.442695
  %v2351 = vpow.pop %v2350
  %v2352 = vadd.f32 %v2349, 1.0
  %v2353 = vadd.f32 %v2351, 1.0
  %v2354 = vrcp.pop %v2352
  %v2355 = vmul.f32 1.0, %v2354
  %v2356 = vrcp.pop %v2353
  %v2357 = vmul.f32 1.0, %v2356
  %v2358 = vtanh.pop %v2345
  %v2359 = vmul.f32 %v2355, %v2154
  %2361 = vrot.lane.b32.xlu0 %v2358, 64
  %v2362 = vpop.permute.xlu0 %2361
  %v2364 = vmul.f32 %v2355, %v2362
  %2366 = vrot.lane.b32.xlu0 %v2364, 64
  %v2367 = vpop.permute.xlu0 %2366
  %v2369 = vadd.f32 %v2359, %v2367
  %v2370 = vtanh.pop %v2369
  %2372 = vrot.lane.b32.xlu0 %v2370, 64
  %v2373 = vpop.permute.xlu0 %2372
  %v2375 = vmul.f32 %v2357, %v2373
  %2377 = vrot.lane.b32.xlu0 %v2343, 96
  %v2378 = vpop.permute.xlu0 %2377
  %2381 = vrot.lane.b32.xlu0 %v2375, 32
  %v2382 = vpop.permute.xlu0 %2381
  %v2384 = vsel %vm1308, %v2378, %v2382
  %v2386 = vsel %vm782, %v2384, 0
  %2388 = vmatprep.subr.mxu0 0.0
  %2389 = vmatpush1.msra.mxu0 0.0
  %2390 = vmatprep.subr.mxu0 0.0
  %2391 = vmatpush1.msra.mxu0 0.0
  %2392 = vmatprep.subr.mxu0 0.0
  %2393 = vmatpush1.msra.mxu0 0.0
  %2394 = vmatprep.subr.mxu0 0.0
  %2395 = vmatpush1.msra.mxu0 0.0
  %2396 = vmatprep.subr.mxu0 %v1083
  %2397 = vmatpush1.msra.mxu0 %v1082
  %2398 = vmatprep.subr.mxu0 %v1080
  %2399 = vmatpush1.msra.mxu0 %v1079
  %2400 = vmatprep.subr.mxu0 %v1077
  %2401 = vmatpush1.msra.mxu0 %v1076
  %2402 = vmatprep.subr.mxu0 %v1074
  %2403 = vmatpush1.msra.mxu0 %v1073
  %2404 = vmatprep.subr.mxu0 %v1071
  %2405 = vmatpush1.msra.mxu0 %v1070
  %2406 = vmatprep.subr.mxu0 %v1068
  %2407 = vmatpush1.msra.mxu0 %v1067
  %2408 = vmatprep.subr.mxu0 %v1065
  %2409 = vmatpush1.msra.mxu0 %v1064
  %2410 = vmatprep.subr.mxu0 %v1062
  %2411 = vmatpush1.msra.mxu0 %v1061
  %2412 = vmatprep.subr.mxu0 %v1059
  %2413 = vmatpush1.msra.mxu0 %v1058
  %2414 = vmatprep.subr.mxu0 %v1056
  %2415 = vmatpush1.msra.mxu0 %v1055
  %2416 = vmatprep.subr.mxu0 %v1053
  %2417 = vmatpush1.msra.mxu0 %v1052
  %2418 = vmatprep.subr.mxu0 %v1050
  %2419 = vmatpush1.msra.mxu0 %v1049
  %2420 = vmatprep.subr.mxu0 0.0
  %2421 = vmatpush2.msra.mxu0 0.0
  %2422 = vmatprep.subr.mxu0 0.0
  %2423 = vmatpush2.msra.mxu0 0.0
  %2424 = vmatprep.subr.mxu0 0.0
  %2425 = vmatpush2.msra.mxu0 0.0
  %2426 = vmatprep.subr.mxu0 0.0
  %2427 = vmatpush2.msra.mxu0 0.0
  %2428 = vmatprep.subr.mxu0 0.0
  %2429 = vmatpush2.msra.mxu0 0.0
  %2430 = vmatprep.subr.mxu0 0.0
  %2431 = vmatpush2.msra.mxu0 0.0
  %2432 = vmatprep.subr.mxu0 0.0
  %2433 = vmatpush2.msra.mxu0 0.0
  %2434 = vmatprep.subr.mxu0 0.0
  %2435 = vmatpush2.msra.mxu0 0.0
  %2436 = vmatprep.subr.mxu0 0.0
  %2437 = vmatpush2.msra.mxu0 0.0
  %2438 = vmatprep.subr.mxu0 0.0
  %2439 = vmatpush2.msra.mxu0 0.0
  %2440 = vmatprep.subr.mxu0 0.0
  %2441 = vmatpush2.msra.mxu0 0.0
  %2442 = vmatprep.subr.mxu0 0.0
  %2443 = vmatpush2.msra.mxu0 0.0
  %2444 = vmatprep.subr.mxu0 0.0
  %2445 = vmatpush2.msra.mxu0 0.0
  %2446 = vmatprep.subr.mxu0 0.0
  %2447 = vmatpush2.msra.mxu0 0.0
  %2448 = vmatprep.subr.mxu0 0.0
  %2449 = vmatpush2.msra.mxu0 0.0
  %2450 = vmatprep.subr.mxu0 0.0
  %2451 = vmatpush2.msra.mxu0 0.0
  %2452 = vmatprep.mubr.f32.mxu0 0.0
  %2453 = vmatmul.mubr.f32.gmra.mxu0 %v2386
  %v2454 = vpop.f32.mrf.mxu0
  %v2455 = vadd.f32 0.0, %v2454
  %v2456 = vpop.f32.mrf.mxu0
  %v2457 = vadd.f32 0.0, %v2456
  %2458 = vdwg.mxu0
  %2459 = vmatprep.subr.mxu0 0.0
  %2460 = vmatpush1.msra.mxu0 0.0
  %2461 = vmatprep.subr.mxu0 0.0
  %2462 = vmatpush1.msra.mxu0 0.0
  %2463 = vmatprep.subr.mxu0 0.0
  %2464 = vmatpush1.msra.mxu0 0.0
  %2465 = vmatprep.subr.mxu0 0.0
  %2466 = vmatpush1.msra.mxu0 0.0
  %2467 = vmatprep.subr.mxu0 0.0
  %2468 = vmatpush1.msra.mxu0 %v1084
  %2469 = vmatprep.subr.mxu0 0.0
  %2470 = vmatpush1.msra.mxu0 %v1081
  %2471 = vmatprep.subr.mxu0 0.0
  %2472 = vmatpush1.msra.mxu0 %v1078
  %2473 = vmatprep.subr.mxu0 0.0
  %2474 = vmatpush1.msra.mxu0 %v1075
  %2475 = vmatprep.subr.mxu0 0.0
  %2476 = vmatpush1.msra.mxu0 %v1072
  %2477 = vmatprep.subr.mxu0 0.0
  %2478 = vmatpush1.msra.mxu0 %v1069
  %2479 = vmatprep.subr.mxu0 0.0
  %2480 = vmatpush1.msra.mxu0 %v1066
  %2481 = vmatprep.subr.mxu0 0.0
  %2482 = vmatpush1.msra.mxu0 %v1063
  %2483 = vmatprep.subr.mxu0 0.0
  %2484 = vmatpush1.msra.mxu0 %v1060
  %2485 = vmatprep.subr.mxu0 0.0
  %2486 = vmatpush1.msra.mxu0 %v1057
  %2487 = vmatprep.subr.mxu0 0.0
  %2488 = vmatpush1.msra.mxu0 %v1054
  %2489 = vmatprep.subr.mxu0 0.0
  %2490 = vmatpush1.msra.mxu0 %v1051
  %2491 = vmatprep.subr.mxu0 0.0
  %2492 = vmatpush2.msra.mxu0 0.0
  %2493 = vmatprep.subr.mxu0 0.0
  %2494 = vmatpush2.msra.mxu0 0.0
  %2495 = vmatprep.subr.mxu0 0.0
  %2496 = vmatpush2.msra.mxu0 0.0
  %2497 = vmatprep.subr.mxu0 0.0
  %2498 = vmatpush2.msra.mxu0 0.0
  %2499 = vmatprep.subr.mxu0 0.0
  %2500 = vmatpush2.msra.mxu0 0.0
  %2501 = vmatprep.subr.mxu0 0.0
  %2502 = vmatpush2.msra.mxu0 0.0
  %2503 = vmatprep.subr.mxu0 0.0
  %2504 = vmatpush2.msra.mxu0 0.0
  %2505 = vmatprep.subr.mxu0 0.0
  %2506 = vmatpush2.msra.mxu0 0.0
  %2507 = vmatprep.subr.mxu0 0.0
  %2508 = vmatpush2.msra.mxu0 0.0
  %2509 = vmatprep.subr.mxu0 0.0
  %2510 = vmatpush2.msra.mxu0 0.0
  %2511 = vmatprep.subr.mxu0 0.0
  %2512 = vmatpush2.msra.mxu0 0.0
  %2513 = vmatprep.subr.mxu0 0.0
  %2514 = vmatpush2.msra.mxu0 0.0
  %2515 = vmatprep.subr.mxu0 0.0
  %2516 = vmatpush2.msra.mxu0 0.0
  %2517 = vmatprep.subr.mxu0 0.0
  %2518 = vmatpush2.msra.mxu0 0.0
  %2519 = vmatprep.subr.mxu0 0.0
  %2520 = vmatpush2.msra.mxu0 0.0
  %2521 = vmatprep.subr.mxu0 0.0
  %2522 = vmatpush2.msra.mxu0 0.0
  %2523 = vmatprep.mubr.f32.mxu0 0.0
  %2524 = vmatmul.mubr.f32.gmra.mxu0 %v2386
  %v2525 = vpop.f32.mrf.mxu0
  %v2526 = vadd.f32 0.0, %v2525
  %v2527 = vpop.f32.mrf.mxu0
  %2528 = vdwg.mxu0
  %v2529 = vld [vmem:[#allocation2 + $0x90] sm:$0xff]
  %v2530 = vld [vmem:[#allocation2 + $0x98] sm:$0xff]
  %v2531 = vld [vmem:[#allocation2 + $0xa0] sm:$0xff]
  %v2532 = vadd.f32 %v2529, %v2455
  %v2533 = vxor.u32 %v2532, 2147483648
  %v2534 = vmul.f32 %v2533, 1.442695
  %v2535 = vpow.pop %v2534
  %v2536 = vadd.f32 %v2535, 1.0
  %v2537 = vrcp.pop %v2536
  %v2538 = vmul.f32 1.0, %v2537
  %v2539 = vadd.f32 %v2455, %v1246
  %2541 = vrot.lane.b32.xlu0 %v2539, 64
  %v2542 = vpop.permute.xlu0 %2541
  %v2544 = vmul.f32 %v2538, %v2542
  %2546 = vrot.lane.b32.xlu0 %v2544, 64
  %v2547 = vpop.permute.xlu0 %2546
  %v2549 = vadd.f32 %v2529, %v2547
  %v2550 = vtanh.pop %v2549
  %v2551 = vsub.f32 1.0, %v2538
  %2553 = vrot.lane.b32.xlu0 %v2550, 96
  %v2554 = vpop.permute.xlu0 %2553
  %v2556 = vmul.f32 %v2551, %v2554
  %v2557 = vmul.f32 %v2538, %v2343
  %v2558 = vadd.f32 %v2556, %v2557
  %v2559 = vadd.f32 %v2530, %v2457
  %v2560 = vadd.f32 %v2531, %v2526
  %v2561 = vxor.u32 %v2559, 2147483648
  %v2562 = vxor.u32 %v2560, 2147483648
  %v2563 = vmul.f32 %v2561, 1.442695
  %v2564 = vpow.pop %v2563
  %v2565 = vmul.f32 %v2562, 1.442695
  %v2566 = vpow.pop %v2565
  %v2567 = vadd.f32 %v2564, 1.0
  %v2568 = vadd.f32 %v2566, 1.0
  %v2569 = vrcp.pop %v2567
  %v2570 = vmul.f32 1.0, %v2569
  %v2571 = vrcp.pop %v2568
  %v2572 = vmul.f32 1.0, %v2571
  %v2573 = vtanh.pop %v2560
  %v2574 = vmul.f32 %v2570, %v2369
  %2576 = vrot.lane.b32.xlu0 %v2573, 64
  %v2577 = vpop.permute.xlu0 %2576
  %v2579 = vmul.f32 %v2570, %v2577
  %2581 = vrot.lane.b32.xlu0 %v2579, 64
  %v2582 = vpop.permute.xlu0 %2581
  %v2584 = vadd.f32 %v2574, %v2582
  %v2585 = vtanh.pop %v2584
  %2587 = vrot.lane.b32.xlu0 %v2585, 64
  %v2588 = vpop.permute.xlu0 %2587
  %v2590 = vmul.f32 %v2572, %v2588
  %2592 = vrot.lane.b32.xlu0 %v2558, 96
  %v2593 = vpop.permute.xlu0 %2592
  %2596 = vrot.lane.b32.xlu0 %v2590, 32
  %v2597 = vpop.permute.xlu0 %2596
  %v2599 = vsel %vm1308, %v2593, %v2597
  %v2601 = vsel %vm782, %v2599, 0
  %2603 = vmatprep.subr.mxu0 0.0
  %2604 = vmatpush1.msra.mxu0 0.0
  %2605 = vmatprep.subr.mxu0 0.0
  %2606 = vmatpush1.msra.mxu0 0.0
  %2607 = vmatprep.subr.mxu0 0.0
  %2608 = vmatpush1.msra.mxu0 0.0
  %2609 = vmatprep.subr.mxu0 0.0
  %2610 = vmatpush1.msra.mxu0 0.0
  %2611 = vmatprep.subr.mxu0 %v1083
  %2612 = vmatpush1.msra.mxu0 %v1082
  %2613 = vmatprep.subr.mxu0 %v1080
  %2614 = vmatpush1.msra.mxu0 %v1079
  %2615 = vmatprep.subr.mxu0 %v1077
  %2616 = vmatpush1.msra.mxu0 %v1076
  %2617 = vmatprep.subr.mxu0 %v1074
  %2618 = vmatpush1.msra.mxu0 %v1073
  %2619 = vmatprep.subr.mxu0 %v1071
  %2620 = vmatpush1.msra.mxu0 %v1070
  %2621 = vmatprep.subr.mxu0 %v1068
  %2622 = vmatpush1.msra.mxu0 %v1067
  %2623 = vmatprep.subr.mxu0 %v1065
  %2624 = vmatpush1.msra.mxu0 %v1064
  %2625 = vmatprep.subr.mxu0 %v1062
  %2626 = vmatpush1.msra.mxu0 %v1061
  %2627 = vmatprep.subr.mxu0 %v1059
  %2628 = vmatpush1.msra.mxu0 %v1058
  %2629 = vmatprep.subr.mxu0 %v1056
  %2630 = vmatpush1.msra.mxu0 %v1055
  %2631 = vmatprep.subr.mxu0 %v1053
  %2632 = vmatpush1.msra.mxu0 %v1052
  %2633 = vmatprep.subr.mxu0 %v1050
  %2634 = vmatpush1.msra.mxu0 %v1049
  %2635 = vmatprep.subr.mxu0 0.0
  %2636 = vmatpush2.msra.mxu0 0.0
  %2637 = vmatprep.subr.mxu0 0.0
  %2638 = vmatpush2.msra.mxu0 0.0
  %2639 = vmatprep.subr.mxu0 0.0
  %2640 = vmatpush2.msra.mxu0 0.0
  %2641 = vmatprep.subr.mxu0 0.0
  %2642 = vmatpush2.msra.mxu0 0.0
  %2643 = vmatprep.subr.mxu0 0.0
  %2644 = vmatpush2.msra.mxu0 0.0
  %2645 = vmatprep.subr.mxu0 0.0
  %2646 = vmatpush2.msra.mxu0 0.0
  %2647 = vmatprep.subr.mxu0 0.0
  %2648 = vmatpush2.msra.mxu0 0.0
  %2649 = vmatprep.subr.mxu0 0.0
  %2650 = vmatpush2.msra.mxu0 0.0
  %2651 = vmatprep.subr.mxu0 0.0
  %2652 = vmatpush2.msra.mxu0 0.0
  %2653 = vmatprep.subr.mxu0 0.0
  %2654 = vmatpush2.msra.mxu0 0.0
  %2655 = vmatprep.subr.mxu0 0.0
  %2656 = vmatpush2.msra.mxu0 0.0
  %2657 = vmatprep.subr.mxu0 0.0
  %2658 = vmatpush2.msra.mxu0 0.0
  %2659 = vmatprep.subr.mxu0 0.0
  %2660 = vmatpush2.msra.mxu0 0.0
  %2661 = vmatprep.subr.mxu0 0.0
  %2662 = vmatpush2.msra.mxu0 0.0
  %2663 = vmatprep.subr.mxu0 0.0
  %2664 = vmatpush2.msra.mxu0 0.0
  %2665 = vmatprep.subr.mxu0 0.0
  %2666 = vmatpush2.msra.mxu0 0.0
  %2667 = vmatprep.mubr.f32.mxu0 0.0
  %2668 = vmatmul.mubr.f32.gmra.mxu0 %v2601
  %v2669 = vpop.f32.mrf.mxu0
  %v2670 = vadd.f32 0.0, %v2669
  %v2671 = vpop.f32.mrf.mxu0
  %v2672 = vadd.f32 0.0, %v2671
  %2673 = vdwg.mxu0
  %2674 = vmatprep.subr.mxu0 0.0
  %2675 = vmatpush1.msra.mxu0 0.0
  %2676 = vmatprep.subr.mxu0 0.0
  %2677 = vmatpush1.msra.mxu0 0.0
  %2678 = vmatprep.subr.mxu0 0.0
  %2679 = vmatpush1.msra.mxu0 0.0
  %2680 = vmatprep.subr.mxu0 0.0
  %2681 = vmatpush1.msra.mxu0 0.0
  %2682 = vmatprep.subr.mxu0 0.0
  %2683 = vmatpush1.msra.mxu0 %v1084
  %2684 = vmatprep.subr.mxu0 0.0
  %2685 = vmatpush1.msra.mxu0 %v1081
  %2686 = vmatprep.subr.mxu0 0.0
  %2687 = vmatpush1.msra.mxu0 %v1078
  %2688 = vmatprep.subr.mxu0 0.0
  %2689 = vmatpush1.msra.mxu0 %v1075
  %2690 = vmatprep.subr.mxu0 0.0
  %2691 = vmatpush1.msra.mxu0 %v1072
  %2692 = vmatprep.subr.mxu0 0.0
  %2693 = vmatpush1.msra.mxu0 %v1069
  %2694 = vmatprep.subr.mxu0 0.0
  %2695 = vmatpush1.msra.mxu0 %v1066
  %2696 = vmatprep.subr.mxu0 0.0
  %2697 = vmatpush1.msra.mxu0 %v1063
  %2698 = vmatprep.subr.mxu0 0.0
  %2699 = vmatpush1.msra.mxu0 %v1060
  %2700 = vmatprep.subr.mxu0 0.0
  %2701 = vmatpush1.msra.mxu0 %v1057
  %2702 = vmatprep.subr.mxu0 0.0
  %2703 = vmatpush1.msra.mxu0 %v1054
  %2704 = vmatprep.subr.mxu0 0.0
  %2705 = vmatpush1.msra.mxu0 %v1051
  %2706 = vmatprep.subr.mxu0 0.0
  %2707 = vmatpush2.msra.mxu0 0.0
  %2708 = vmatprep.subr.mxu0 0.0
  %2709 = vmatpush2.msra.mxu0 0.0
  %2710 = vmatprep.subr.mxu0 0.0
  %2711 = vmatpush2.msra.mxu0 0.0
  %2712 = vmatprep.subr.mxu0 0.0
  %2713 = vmatpush2.msra.mxu0 0.0
  %2714 = vmatprep.subr.mxu0 0.0
  %2715 = vmatpush2.msra.mxu0 0.0
  %2716 = vmatprep.subr.mxu0 0.0
  %2717 = vmatpush2.msra.mxu0 0.0
  %2718 = vmatprep.subr.mxu0 0.0
  %2719 = vmatpush2.msra.mxu0 0.0
  %2720 = vmatprep.subr.mxu0 0.0
  %2721 = vmatpush2.msra.mxu0 0.0
  %2722 = vmatprep.subr.mxu0 0.0
  %2723 = vmatpush2.msra.mxu0 0.0
  %2724 = vmatprep.subr.mxu0 0.0
  %2725 = vmatpush2.msra.mxu0 0.0
  %2726 = vmatprep.subr.mxu0 0.0
  %2727 = vmatpush2.msra.mxu0 0.0
  %2728 = vmatprep.subr.mxu0 0.0
  %2729 = vmatpush2.msra.mxu0 0.0
  %2730 = vmatprep.subr.mxu0 0.0
  %2731 = vmatpush2.msra.mxu0 0.0
  %2732 = vmatprep.subr.mxu0 0.0
  %2733 = vmatpush2.msra.mxu0 0.0
  %2734 = vmatprep.subr.mxu0 0.0
  %2735 = vmatpush2.msra.mxu0 0.0
  %2736 = vmatprep.subr.mxu0 0.0
  %2737 = vmatpush2.msra.mxu0 0.0
  %2738 = vmatprep.mubr.f32.mxu0 0.0
  %2739 = vmatmul.mubr.f32.gmra.mxu0 %v2601
  %v2740 = vpop.f32.mrf.mxu0
  %v2741 = vadd.f32 0.0, %v2740
  %v2742 = vpop.f32.mrf.mxu0
  %2743 = vdwg.mxu0
  %v2744 = vld [vmem:[#allocation2 + $0xa8] sm:$0xff]
  %v2745 = vld [vmem:[#allocation2 + $0xb0] sm:$0xff]
  %v2746 = vld [vmem:[#allocation2 + $0xb8] sm:$0xff]
  %v2747 = vadd.f32 %v2744, %v2670
  %v2748 = vxor.u32 %v2747, 2147483648
  %v2749 = vmul.f32 %v2748, 1.442695
  %v2750 = vpow.pop %v2749
  %v2751 = vadd.f32 %v2750, 1.0
  %v2752 = vrcp.pop %v2751
  %v2753 = vmul.f32 1.0, %v2752
  %v2754 = vadd.f32 %v2670, %v1246
  %2756 = vrot.lane.b32.xlu0 %v2754, 64
  %v2757 = vpop.permute.xlu0 %2756
  %v2759 = vmul.f32 %v2753, %v2757
  %2761 = vrot.lane.b32.xlu0 %v2759, 64
  %v2762 = vpop.permute.xlu0 %2761
  %v2764 = vadd.f32 %v2744, %v2762
  %v2765 = vtanh.pop %v2764
  %v2766 = vsub.f32 1.0, %v2753
  %2768 = vrot.lane.b32.xlu0 %v2765, 96
  %v2769 = vpop.permute.xlu0 %2768
  %v2771 = vmul.f32 %v2766, %v2769
  %v2772 = vmul.f32 %v2753, %v2558
  %v2773 = vadd.f32 %v2771, %v2772
  %v2774 = vadd.f32 %v2745, %v2672
  %v2775 = vadd.f32 %v2746, %v2741
  %v2776 = vxor.u32 %v2774, 2147483648
  %v2777 = vxor.u32 %v2775, 2147483648
  %v2778 = vmul.f32 %v2776, 1.442695
  %v2779 = vpow.pop %v2778
  %v2780 = vmul.f32 %v2777, 1.442695
  %v2781 = vpow.pop %v2780
  %v2782 = vadd.f32 %v2779, 1.0
  %v2783 = vadd.f32 %v2781, 1.0
  %v2784 = vrcp.pop %v2782
  %v2785 = vmul.f32 1.0, %v2784
  %v2786 = vrcp.pop %v2783
  %v2787 = vmul.f32 1.0, %v2786
  %v2788 = vtanh.pop %v2775
  %v2789 = vmul.f32 %v2785, %v2584
  %2791 = vrot.lane.b32.xlu0 %v2788, 64
  %v2792 = vpop.permute.xlu0 %2791
  %v2794 = vmul.f32 %v2785, %v2792
  %2796 = vrot.lane.b32.xlu0 %v2794, 64
  %v2797 = vpop.permute.xlu0 %2796
  %v2799 = vadd.f32 %v2789, %v2797
  %v2800 = vtanh.pop %v2799
  %2802 = vrot.lane.b32.xlu0 %v2800, 64
  %v2803 = vpop.permute.xlu0 %2802
  %v2805 = vmul.f32 %v2787, %v2803
  %2807 = vrot.lane.b32.xlu0 %v2805, 96
  %v2808 = vpop.permute.xlu0 %2807
  %v2810 = vadd.f32 %v2805, %v2808
  %v2811 = vmul.f32 %v2810, 0.5
  %2813 = vrot.lane.b32.xlu0 %v2773, 96
  %v2814 = vpop.permute.xlu0 %2813
  %2817 = vrot.lane.b32.xlu0 %v2811, 32
  %v2818 = vpop.permute.xlu0 %2817
  %v2820 = vsel %vm1308, %v2814, %v2818
  %v2821 = vld [vmem:[%s10] sm:$0xff]
  %v2822 = vld [vmem:[%s10 + $0x8] sm:$0xff]
  %v2823 = vld [vmem:[%s10 + $0x10] sm:$0xff]
  %v2824 = vld [vmem:[%s10 + $0x18] sm:$0xff]
  %v2825 = vld [vmem:[%s10 + $0x20] sm:$0xff]
  %v2826 = vld [vmem:[%s10 + $0x28] sm:$0xff]
  %v2827 = vld [vmem:[%s10 + $0x30] sm:$0xff]
  %v2828 = vld [vmem:[%s10 + $0x38] sm:$0xff]
  %v2829 = vld [vmem:[%s11] sm:$0x1]
  %v2831 = vlaneseq
  %v2832 = vshrl.u32 %v2831, 7
  %v2833 = vsub.s32 0, %v2832
  %v2834 = vrot.slane %v2829, %v2833
  %v2837 = vsel %vm720, %v2820, 0
  %2839 = vmatprep.subr.mxu0 0.0
  %2840 = vmatpush1.msra.mxu0 0.0
  %2841 = vmatprep.subr.mxu0 0.0
  %2842 = vmatpush1.msra.mxu0 0.0
  %2843 = vmatprep.subr.mxu0 0.0
  %2844 = vmatpush1.msra.mxu0 0.0
  %2845 = vmatprep.subr.mxu0 0.0
  %2846 = vmatpush1.msra.mxu0 0.0
  %2847 = vmatprep.subr.mxu0 0.0
  %2848 = vmatpush1.msra.mxu0 0.0
  %2849 = vmatprep.subr.mxu0 0.0
  %2850 = vmatpush1.msra.mxu0 0.0
  %2851 = vmatprep.subr.mxu0 0.0
  %2852 = vmatpush1.msra.mxu0 0.0
  %2853 = vmatprep.subr.mxu0 0.0
  %2854 = vmatpush1.msra.mxu0 0.0
  %2855 = vmatprep.subr.mxu0 0.0
  %2856 = vmatpush1.msra.mxu0 %v2828
  %2857 = vmatprep.subr.mxu0 0.0
  %2858 = vmatpush1.msra.mxu0 %v2827
  %2859 = vmatprep.subr.mxu0 0.0
  %2860 = vmatpush1.msra.mxu0 %v2826
  %2861 = vmatprep.subr.mxu0 0.0
  %2862 = vmatpush1.msra.mxu0 %v2825
  %2863 = vmatprep.subr.mxu0 0.0
  %2864 = vmatpush1.msra.mxu0 %v2824
  %2865 = vmatprep.subr.mxu0 0.0
  %2866 = vmatpush1.msra.mxu0 %v2823
  %2867 = vmatprep.subr.mxu0 0.0
  %2868 = vmatpush1.msra.mxu0 %v2822
  %2869 = vmatprep.subr.mxu0 0.0
  %2870 = vmatpush1.msra.mxu0 %v2821
  %2871 = vmatprep.subr.mxu0 0.0
  %2872 = vmatpush2.msra.mxu0 0.0
  %2873 = vmatprep.subr.mxu0 0.0
  %2874 = vmatpush2.msra.mxu0 0.0
  %2875 = vmatprep.subr.mxu0 0.0
  %2876 = vmatpush2.msra.mxu0 0.0
  %2877 = vmatprep.subr.mxu0 0.0
  %2878 = vmatpush2.msra.mxu0 0.0
  %2879 = vmatprep.subr.mxu0 0.0
  %2880 = vmatpush2.msra.mxu0 0.0
  %2881 = vmatprep.subr.mxu0 0.0
  %2882 = vmatpush2.msra.mxu0 0.0
  %2883 = vmatprep.subr.mxu0 0.0
  %2884 = vmatpush2.msra.mxu0 0.0
  %2885 = vmatprep.subr.mxu0 0.0
  %2886 = vmatpush2.msra.mxu0 0.0
  %2887 = vmatprep.subr.mxu0 0.0
  %2888 = vmatpush2.msra.mxu0 0.0
  %2889 = vmatprep.subr.mxu0 0.0
  %2890 = vmatpush2.msra.mxu0 0.0
  %2891 = vmatprep.subr.mxu0 0.0
  %2892 = vmatpush2.msra.mxu0 0.0
  %2893 = vmatprep.subr.mxu0 0.0
  %2894 = vmatpush2.msra.mxu0 0.0
  %2895 = vmatprep.subr.mxu0 0.0
  %2896 = vmatpush2.msra.mxu0 0.0
  %2897 = vmatprep.subr.mxu0 0.0
  %2898 = vmatpush2.msra.mxu0 0.0
  %2899 = vmatprep.subr.mxu0 0.0
  %2900 = vmatpush2.msra.mxu0 0.0
  %2901 = vmatprep.subr.mxu0 0.0
  %2902 = vmatpush2.msra.mxu0 0.0
  %2903 = vmatprep.mubr.f32.mxu0 0.0
  %2904 = vmatmul.mubr.f32.gmra.mxu0 %v2837
  %v2905 = vpop.f32.mrf.mxu0
  %v2906 = vadd.f32 %v2834, %v2905
  %v2907 = vpop.f32.mrf.mxu0
  %2908 = vdwg.mxu0
  %v2909 = vmax.f32 %v2906, 0.0
  %v2910 = vld [vmem:[%s12] sm:$0xff]
  %v2911 = vld [vmem:[%s12 + $0x8] sm:$0xff]
  %v2912 = vld [vmem:[%s12 + $0x10] sm:$0xff]
  %v2913 = vld [vmem:[%s12 + $0x18] sm:$0xff]
  %v2914 = vld [vmem:[%s13] sm:$0x1]
  %v2916 = vlaneseq
  %v2917 = vshrl.u32 %v2916, 7
  %v2918 = vsub.s32 0, %v2917
  %v2919 = vrot.slane %v2914, %v2918
  %v2922 = vsel %vm1308, %v2909, 0
  %2924 = vmatprep.subr.mxu0 0.0
  %2925 = vmatpush1.msra.mxu0 0.0
  %2926 = vmatprep.subr.mxu0 0.0
  %2927 = vmatpush1.msra.mxu0 0.0
  %2928 = vmatprep.subr.mxu0 0.0
  %2929 = vmatpush1.msra.mxu0 0.0
  %2930 = vmatprep.subr.mxu0 0.0
  %2931 = vmatpush1.msra.mxu0 0.0
  %2932 = vmatprep.subr.mxu0 0.0
  %2933 = vmatpush1.msra.mxu0 0.0
  %2934 = vmatprep.subr.mxu0 0.0
  %2935 = vmatpush1.msra.mxu0 0.0
  %2936 = vmatprep.subr.mxu0 0.0
  %2937 = vmatpush1.msra.mxu0 0.0
  %2938 = vmatprep.subr.mxu0 0.0
  %2939 = vmatpush1.msra.mxu0 0.0
  %2940 = vmatprep.subr.mxu0 0.0
  %2941 = vmatpush1.msra.mxu0 0.0
  %2942 = vmatprep.subr.mxu0 0.0
  %2943 = vmatpush1.msra.mxu0 0.0
  %2944 = vmatprep.subr.mxu0 0.0
  %2945 = vmatpush1.msra.mxu0 0.0
  %2946 = vmatprep.subr.mxu0 0.0
  %2947 = vmatpush1.msra.mxu0 0.0
  %2948 = vmatprep.subr.mxu0 0.0
  %2949 = vmatpush1.msra.mxu0 %v2913
  %2950 = vmatprep.subr.mxu0 0.0
  %2951 = vmatpush1.msra.mxu0 %v2912
  %2952 = vmatprep.subr.mxu0 0.0
  %2953 = vmatpush1.msra.mxu0 %v2911
  %2954 = vmatprep.subr.mxu0 0.0
  %2955 = vmatpush1.msra.mxu0 %v2910
  %2956 = vmatprep.subr.mxu0 0.0
  %2957 = vmatpush2.msra.mxu0 0.0
  %2958 = vmatprep.subr.mxu0 0.0
  %2959 = vmatpush2.msra.mxu0 0.0
  %2960 = vmatprep.subr.mxu0 0.0
  %2961 = vmatpush2.msra.mxu0 0.0
  %2962 = vmatprep.subr.mxu0 0.0
  %2963 = vmatpush2.msra.mxu0 0.0
  %2964 = vmatprep.subr.mxu0 0.0
  %2965 = vmatpush2.msra.mxu0 0.0
  %2966 = vmatprep.subr.mxu0 0.0
  %2967 = vmatpush2.msra.mxu0 0.0
  %2968 = vmatprep.subr.mxu0 0.0
  %2969 = vmatpush2.msra.mxu0 0.0
  %2970 = vmatprep.subr.mxu0 0.0
  %2971 = vmatpush2.msra.mxu0 0.0
  %2972 = vmatprep.subr.mxu0 0.0
  %2973 = vmatpush2.msra.mxu0 0.0
  %2974 = vmatprep.subr.mxu0 0.0
  %2975 = vmatpush2.msra.mxu0 0.0
  %2976 = vmatprep.subr.mxu0 0.0
  %2977 = vmatpush2.msra.mxu0 0.0
  %2978 = vmatprep.subr.mxu0 0.0
  %2979 = vmatpush2.msra.mxu0 0.0
  %2980 = vmatprep.subr.mxu0 0.0
  %2981 = vmatpush2.msra.mxu0 0.0
  %2982 = vmatprep.subr.mxu0 0.0
  %2983 = vmatpush2.msra.mxu0 0.0
  %2984 = vmatprep.subr.mxu0 0.0
  %2985 = vmatpush2.msra.mxu0 0.0
  %2986 = vmatprep.subr.mxu0 0.0
  %2987 = vmatpush2.msra.mxu0 0.0
  %2988 = vmatprep.mubr.f32.mxu0 0.0
  %2989 = vmatmul.mubr.f32.gmra.mxu0 %v2922
  %v2990 = vpop.f32.mrf.mxu0
  %v2991 = vadd.f32 %v2919, %v2990
  %v2992 = vpop.f32.mrf.mxu0
  %2993 = vdwg.mxu0
  %vm2994 = vcmask 15360
  %2995 = vst.msk [vmem:[%s14] sm:$0xff] %vm2994, %v2991
  // Predicated region
  $region58: #{full_model_forward.1} parent=0 // pred_check
    _
  $region59: #{full_model_forward.1} parent=0 // pred_check_branch
    %2997 = sbr.rel (0) target = $region61
  $region60: #{full_model_forward.1} parent=0 // pred_region
    _
  $region61: #{full_model_forward.1} parent=0 // pred_fallthru
    _
  // Predicated region
  $region62: #{full_model_forward.1} parent=0 // pred_check
    _
  $region63: #{full_model_forward.1} parent=0 // pred_check_branch
    %2999 = sbr.rel (0) target = $region65
  $region64: #{full_model_forward.1} parent=0 // pred_region
    _
  $region65: #{full_model_forward.1} parent=0 // pred_fallthru
    _

</llo_original>
